<compile_context>
chip_gen: v5e
topology: v5e:2x2
jax: 0.10.0
libtpu: 0.0.40
codegen_flags: <defaults>
</compile_context>

<pallas_src>
import jax
import jax.numpy as jnp
from jax.experimental import pallas as pl
from jax.experimental.pallas import tpu as pltpu


def _deconv_out(n, k, stride, padding):
    """PyTorch ConvTranspose2d output size (output_padding=0, dilation=1)."""
    return (n - 1) * stride - 2 * padding + k


# ----------------------------------------------------------------------------
# One-time (hoisted) weight preprocessing
# ----------------------------------------------------------------------------
def _conv_transpose_operator(w_torch, stride, padding, h_in, w_in):
    """Dense linear operator of a PyTorch ConvTranspose2d (bias excluded).

    Returns M of shape [C_in*H_in*W_in, C_out*H_out*W_out]; both sides flattened
    channel-major (c, h, w), so  y_flat = x_flat @ M  is the transposed conv on
    one image.  Built by direct indexing (exact, no matmul):
        M[(ci,ih,iw),(co,oh,ow)] = w[ci, co, oh - ih*s + p, ow - iw*s + p]
    whenever that kernel tap index lies in [0, k), else 0.
    """
    c_in, c_out, k, _ = w_torch.shape
    h_out = _deconv_out(h_in, k, stride, padding)
    w_out = _deconv_out(w_in, k, stride, padding)

    def tap_index(n_in, n_out):
        o = jnp.arange(n_out)[None, :]
        i = jnp.arange(n_in)[:, None]
        t = o - (i * stride - padding)               # [n_in, n_out] kernel tap
        valid = (t >= 0) & (t < k)
        return jnp.clip(t, 0, k - 1), valid

    kh, vh = tap_index(h_in, h_out)                  # [h_in, h_out]
    kw, vw = tap_index(w_in, w_out)                  # [w_in, w_out]
    # gather taps: g[ci, co, ih, oh, iw, ow]
    g = w_torch[:, :, kh[:, :, None, None], kw[None, None, :, :]]
    mask = (vh[:, :, None, None] & vw[None, None, :, :]).astype(w_torch.dtype)
    g = g * mask
    # -> [(ci, ih, iw), (co, oh, ow)]
    m = jnp.transpose(g, (0, 2, 4, 1, 3, 5))
    return m.reshape(c_in * h_in * w_in, c_out * h_out * w_out)


def init_decoder_params(key, kernel_size=3, n_filters=16, feature_dim=64,
                        output_size=16, output_channels=3):
    init_size = output_size // 2 ** 2
    ks = jax.random.split(key, 10)

    def w(k_, shape, fan_in):
        return jax.random.normal(k_, shape, jnp.float32) / jnp.sqrt(float(fan_in))

    k = kernel_size
    fc_out = init_size ** 2 * n_filters
    params = {
        # fc1 stored as [in, out]; out columns are (c, h, w) channel-major
        "fc1_w": w(ks[0], (feature_dim, fc_out), feature_dim),
        "fc1_b": w(ks[1], (fc_out,), feature_dim),
        # ConvTranspose2d weights in torch layout [C_in, C_out, k, k]
        "conv1_w": w(ks[2], (n_filters, n_filters // 2, k, k), n_filters * k * k),
        "conv1_b": w(ks[3], (n_filters // 2,), n_filters * k * k),
        "conv2_w": w(ks[4], (n_filters // 2, n_filters // 4, k, k), (n_filters // 2) * k * k),
        "conv2_b": w(ks[5], (n_filters // 4,), (n_filters // 2) * k * k),
        "conv3_w": w(ks[6], (n_filters // 4, n_filters // 4, k, k), (n_filters // 4) * k * k),
        "conv3_b": w(ks[7], (n_filters // 4,), (n_filters // 4) * k * k),
        "conv4_w": w(ks[8], (n_filters // 4, output_channels, k + 1, k + 1),
                     (n_filters // 4) * (k + 1) ** 2),
        "conv4_b": w(ks[9], (output_channels,), (n_filters // 4) * (k + 1) ** 2),
    }
    cfg = {"init_size": init_size, "n_filters": n_filters, "kernel_size": kernel_size,
           "feature_dim": feature_dim, "output_channels": output_channels}
    return params, cfg


def prepare_params(params, cfg):
    """Hoisted one-time preprocessing: every ConvTranspose2d becomes a dense
    [N_in, N_out] operator matrix; biases are broadcast to full (c,h,w) rows."""
    s, nf, k = cfg["init_size"], cfg["n_filters"], cfg["kernel_size"]
    h1 = _deconv_out(s, k, 2, 1)
    h2 = _deconv_out(h1, k, 2, 1)
    h3 = _deconv_out(h2, k, 1, 1)
    h4 = _deconv_out(h3, k + 1, 1, 0)

    def full_bias(b, n_spatial):                      # (c, h, w) channel-major
        return jnp.repeat(b, n_spatial).reshape(1, -1)

    prep = {
        "fc_w": params["fc1_w"],                      # [feat, s*s*nf]
        "fc_b": params["fc1_b"].reshape(1, -1),
        "m1": _conv_transpose_operator(params["conv1_w"], 2, 1, s, s),
        "b1": full_bias(params["conv1_b"], h1 * h1),
        "m2": _conv_transpose_operator(params["conv2_w"], 2, 1, h1, h1),
        "b2": full_bias(params["conv2_b"], h2 * h2),
        "m3": _conv_transpose_operator(params["conv3_w"], 1, 1, h2, h2),
        "b3": full_bias(params["conv3_b"], h3 * h3),
        "m4": _conv_transpose_operator(params["conv4_w"], 1, 0, h3, h3),
        "b4": full_bias(params["conv4_b"], h4 * h4),
    }
    return jax.tree_util.tree_map(lambda a: a.astype(jnp.float32), prep)


# ----------------------------------------------------------------------------
# Fused decoder kernel: one grid step == one batch tile, 5 chained MXU GEMMs
# ----------------------------------------------------------------------------
def _decoder_kernel(x_ref, fcw_ref, fcb_ref,
                    m1_ref, b1_ref, m2_ref, b2_ref,
                    m3_ref, b3_ref, m4_ref, b4_ref,
                    out_ref):
    f32 = jnp.float32
    # fc1 (no activation, matches the PyTorch module)
    y = jnp.dot(x_ref[...], fcw_ref[...], preferred_element_type=f32) + fcb_ref[...]
    # conv1..conv3 (transposed conv as dense operator) + ReLU
    y = jnp.maximum(jnp.dot(y, m1_ref[...], preferred_element_type=f32) + b1_ref[...], 0.0)
    y = jnp.maximum(jnp.dot(y, m2_ref[...], preferred_element_type=f32) + b2_ref[...], 0.0)
    y = jnp.maximum(jnp.dot(y, m3_ref[...], preferred_element_type=f32) + b3_ref[...], 0.0)
    # conv4 + Sigmoid, written as one lane-dense [TB, C*OH*OW] slab
    y = jnp.dot(y, m4_ref[...], preferred_element_type=f32) + b4_ref[...]
    out_ref[...] = jax.nn.sigmoid(y)


def build_decoder_forward(cfg, block_b=8):
    s, nf, k = cfg["init_size"], cfg["n_filters"], cfg["kernel_size"]
    feat, c_img = cfg["feature_dim"], cfg["output_channels"]
    h1 = _deconv_out(s, k, 2, 1)
    h2 = _deconv_out(h1, k, 2, 1)
    h3 = _deconv_out(h2, k, 1, 1)
    oh = _deconv_out(h3, k + 1, 1, 0)
    n_out = c_img * oh * oh

    # VMEM budget guard: dense operators (double-buffered f32) must fit.
    n_acts = (s * s * nf, (nf // 2) * h1 * h1, (nf // 4) * h2 * h2,
              (nf // 4) * h3 * h3, n_out)
    w_elems = feat * n_acts[0] + sum(a * b for a, b in zip(n_acts[:-1], n_acts[1:]))
    assert w_elems * 4 * 2 < 24 * 1024 * 1024, (
        "dense ConvTranspose operators do not fit VMEM for this config; "
        "use a K-tiled tap-GEMM variant")  # TODO(synk): tiled variant for big configs

    weight_order = ("fc_w", "fc_b", "m1", "b1", "m2", "b2", "m3", "b3", "m4", "b4")

    def forward(prep, x):
        """x: [B, feature_dim] -> [B, output_channels, output_size, output_size]."""
        B = x.shape[0]
        nb = pl.cdiv(B, block_b)
        b_pad = nb * block_b
        xp = x.astype(jnp.float32)
        if b_pad != B:
            xp = jnp.pad(xp, ((0, b_pad - B), (0, 0)))

        # all prepared weights are 2-D; constant index_map -> VMEM-resident
        w_specs = [pl.BlockSpec(prep[n].shape, lambda b: (0, 0)) for n in weight_order]

        out = pl.pallas_call(
            _decoder_kernel,
            out_shape=jax.ShapeDtypeStruct((b_pad, n_out), jnp.float32),
            grid=(nb,),
            in_specs=[pl.BlockSpec((block_b, feat), lambda b: (b, 0))] + w_specs,
            out_specs=pl.BlockSpec((block_b, n_out), lambda b: (b, 0)),
            compiler_params=pltpu.CompilerParams(
                dimension_semantics=("parallel",),
                vmem_limit_bytes=32 * 1024 * 1024,
            ),
        )(xp, *[prep[n] for n in weight_order])

        # output columns are already (c, h, w) channel-major -> direct NCHW view
        return out[:B].reshape(B, c_img, oh, oh)

    return forward


# ----------------------------------------------------------------------------
# Pure-jnp reference (raw torch-layout params; independent lowering:
# dilate -> pad -> flipped-kernel correlation).  Validates both the kernel and
# the hoisted dense-operator construction.
# ----------------------------------------------------------------------------
def _ref_conv_transpose2d(x_nhwc, w_torch, bias, stride, padding, act):
    B, H, W, C_in = x_nhwc.shape
    _, C_out, k, _ = w_torch.shape
    if stride > 1:
        Hd, Wd = (H - 1) * stride + 1, (W - 1) * stride + 1
        xd = jnp.zeros((B, Hd, Wd, C_in), x_nhwc.dtype).at[:, ::stride, ::stride, :].set(x_nhwc)
    else:
        xd = x_nhwc
    pad = k - 1 - padding
    xp = jnp.pad(xd, ((0, 0), (pad, pad), (pad, pad), (0, 0)))
    _, Hp, Wp, _ = xp.shape
    OH, OW = Hp - k + 1, Wp - k + 1
    cols = [xp[:, kh:kh + OH, kw:kw + OW, :] for kh in range(k) for kw in range(k)]
    patches = jnp.stack(cols, axis=3).reshape(B * OH * OW, k * k * C_in)
    w_mat = jnp.transpose(w_torch[:, :, ::-1, ::-1], (2, 3, 0, 1)).reshape(k * k * C_in, C_out)
    out = jnp.dot(patches, w_mat, precision=jax.lax.Precision.HIGHEST) + bias
    if act == "relu":
        out = jnp.maximum(out, 0.0)
    elif act == "sigmoid":
        out = jax.nn.sigmoid(out)
    return out.reshape(B, OH, OW, C_out)


def decoder_forward_ref(params, cfg, x):
    B = x.shape[0]
    s, nf = cfg["init_size"], cfg["n_filters"]
    y = jnp.dot(x, params["fc1_w"], precision=jax.lax.Precision.HIGHEST) + params["fc1_b"]
    y = jnp.transpose(y.reshape(B, nf, s, s), (0, 2, 3, 1))                 # NCHW -> NHWC
    y = _ref_conv_transpose2d(y, params["conv1_w"], params["conv1_b"], 2, 1, "relu")
    y = _ref_conv_transpose2d(y, params["conv2_w"], params["conv2_b"], 2, 1, "relu")
    y = _ref_conv_transpose2d(y, params["conv3_w"], params["conv3_b"], 1, 1, "relu")
    y = _ref_conv_transpose2d(y, params["conv4_w"], params["conv4_b"], 1, 0, "sigmoid")
    return jnp.transpose(y, (0, 3, 1, 2))                                    # -> NCHW


if __name__ == "__main__":
    # Small shapes consistent with the module: feature_dim=64, n_filters=16,
    # output_size=16, output_channels=3.  Batch 16 -> two batch tiles of 8
    # (exercises the batch-tiled grid; grid length 2 feeds both v7x TCs).
    key = jax.random.PRNGKey(0)
    k_params, k_x = jax.random.split(key)
    params, cfg = init_decoder_params(k_params, kernel_size=3, n_filters=16,
                                      feature_dim=64, output_size=16, output_channels=3)
    B = 16
    x = jax.random.normal(k_x, (B, cfg["feature_dim"]), jnp.float32)

    prep = prepare_params(params, cfg)                # hoisted one-time weight prep
    fwd = jax.jit(build_decoder_forward(cfg, block_b=8))

    out = jax.block_until_ready(fwd(prep, x))
    assert out.shape == (B, 3, 16, 16), out.shape

    ref = jax.block_until_ready(decoder_forward_ref(params, cfg, x))
    max_err = float(jnp.max(jnp.abs(out - ref)))
    assert jnp.allclose(out, ref, atol=3e-4, rtol=3e-4), max_err
    assert bool(jnp.all(jnp.isfinite(out)))

    print("KERNEL_OK")
</pallas_src>

<mosaic_0001>
module attributes {stable_mosaic.version = 11 : i64} {
  func.func @_decoder_kernel(%arg0: i32, %arg1: memref<8x64xf32, #tpu.memory_space<vmem>>, %arg2: memref<64x256xf32, #tpu.memory_space<vmem>>, %arg3: memref<1x256xf32, #tpu.memory_space<vmem>>, %arg4: memref<256x392xf32, #tpu.memory_space<vmem>>, %arg5: memref<1x392xf32, #tpu.memory_space<vmem>>, %arg6: memref<392x676xf32, #tpu.memory_space<vmem>>, %arg7: memref<1x676xf32, #tpu.memory_space<vmem>>, %arg8: memref<676x676xf32, #tpu.memory_space<vmem>>, %arg9: memref<1x676xf32, #tpu.memory_space<vmem>>, %arg10: memref<676x768xf32, #tpu.memory_space<vmem>>, %arg11: memref<1x768xf32, #tpu.memory_space<vmem>>, %arg12: memref<8x768xf32, #tpu.memory_space<vmem>>) attributes {dimension_semantics = [#tpu.dimension_semantics<parallel>], iteration_bounds = array<i64: 2>, scalar_prefetch = 0 : i64, scratch_operands = 0 : i64, tpu.core_type = #tpu.core_type<tc>, window_params = [{transform_indices = @transform_0, window_bounds = array<i64: 8, 64>}, {pipeline_mode = #tpu.pipeline_mode<synchronous>, transform_indices = @transform_1, window_bounds = array<i64: 64, 256>}, {pipeline_mode = #tpu.pipeline_mode<synchronous>, transform_indices = @transform_2, window_bounds = array<i64: 1, 256>}, {pipeline_mode = #tpu.pipeline_mode<synchronous>, transform_indices = @transform_3, window_bounds = array<i64: 256, 392>}, {pipeline_mode = #tpu.pipeline_mode<synchronous>, transform_indices = @transform_4, window_bounds = array<i64: 1, 392>}, {pipeline_mode = #tpu.pipeline_mode<synchronous>, transform_indices = @transform_5, window_bounds = array<i64: 392, 676>}, {pipeline_mode = #tpu.pipeline_mode<synchronous>, transform_indices = @transform_6, window_bounds = array<i64: 1, 676>}, {pipeline_mode = #tpu.pipeline_mode<synchronous>, transform_indices = @transform_7, window_bounds = array<i64: 676, 676>}, {pipeline_mode = #tpu.pipeline_mode<synchronous>, transform_indices = @transform_8, window_bounds = array<i64: 1, 676>}, {pipeline_mode = #tpu.pipeline_mode<synchronous>, transform_indices = @transform_9, window_bounds = array<i64: 676, 768>}, {pipeline_mode = #tpu.pipeline_mode<synchronous>, transform_indices = @transform_10, window_bounds = array<i64: 1, 768>}, {transform_indices = @transform_11, window_bounds = array<i64: 8, 768>}]} {
    %c0 = arith.constant 0 : index
    %c0_0 = arith.constant 0 : index
    %0 = vector.load %arg1[%c0, %c0_0] : memref<8x64xf32, #tpu.memory_space<vmem>>, vector<8x64xf32>
    %c0_1 = arith.constant 0 : index
    %c0_2 = arith.constant 0 : index
    %1 = vector.load %arg2[%c0_1, %c0_2] : memref<64x256xf32, #tpu.memory_space<vmem>>, vector<64x256xf32>
    %cst = arith.constant dense<0.000000e+00> : vector<8x256xf32>
    %2 = tpu.matmul %0, %1, %cst {dimension_numbers = #tpu.dot_dimension_numbers<[1], [0], [0], [1], [0, 0, 1, 1], [], []>} : vector<8x64xf32>, vector<64x256xf32>, vector<8x256xf32> -> vector<8x256xf32>
    %c0_3 = arith.constant 0 : index
    %c0_4 = arith.constant 0 : index
    %3 = vector.load %arg3[%c0_3, %c0_4] : memref<1x256xf32, #tpu.memory_space<vmem>>, vector<1x256xf32>
    %4 = vector.broadcast %3 : vector<1x256xf32> to vector<8x256xf32>
    %5 = arith.addf %2, %4 : vector<8x256xf32>
    %c0_5 = arith.constant 0 : index
    %c0_6 = arith.constant 0 : index
    %6 = vector.load %arg4[%c0_5, %c0_6] : memref<256x392xf32, #tpu.memory_space<vmem>>, vector<256x392xf32>
    %cst_7 = arith.constant dense<0.000000e+00> : vector<8x392xf32>
    %7 = tpu.matmul %5, %6, %cst_7 {dimension_numbers = #tpu.dot_dimension_numbers<[1], [0], [0], [1], [0, 0, 1, 1], [], []>} : vector<8x256xf32>, vector<256x392xf32>, vector<8x392xf32> -> vector<8x392xf32>
    %c0_8 = arith.constant 0 : index
    %c0_9 = arith.constant 0 : index
    %8 = vector.load %arg5[%c0_8, %c0_9] : memref<1x392xf32, #tpu.memory_space<vmem>>, vector<1x392xf32>
    %9 = vector.broadcast %8 : vector<1x392xf32> to vector<8x392xf32>
    %10 = arith.addf %7, %9 : vector<8x392xf32>
    %cst_10 = arith.constant 0.000000e+00 : f32
    %11 = vector.broadcast %cst_10 : f32 to vector<8x392xf32>
    %12 = arith.maximumf %10, %11 : vector<8x392xf32>
    %c0_11 = arith.constant 0 : index
    %c0_12 = arith.constant 0 : index
    %13 = vector.load %arg6[%c0_11, %c0_12] : memref<392x676xf32, #tpu.memory_space<vmem>>, vector<392x676xf32>
    %cst_13 = arith.constant dense<0.000000e+00> : vector<8x676xf32>
    %14 = tpu.matmul %12, %13, %cst_13 {dimension_numbers = #tpu.dot_dimension_numbers<[1], [0], [0], [1], [0, 0, 1, 1], [], []>} : vector<8x392xf32>, vector<392x676xf32>, vector<8x676xf32> -> vector<8x676xf32>
    %c0_14 = arith.constant 0 : index
    %c0_15 = arith.constant 0 : index
    %15 = vector.load %arg7[%c0_14, %c0_15] : memref<1x676xf32, #tpu.memory_space<vmem>>, vector<1x676xf32>
    %16 = vector.broadcast %15 : vector<1x676xf32> to vector<8x676xf32>
    %17 = arith.addf %14, %16 : vector<8x676xf32>
    %cst_16 = arith.constant 0.000000e+00 : f32
    %18 = vector.broadcast %cst_16 : f32 to vector<8x676xf32>
    %19 = arith.maximumf %17, %18 : vector<8x676xf32>
    %c0_17 = arith.constant 0 : index
    %c0_18 = arith.constant 0 : index
    %20 = vector.load %arg8[%c0_17, %c0_18] : memref<676x676xf32, #tpu.memory_space<vmem>>, vector<676x676xf32>
    %cst_19 = arith.constant dense<0.000000e+00> : vector<8x676xf32>
    %21 = tpu.matmul %19, %20, %cst_19 {dimension_numbers = #tpu.dot_dimension_numbers<[1], [0], [0], [1], [0, 0, 1, 1], [], []>} : vector<8x676xf32>, vector<676x676xf32>, vector<8x676xf32> -> vector<8x676xf32>
    %c0_20 = arith.constant 0 : index
    %c0_21 = arith.constant 0 : index
    %22 = vector.load %arg9[%c0_20, %c0_21] : memref<1x676xf32, #tpu.memory_space<vmem>>, vector<1x676xf32>
    %23 = vector.broadcast %22 : vector<1x676xf32> to vector<8x676xf32>
    %24 = arith.addf %21, %23 : vector<8x676xf32>
    %cst_22 = arith.constant 0.000000e+00 : f32
    %25 = vector.broadcast %cst_22 : f32 to vector<8x676xf32>
    %26 = arith.maximumf %24, %25 : vector<8x676xf32>
    %c0_23 = arith.constant 0 : index
    %c0_24 = arith.constant 0 : index
    %27 = vector.load %arg10[%c0_23, %c0_24] : memref<676x768xf32, #tpu.memory_space<vmem>>, vector<676x768xf32>
    %cst_25 = arith.constant dense<0.000000e+00> : vector<8x768xf32>
    %28 = tpu.matmul %26, %27, %cst_25 {dimension_numbers = #tpu.dot_dimension_numbers<[1], [0], [0], [1], [0, 0, 1, 1], [], []>} : vector<8x676xf32>, vector<676x768xf32>, vector<8x768xf32> -> vector<8x768xf32>
    %c0_26 = arith.constant 0 : index
    %c0_27 = arith.constant 0 : index
    %29 = vector.load %arg11[%c0_26, %c0_27] : memref<1x768xf32, #tpu.memory_space<vmem>>, vector<1x768xf32>
    %30 = vector.broadcast %29 : vector<1x768xf32> to vector<8x768xf32>
    %31 = arith.addf %28, %30 : vector<8x768xf32>
    %32 = arith.negf %31 : vector<8x768xf32>
    %33 = math.exp %32 : vector<8x768xf32>
    %cst_28 = arith.constant 1.000000e+00 : f32
    %34 = vector.broadcast %cst_28 : f32 to vector<8x768xf32>
    %35 = arith.addf %34, %33 : vector<8x768xf32>
    %36 = arith.divf %34, %35 : vector<8x768xf32>
    %c0_29 = arith.constant 0 : index
    %c0_30 = arith.constant 0 : index
    %37 = vector.load %arg12[%c0_29, %c0_30] : memref<8x768xf32, #tpu.memory_space<vmem>>, vector<8x768xf32>
    tpu.vector_store %arg12[%c0_29, %c0_30], %36 {strides = array<i32>} : memref<8x768xf32, #tpu.memory_space<vmem>>, vector<8x768xf32>,
    return
  }
  func.func @transform_0(%arg0: i32) -> (i32, i32) {
    %c0_i32 = arith.constant 0 : i32
    %c0_i32_0 = arith.constant 0 : i32
    return %arg0, %c0_i32 : i32, i32
  }
  func.func @transform_1(%arg0: i32) -> (i32, i32) {
    %c0_i32 = arith.constant 0 : i32
    %c0_i32_0 = arith.constant 0 : i32
    %c0_i32_1 = arith.constant 0 : i32
    return %c0_i32, %c0_i32_0 : i32, i32
  }
  func.func @transform_2(%arg0: i32) -> (i32, i32) {
    %c0_i32 = arith.constant 0 : i32
    %c0_i32_0 = arith.constant 0 : i32
    %c0_i32_1 = arith.constant 0 : i32
    return %c0_i32, %c0_i32_0 : i32, i32
  }
  func.func @transform_3(%arg0: i32) -> (i32, i32) {
    %c0_i32 = arith.constant 0 : i32
    %c0_i32_0 = arith.constant 0 : i32
    %c0_i32_1 = arith.constant 0 : i32
    return %c0_i32, %c0_i32_0 : i32, i32
  }
  func.func @transform_4(%arg0: i32) -> (i32, i32) {
    %c0_i32 = arith.constant 0 : i32
    %c0_i32_0 = arith.constant 0 : i32
    %c0_i32_1 = arith.constant 0 : i32
    return %c0_i32, %c0_i32_0 : i32, i32
  }
  func.func @transform_5(%arg0: i32) -> (i32, i32) {
    %c0_i32 = arith.constant 0 : i32
    %c0_i32_0 = arith.constant 0 : i32
    %c0_i32_1 = arith.constant 0 : i32
    return %c0_i32, %c0_i32_0 : i32, i32
  }
  func.func @transform_6(%arg0: i32) -> (i32, i32) {
    %c0_i32 = arith.constant 0 : i32
    %c0_i32_0 = arith.constant 0 : i32
    %c0_i32_1 = arith.constant 0 : i32
    return %c0_i32, %c0_i32_0 : i32, i32
  }
  func.func @transform_7(%arg0: i32) -> (i32, i32) {
    %c0_i32 = arith.constant 0 : i32
    %c0_i32_0 = arith.constant 0 : i32
    %c0_i32_1 = arith.constant 0 : i32
    return %c0_i32, %c0_i32_0 : i32, i32
  }
  func.func @transform_8(%arg0: i32) -> (i32, i32) {
    %c0_i32 = arith.constant 0 : i32
    %c0_i32_0 = arith.constant 0 : i32
    %c0_i32_1 = arith.constant 0 : i32
    return %c0_i32, %c0_i32_0 : i32, i32
  }
  func.func @transform_9(%arg0: i32) -> (i32, i32) {
    %c0_i32 = arith.constant 0 : i32
    %c0_i32_0 = arith.constant 0 : i32
    %c0_i32_1 = arith.constant 0 : i32
    return %c0_i32, %c0_i32_0 : i32, i32
  }
  func.func @transform_10(%arg0: i32) -> (i32, i32) {
    %c0_i32 = arith.constant 0 : i32
    %c0_i32_0 = arith.constant 0 : i32
    %c0_i32_1 = arith.constant 0 : i32
    return %c0_i32, %c0_i32_0 : i32, i32
  }
  func.func @transform_11(%arg0: i32) -> (i32, i32) {
    %c0_i32 = arith.constant 0 : i32
    %c0_i32_0 = arith.constant 0 : i32
    return %arg0, %c0_i32 : i32, i32
  }
}

</mosaic_0001>

<llo_original>
// kernel: forward.1
$region0: #{forward.1}
  #allocation0 [shape = 'u32[]', space=smem, size = 0x4, offset = 0x4, fixed_abs, tag = 'smem constant byte address 0x4 - core index']
  #allocation1 [shape = 'u32[72,128]{1,0:T(1,128)}', space=vmem, size = 0x9000, scoped, tag = 'internal scratch']
  %s0 = inlined_call_operand.hbm [shape: f32[16,64], index: 0, kind: input, shape index: {}]
  %s1 = inlined_call_operand.hbm [shape: f32[64,256], index: 1, kind: input, shape index: {}]
  %s2 = inlined_call_operand.hbm [shape: f32[1,256], index: 2, kind: input, shape index: {}]
  %s3 = inlined_call_operand.vmem [shape: f32[256,392], index: 3, kind: input, shape index: {}]
  %s4 = inlined_call_operand.hbm [shape: f32[1,392], index: 4, kind: input, shape index: {}]
  %s5 = inlined_call_operand.hbm [shape: f32[392,676], index: 5, kind: input, shape index: {}]
  %s6 = inlined_call_operand.hbm [shape: f32[1,676], index: 6, kind: input, shape index: {}]
  %s7 = inlined_call_operand.hbm [shape: f32[676,676], index: 7, kind: input, shape index: {}]
  %s8 = inlined_call_operand.hbm [shape: f32[1,676], index: 8, kind: input, shape index: {}]
  %s9 = inlined_call_operand.hbm [shape: f32[676,768], index: 9, kind: input, shape index: {}]
  %s10 = inlined_call_operand.hbm [shape: f32[1,768], index: 10, kind: input, shape index: {}]
  %s11 = inlined_call_operand.vmem [shape: f32[16,768], index: 11, kind: output, shape index: {}]
  %s12 = sld [smem:[#allocation0]]
  $region117: #{forward.1} parent=0
    _
  %s14 = ssub.s32 1, %s12
  %s15 = scalar_select 0, %s14, %s12
  $region1: #{forward.1} parent=0
    #allocation2 [shape = 'u8[8192]{0}', space=vmem, size = 0x2000, scoped, tag = 'input window, operand 0']
    #allocation3 [shape = 's32[2]{0}', space=sflag, size = 0x8, scoped, tag = 'scoped memory for forward.1']
    #allocation4 [shape = 'u8[65536]{0}', space=vmem, size = 0x10000, scoped, tag = 'input window, operand 1, single buffered']
    #allocation5 [shape = 's32[1]{0}', space=sflag, size = 0x4, scoped, tag = 'scoped memory for forward.1']
    #allocation6 [shape = 'u8[1024]{0}', space=vmem, size = 0x400, scoped, tag = 'input window, operand 2, single buffered']
    #allocation7 [shape = 'u8[2048]{0}', space=vmem, size = 0x800, scoped, tag = 'input window, operand 4, single buffered']
    #allocation8 [shape = 's32[1]{0}', space=sflag, size = 0x4, scoped, tag = 'scoped memory for forward.1']
    #allocation9 [shape = 'u8[1204224]{0}', space=vmem, size = 0x126000, scoped, tag = 'input window, operand 5, single buffered']
    #allocation10 [shape = 'u8[3072]{0}', space=vmem, size = 0xc00, scoped, tag = 'input window, operand 6, single buffered']
    #allocation11 [shape = 's32[1]{0}', space=sflag, size = 0x4, scoped, tag = 'scoped memory for forward.1']
    #allocation12 [shape = 'u8[2088960]{0}', space=vmem, size = 0x1fe000, scoped, tag = 'input window, operand 7, single buffered']
    #allocation13 [shape = 'u8[3072]{0}', space=vmem, size = 0xc00, scoped, tag = 'input window, operand 8, single buffered']
    #allocation14 [shape = 's32[1]{0}', space=sflag, size = 0x4, scoped, tag = 'scoped memory for forward.1']
    #allocation15 [shape = 'u8[2088960]{0}', space=vmem, size = 0x1fe000, scoped, tag = 'input window, operand 9, single buffered']
    #allocation16 [shape = 'u8[3072]{0}', space=vmem, size = 0xc00, scoped, tag = 'input window, operand 10, single buffered']
    #allocation17 [shape = 's32[1]{0}', space=sflag, size = 0x4, scoped, tag = 'scoped memory for forward.1']
    %16 = vsyncpa [#allocation3], 0
    %s17 = scalar_lea.sflag [#allocation3], 1
    %18 = vsyncpa %s17, 0
    %19 = vsyncpa [#allocation5], 0
    %20 = vsyncpa [#allocation8], 0
    %21 = vsyncpa [#allocation11], 0
    %22 = vsyncpa [#allocation14], 0
    %23 = vsyncpa [#allocation17], 0
    loop: start=0, step=1, limit=4
    $region2: #{forward.1} parent=1 // loop_pre_header
      _
    $region3: #{forward.1} parent=1 // loop_header
      %s25 = sphi 0, %s29
      %p26 = scmp.ge.s32.totalorder %s25, 4
      %s35 = sphi 0, %s37
      %s38 = sphi 0, %s35
      %s39 = sphi 0, %s38
      %s55 = sphi 0, %s39
      %s59 = sphi 0, %s59
      %s61 = sphi 0, %s59
      %s62 = sphi 0, %s61
      %s76 = sphi 0, %s62
      %s80 = sphi 0, %s80
      %s82 = sphi 0, %s80
      %s83 = sphi 0, %s82
      %s97 = sphi 0, %s83
      %s101 = sphi 0, %s101
      %s103 = sphi 0, %s101
      %s104 = sphi 0, %s103
      %s118 = sphi 0, %s104
      %s122 = sphi 0, %s122
      %s124 = sphi 0, %s122
      %s125 = sphi 0, %s124
      %s139 = sphi 0, %s125
      %s143 = sphi 0, %s143
      %s145 = sphi 0, %s143
      %s146 = sphi 0, %s145
      %s160 = sphi 0, %s146
      %s164 = sphi 0, %s164
      %s166 = sphi 0, %s164
      %s167 = sphi 0, %s166
      %s181 = sphi 0, %s167
      %s185 = sphi 0, %s185
      %s187 = sphi 0, %s185
      %s188 = sphi 0, %s187
      %s202 = sphi 0, %s188
      %s206 = sphi 0, %s206
      %s208 = sphi 0, %s206
      %s209 = sphi 0, %s208
      %s223 = sphi 0, %s209
      %s227 = sphi 0, %s227
      %s229 = sphi 0, %s227
      %s230 = sphi 0, %s229
      %s244 = sphi 0, %s230
      %s248 = sphi 0, %s248
      %s250 = sphi 0, %s248
      %s251 = sphi 0, %s250
      %s265 = sphi 0, %s251
      %s271 = sphi 0, %s273
      %s274 = sphi 0, %s271
      %s275 = sphi 0, %s274
      %s291 = sphi 0, %s275
    $region4: #{forward.1} parent=1 // loop_header_branch
      %28 = sbr.rel (%p26) target = $region8
    $region5: #{forward.1} parent=1 // loop_body
      %s30 = ssub.s32 %s25, 1
      %s31 = ssub.s32 %s25, 2
      %s32 = sadd.s32 %s25, 1
      %s33 = ssub.s32 %s25, %s32
      %p34 = scmp.eq.s32.totalorder %s33, 0
      %s36 = sadd.s32 %s35, 1
      %s37 = scalar_select %p34, %s35, %s36
      %p40 = pneg %p34
      %p41 = scmp.eq.s32.totalorder %s25, 1
      %p42 = por %p40, %p41
      %p43 = scmp.ne.s32.totalorder %s35, %s38
      %p44 = scmp.eq.s32.totalorder %s25, 0
      %p45 = por %p43, %p44
      %p46 = scmp.ne.s32.totalorder %s35, %s38
      %p47 = scmp.eq.s32.totalorder %s30, 1
      %p48 = por %p46, %p47
      %p49 = scmp.ne.s32.totalorder %s38, %s39
      %p50 = scmp.eq.s32.totalorder %s30, 0
      %p51 = por %p49, %p50
      %p52 = scmp.ne.s32.totalorder %s38, %s39
      %p53 = scmp.eq.s32.totalorder %s31, 1
      %p54 = por %p52, %p53
      %p56 = scmp.ne.s32.totalorder %s39, %s55
      %p57 = scmp.eq.s32.totalorder %s31, 0
      %p58 = por %p56, %p57
      %s60 = sadd.s32 %s59, 1
      %p63 = scmp.eq.s32.totalorder %s25, 1
      %p64 = scmp.ne.s32.totalorder %s59, %s61
      %p65 = scmp.eq.s32.totalorder %s25, 0
      %p66 = por %p64, %p65
      %p67 = scmp.ne.s32.totalorder %s59, %s61
      %p68 = scmp.eq.s32.totalorder %s30, 1
      %p69 = por %p67, %p68
      %p70 = scmp.ne.s32.totalorder %s61, %s62
      %p71 = scmp.eq.s32.totalorder %s30, 0
      %p72 = por %p70, %p71
      %p73 = scmp.ne.s32.totalorder %s61, %s62
      %p74 = scmp.eq.s32.totalorder %s31, 1
      %p75 = por %p73, %p74
      %p77 = scmp.ne.s32.totalorder %s62, %s76
      %p78 = scmp.eq.s32.totalorder %s31, 0
      %p79 = por %p77, %p78
      %s81 = sadd.s32 %s80, 1
      %p84 = scmp.eq.s32.totalorder %s25, 1
      %p85 = scmp.ne.s32.totalorder %s80, %s82
      %p86 = scmp.eq.s32.totalorder %s25, 0
      %p87 = por %p85, %p86
      %p88 = scmp.ne.s32.totalorder %s80, %s82
      %p89 = scmp.eq.s32.totalorder %s30, 1
      %p90 = por %p88, %p89
      %p91 = scmp.ne.s32.totalorder %s82, %s83
      %p92 = scmp.eq.s32.totalorder %s30, 0
      %p93 = por %p91, %p92
      %p94 = scmp.ne.s32.totalorder %s82, %s83
      %p95 = scmp.eq.s32.totalorder %s31, 1
      %p96 = por %p94, %p95
      %p98 = scmp.ne.s32.totalorder %s83, %s97
      %p99 = scmp.eq.s32.totalorder %s31, 0
      %p100 = por %p98, %p99
      %s102 = sadd.s32 %s101, 1
      %p105 = scmp.eq.s32.totalorder %s25, 1
      %p106 = scmp.ne.s32.totalorder %s101, %s103
      %p107 = scmp.eq.s32.totalorder %s25, 0
      %p108 = por %p106, %p107
      %p109 = scmp.ne.s32.totalorder %s101, %s103
      %p110 = scmp.eq.s32.totalorder %s30, 1
      %p111 = por %p109, %p110
      %p112 = scmp.ne.s32.totalorder %s103, %s104
      %p113 = scmp.eq.s32.totalorder %s30, 0
      %p114 = por %p112, %p113
      %p115 = scmp.ne.s32.totalorder %s103, %s104
      %p116 = scmp.eq.s32.totalorder %s31, 1
      %p117 = por %p115, %p116
      %p119 = scmp.ne.s32.totalorder %s104, %s118
      %p120 = scmp.eq.s32.totalorder %s31, 0
      %p121 = por %p119, %p120
      %s123 = sadd.s32 %s122, 1
      %p126 = scmp.eq.s32.totalorder %s25, 1
      %p127 = scmp.ne.s32.totalorder %s122, %s124
      %p128 = scmp.eq.s32.totalorder %s25, 0
      %p129 = por %p127, %p128
      %p130 = scmp.ne.s32.totalorder %s122, %s124
      %p131 = scmp.eq.s32.totalorder %s30, 1
      %p132 = por %p130, %p131
      %p133 = scmp.ne.s32.totalorder %s124, %s125
      %p134 = scmp.eq.s32.totalorder %s30, 0
      %p135 = por %p133, %p134
      %p136 = scmp.ne.s32.totalorder %s124, %s125
      %p137 = scmp.eq.s32.totalorder %s31, 1
      %p138 = por %p136, %p137
      %p140 = scmp.ne.s32.totalorder %s125, %s139
      %p141 = scmp.eq.s32.totalorder %s31, 0
      %p142 = por %p140, %p141
      %s144 = sadd.s32 %s143, 1
      %p147 = scmp.eq.s32.totalorder %s25, 1
      %p148 = scmp.ne.s32.totalorder %s143, %s145
      %p149 = scmp.eq.s32.totalorder %s25, 0
      %p150 = por %p148, %p149
      %p151 = scmp.ne.s32.totalorder %s143, %s145
      %p152 = scmp.eq.s32.totalorder %s30, 1
      %p153 = por %p151, %p152
      %p154 = scmp.ne.s32.totalorder %s145, %s146
      %p155 = scmp.eq.s32.totalorder %s30, 0
      %p156 = por %p154, %p155
      %p157 = scmp.ne.s32.totalorder %s145, %s146
      %p158 = scmp.eq.s32.totalorder %s31, 1
      %p159 = por %p157, %p158
      %p161 = scmp.ne.s32.totalorder %s146, %s160
      %p162 = scmp.eq.s32.totalorder %s31, 0
      %p163 = por %p161, %p162
      %s165 = sadd.s32 %s164, 1
      %p168 = scmp.eq.s32.totalorder %s25, 1
      %p169 = scmp.ne.s32.totalorder %s164, %s166
      %p170 = scmp.eq.s32.totalorder %s25, 0
      %p171 = por %p169, %p170
      %p172 = scmp.ne.s32.totalorder %s164, %s166
      %p173 = scmp.eq.s32.totalorder %s30, 1
      %p174 = por %p172, %p173
      %p175 = scmp.ne.s32.totalorder %s166, %s167
      %p176 = scmp.eq.s32.totalorder %s30, 0
      %p177 = por %p175, %p176
      %p178 = scmp.ne.s32.totalorder %s166, %s167
      %p179 = scmp.eq.s32.totalorder %s31, 1
      %p180 = por %p178, %p179
      %p182 = scmp.ne.s32.totalorder %s167, %s181
      %p183 = scmp.eq.s32.totalorder %s31, 0
      %p184 = por %p182, %p183
      %s186 = sadd.s32 %s185, 1
      %p189 = scmp.eq.s32.totalorder %s25, 1
      %p190 = scmp.ne.s32.totalorder %s185, %s187
      %p191 = scmp.eq.s32.totalorder %s25, 0
      %p192 = por %p190, %p191
      %p193 = scmp.ne.s32.totalorder %s185, %s187
      %p194 = scmp.eq.s32.totalorder %s30, 1
      %p195 = por %p193, %p194
      %p196 = scmp.ne.s32.totalorder %s187, %s188
      %p197 = scmp.eq.s32.totalorder %s30, 0
      %p198 = por %p196, %p197
      %p199 = scmp.ne.s32.totalorder %s187, %s188
      %p200 = scmp.eq.s32.totalorder %s31, 1
      %p201 = por %p199, %p200
      %p203 = scmp.ne.s32.totalorder %s188, %s202
      %p204 = scmp.eq.s32.totalorder %s31, 0
      %p205 = por %p203, %p204
      %s207 = sadd.s32 %s206, 1
      %p210 = scmp.eq.s32.totalorder %s25, 1
      %p211 = scmp.ne.s32.totalorder %s206, %s208
      %p212 = scmp.eq.s32.totalorder %s25, 0
      %p213 = por %p211, %p212
      %p214 = scmp.ne.s32.totalorder %s206, %s208
      %p215 = scmp.eq.s32.totalorder %s30, 1
      %p216 = por %p214, %p215
      %p217 = scmp.ne.s32.totalorder %s208, %s209
      %p218 = scmp.eq.s32.totalorder %s30, 0
      %p219 = por %p217, %p218
      %p220 = scmp.ne.s32.totalorder %s208, %s209
      %p221 = scmp.eq.s32.totalorder %s31, 1
      %p222 = por %p220, %p221
      %p224 = scmp.ne.s32.totalorder %s209, %s223
      %p225 = scmp.eq.s32.totalorder %s31, 0
      %p226 = por %p224, %p225
      %s228 = sadd.s32 %s227, 1
      %p231 = scmp.eq.s32.totalorder %s25, 1
      %p232 = scmp.ne.s32.totalorder %s227, %s229
      %p233 = scmp.eq.s32.totalorder %s25, 0
      %p234 = por %p232, %p233
      %p235 = scmp.ne.s32.totalorder %s227, %s229
      %p236 = scmp.eq.s32.totalorder %s30, 1
      %p237 = por %p235, %p236
      %p238 = scmp.ne.s32.totalorder %s229, %s230
      %p239 = scmp.eq.s32.totalorder %s30, 0
      %p240 = por %p238, %p239
      %p241 = scmp.ne.s32.totalorder %s229, %s230
      %p242 = scmp.eq.s32.totalorder %s31, 1
      %p243 = por %p241, %p242
      %p245 = scmp.ne.s32.totalorder %s230, %s244
      %p246 = scmp.eq.s32.totalorder %s31, 0
      %p247 = por %p245, %p246
      %s249 = sadd.s32 %s248, 1
      %p252 = scmp.eq.s32.totalorder %s25, 1
      %p253 = scmp.ne.s32.totalorder %s248, %s250
      %p254 = scmp.eq.s32.totalorder %s25, 0
      %p255 = por %p253, %p254
      %p256 = scmp.ne.s32.totalorder %s248, %s250
      %p257 = scmp.eq.s32.totalorder %s30, 1
      %p258 = por %p256, %p257
      %p259 = scmp.ne.s32.totalorder %s250, %s251
      %p260 = scmp.eq.s32.totalorder %s30, 0
      %p261 = por %p259, %p260
      %p262 = scmp.ne.s32.totalorder %s250, %s251
      %p263 = scmp.eq.s32.totalorder %s31, 1
      %p264 = por %p262, %p263
      %p266 = scmp.ne.s32.totalorder %s251, %s265
      %p267 = scmp.eq.s32.totalorder %s31, 0
      %p268 = por %p266, %p267
      %s269 = ssub.s32 %s25, %s32
      %p270 = scmp.eq.s32.totalorder %s269, 0
      %s272 = sadd.s32 %s271, 1
      %s273 = scalar_select %p270, %s271, %s272
      %p276 = pneg %p270
      %p277 = scmp.eq.s32.totalorder %s25, 1
      %p278 = por %p276, %p277
      %p279 = scmp.ne.s32.totalorder %s271, %s274
      %p280 = scmp.eq.s32.totalorder %s25, 0
      %p281 = por %p279, %p280
      %p282 = scmp.ne.s32.totalorder %s271, %s274
      %p283 = scmp.eq.s32.totalorder %s30, 1
      %p284 = por %p282, %p283
      %p285 = scmp.ne.s32.totalorder %s274, %s275
      %p286 = scmp.eq.s32.totalorder %s30, 0
      %p287 = por %p285, %p286
      %p288 = scmp.ne.s32.totalorder %s274, %s275
      %p289 = scmp.eq.s32.totalorder %s31, 1
      %p290 = por %p288, %p289
      %p292 = scmp.ne.s32.totalorder %s275, %s291
      %p293 = scmp.eq.s32.totalorder %s31, 0
      %p294 = por %p292, %p293
      %p295 = scmp.le.s32.totalorder 1, %s25
      %p296 = scmp.lt.s32.totalorder %s25, 3
      %p297 = pnand %p295, %p296
      %p298 = pneg %p297
      // Predicated region
      $region9: #{forward.1} parent=5 // pred_check
        _
      $region10: #{forward.1} parent=5 // pred_check_branch
        %300 = sbr.rel (%p297) target = $region12
      $region11: #{forward.1} parent=5 // pred_region
        %s301 = ssub.s32 %s25, 1
        // Predicated region
        $region13: #{forward.1} parent=11 // pred_check
          %p302 = pneg %p72
        $region14: #{forward.1} parent=11 // pred_check_branch
          %304 = sbr.rel (%p302) target = $region16
        $region15: #{forward.1} parent=11 // pred_region
          %306 = vsyncadd [#allocation5], 0
          %s307 = sshll.u32 %s1, 4
          %s308 = int_to_ptr.hbm [resolvable:$true] %s307
          %s309 = sshll.u32 [#allocation4], 4
          %s310 = int_to_ptr.vmem [resolvable:$true] %s309
          %315 = dma.hbm_to_vmem [thread:$0]  %s308, 2048, %s310, [#allocation5], 256, 256, 16
        $region16: #{forward.1} parent=11 // pred_fallthru
          _
        // Predicated region
        $region17: #{forward.1} parent=11 // pred_check
          %p316 = pneg %p93
        $region18: #{forward.1} parent=11 // pred_check_branch
          %318 = sbr.rel (%p316) target = $region20
        $region19: #{forward.1} parent=11 // pred_region
          %320 = vsyncadd [#allocation5], 0
          %s322 = sshll.u32 %s2, 4
          %s323 = int_to_ptr.hbm [resolvable:$true] %s322
          %s324 = sshll.u32 [#allocation6], 4
          %s325 = int_to_ptr.vmem [resolvable:$true] %s324
          %327 = dma.hbm_to_vmem [thread:$0]  %s323, 32, %s325, [#allocation5]
        $region20: #{forward.1} parent=11 // pred_fallthru
          _
        // Predicated region
        $region21: #{forward.1} parent=11 // pred_check
          %p328 = pneg %p114
        $region22: #{forward.1} parent=11 // pred_check_branch
          %330 = sbr.rel (%p328) target = $region24
        $region23: #{forward.1} parent=11 // pred_region
          _
        $region24: #{forward.1} parent=11 // pred_fallthru
          _
        // Predicated region
        $region25: #{forward.1} parent=11 // pred_check
          %p331 = pneg %p135
        $region26: #{forward.1} parent=11 // pred_check_branch
          %333 = sbr.rel (%p331) target = $region28
        $region27: #{forward.1} parent=11 // pred_region
          %335 = vsyncadd [#allocation8], 0
          %s337 = sshll.u32 %s4, 4
          %s338 = int_to_ptr.hbm [resolvable:$true] %s337
          %s339 = sshll.u32 [#allocation7], 4
          %s340 = int_to_ptr.vmem [resolvable:$true] %s339
          %342 = dma.hbm_to_vmem [thread:$0]  %s338, 64, %s340, [#allocation8]
        $region28: #{forward.1} parent=11 // pred_fallthru
          _
        // Predicated region
        $region29: #{forward.1} parent=11 // pred_check
          %p343 = pneg %p156
        $region30: #{forward.1} parent=11 // pred_check_branch
          %345 = sbr.rel (%p343) target = $region32
        $region31: #{forward.1} parent=11 // pred_region
          %347 = vsyncadd [#allocation8], 0
          %s348 = sshll.u32 %s5, 4
          %s349 = int_to_ptr.hbm [resolvable:$true] %s348
          %s350 = sshll.u32 [#allocation9], 4
          %s351 = int_to_ptr.vmem [resolvable:$true] %s350
          %356 = dma.hbm_to_vmem [thread:$0]  %s349, 37632, %s351, [#allocation8], 768, 768, 48
        $region32: #{forward.1} parent=11 // pred_fallthru
          _
        // Predicated region
        $region33: #{forward.1} parent=11 // pred_check
          %p357 = pneg %p177
        $region34: #{forward.1} parent=11 // pred_check_branch
          %359 = sbr.rel (%p357) target = $region36
        $region35: #{forward.1} parent=11 // pred_region
          %361 = vsyncadd [#allocation11], 0
          %s363 = sshll.u32 %s6, 4
          %s364 = int_to_ptr.hbm [resolvable:$true] %s363
          %s365 = sshll.u32 [#allocation10], 4
          %s366 = int_to_ptr.vmem [resolvable:$true] %s365
          %368 = dma.hbm_to_vmem [thread:$0]  %s364, 96, %s366, [#allocation11]
        $region36: #{forward.1} parent=11 // pred_fallthru
          _
        // Predicated region
        $region37: #{forward.1} parent=11 // pred_check
          %p369 = pneg %p198
        $region38: #{forward.1} parent=11 // pred_check_branch
          %371 = sbr.rel (%p369) target = $region40
        $region39: #{forward.1} parent=11 // pred_region
          %373 = vsyncadd [#allocation11], 0
          %s374 = sshll.u32 %s7, 4
          %s375 = int_to_ptr.hbm [resolvable:$true] %s374
          %s376 = sshll.u32 [#allocation12], 4
          %s377 = int_to_ptr.vmem [resolvable:$true] %s376
          %382 = dma.hbm_to_vmem [thread:$0]  %s375, 65280, %s377, [#allocation11], 768, 768, 48
        $region40: #{forward.1} parent=11 // pred_fallthru
          _
        // Predicated region
        $region41: #{forward.1} parent=11 // pred_check
          %p383 = pneg %p219
        $region42: #{forward.1} parent=11 // pred_check_branch
          %385 = sbr.rel (%p383) target = $region44
        $region43: #{forward.1} parent=11 // pred_region
          %387 = vsyncadd [#allocation14], 0
          %s389 = sshll.u32 %s8, 4
          %s390 = int_to_ptr.hbm [resolvable:$true] %s389
          %s391 = sshll.u32 [#allocation13], 4
          %s392 = int_to_ptr.vmem [resolvable:$true] %s391
          %394 = dma.hbm_to_vmem [thread:$0]  %s390, 96, %s392, [#allocation14]
        $region44: #{forward.1} parent=11 // pred_fallthru
          _
        // Predicated region
        $region45: #{forward.1} parent=11 // pred_check
          %p395 = pneg %p240
        $region46: #{forward.1} parent=11 // pred_check_branch
          %397 = sbr.rel (%p395) target = $region48
        $region47: #{forward.1} parent=11 // pred_region
          %399 = vsyncadd [#allocation14], 0
          %s400 = sshll.u32 %s9, 4
          %s401 = int_to_ptr.hbm [resolvable:$true] %s400
          %s402 = sshll.u32 [#allocation15], 4
          %s403 = int_to_ptr.vmem [resolvable:$true] %s402
          %408 = dma.hbm_to_vmem [thread:$0]  %s401, 65280, %s403, [#allocation14], 768, 768, 48
        $region48: #{forward.1} parent=11 // pred_fallthru
          _
        // Predicated region
        $region49: #{forward.1} parent=11 // pred_check
          %p409 = pneg %p261
        $region50: #{forward.1} parent=11 // pred_check_branch
          %411 = sbr.rel (%p409) target = $region52
        $region51: #{forward.1} parent=11 // pred_region
          %413 = vsyncadd [#allocation17], 0
          %s415 = sshll.u32 %s10, 4
          %s416 = int_to_ptr.hbm [resolvable:$true] %s415
          %s417 = sshll.u32 [#allocation16], 4
          %s418 = int_to_ptr.vmem [resolvable:$true] %s417
          %420 = dma.hbm_to_vmem [thread:$0]  %s416, 96, %s418, [#allocation17]
        $region52: #{forward.1} parent=11 // pred_fallthru
          _
      $region12: #{forward.1} parent=5 // pred_fallthru
        _
      %p421 = scmp.lt.s32.totalorder %s25, 2
      // Predicated region
      $region53: #{forward.1} parent=5 // pred_check
        %p422 = pneg %p421
      $region54: #{forward.1} parent=5 // pred_check_branch
        %424 = sbr.rel (%p422) target = $region56
      $region55: #{forward.1} parent=5 // pred_region
        // Predicated region
        $region57: #{forward.1} parent=55 // pred_check
          %p425 = pneg %p45
        $region58: #{forward.1} parent=55 // pred_check_branch
          %427 = sbr.rel (%p425) target = $region60
        $region59: #{forward.1} parent=55 // pred_region
          %s428 = sand.u32 %s35, 1
          %s429 = scalar_lea.sflag [#allocation3], %s428
          %s430 = sand.u32 %s35, 1
          %s431 = smul.addr %s430, 8
          %s432 = scalar_lea.vmem [#allocation2], %s431
          %434 = vsyncadd %s429, 0
          %s435 = smul.addr %s25, 8
          %s436 = scalar_lea.hbm %s0, %s435
          %s438 = sshll.u32 %s436, 4
          %s439 = int_to_ptr.hbm [resolvable:$true] %s438
          %s440 = sshll.u32 %s432, 4
          %s441 = int_to_ptr.vmem [resolvable:$true] %s440
          %443 = dma.hbm_to_vmem [thread:$0]  %s439, 128, %s441, %s429
        $region60: #{forward.1} parent=55 // pred_fallthru
          _
      $region56: #{forward.1} parent=5 // pred_fallthru
        _
      %p444 = scmp.le.s32.totalorder 1, %s25
      %p445 = scmp.lt.s32.totalorder %s25, 3
      %p446 = pnand %p444, %p445
      %p447 = pneg %p446
      // Predicated region
      $region61: #{forward.1} parent=5 // pred_check
        _
      $region62: #{forward.1} parent=5 // pred_check_branch
        %449 = sbr.rel (%p446) target = $region64
      $region63: #{forward.1} parent=5 // pred_region
        %s450 = ssub.s32 %s25, 1
        %s451 = sand.u32 %s38, 1
        %s452 = scalar_lea.sflag [#allocation3], %s451
        %s453 = sand.u32 %s38, 1
        %s454 = smul.addr %s453, 8
        %s455 = scalar_lea.vmem [#allocation2], %s454
        // Predicated region
        $region65: #{forward.1} parent=63 // pred_check
          %p456 = pneg %p51
        $region66: #{forward.1} parent=63 // pred_check_branch
          %458 = sbr.rel (%p456) target = $region68
        $region67: #{forward.1} parent=63 // pred_region
          %460 = dma.done %s452, 128
        $region68: #{forward.1} parent=63 // pred_fallthru
          _
        // Predicated region
        $region69: #{forward.1} parent=63 // pred_check
          %p461 = pneg %p72
        $region70: #{forward.1} parent=63 // pred_check_branch
          %463 = sbr.rel (%p461) target = $region72
        $region71: #{forward.1} parent=63 // pred_region
          %465 = dma.done [#allocation5], 2048
        $region72: #{forward.1} parent=63 // pred_fallthru
          _
        // Predicated region
        $region73: #{forward.1} parent=63 // pred_check
          %p466 = pneg %p93
        $region74: #{forward.1} parent=63 // pred_check_branch
          %468 = sbr.rel (%p466) target = $region76
        $region75: #{forward.1} parent=63 // pred_region
          %470 = dma.done [#allocation5], 32
        $region76: #{forward.1} parent=63 // pred_fallthru
          _
        // Predicated region
        $region77: #{forward.1} parent=63 // pred_check
          %p471 = pneg %p135
        $region78: #{forward.1} parent=63 // pred_check_branch
          %473 = sbr.rel (%p471) target = $region80
        $region79: #{forward.1} parent=63 // pred_region
          %475 = dma.done [#allocation8], 64
        $region80: #{forward.1} parent=63 // pred_fallthru
          _
        // Predicated region
        $region81: #{forward.1} parent=63 // pred_check
          %p476 = pneg %p156
        $region82: #{forward.1} parent=63 // pred_check_branch
          %478 = sbr.rel (%p476) target = $region84
        $region83: #{forward.1} parent=63 // pred_region
          %480 = dma.done [#allocation8], 37632
        $region84: #{forward.1} parent=63 // pred_fallthru
          _
        // Predicated region
        $region85: #{forward.1} parent=63 // pred_check
          %p481 = pneg %p177
        $region86: #{forward.1} parent=63 // pred_check_branch
          %483 = sbr.rel (%p481) target = $region88
        $region87: #{forward.1} parent=63 // pred_region
          %485 = dma.done [#allocation11], 96
        $region88: #{forward.1} parent=63 // pred_fallthru
          _
        // Predicated region
        $region89: #{forward.1} parent=63 // pred_check
          %p486 = pneg %p198
        $region90: #{forward.1} parent=63 // pred_check_branch
          %488 = sbr.rel (%p486) target = $region92
        $region91: #{forward.1} parent=63 // pred_region
          %490 = dma.done [#allocation11], 65280
        $region92: #{forward.1} parent=63 // pred_fallthru
          _
        // Predicated region
        $region93: #{forward.1} parent=63 // pred_check
          %p491 = pneg %p219
        $region94: #{forward.1} parent=63 // pred_check_branch
          %493 = sbr.rel (%p491) target = $region96
        $region95: #{forward.1} parent=63 // pred_region
          %495 = dma.done [#allocation14], 96
        $region96: #{forward.1} parent=63 // pred_fallthru
          _
        // Predicated region
        $region97: #{forward.1} parent=63 // pred_check
          %p496 = pneg %p240
        $region98: #{forward.1} parent=63 // pred_check_branch
          %498 = sbr.rel (%p496) target = $region100
        $region99: #{forward.1} parent=63 // pred_region
          %500 = dma.done [#allocation14], 65280
        $region100: #{forward.1} parent=63 // pred_fallthru
          _
        // Predicated region
        $region101: #{forward.1} parent=63 // pred_check
          %p501 = pneg %p261
        $region102: #{forward.1} parent=63 // pred_check_branch
          %503 = sbr.rel (%p501) target = $region104
        $region103: #{forward.1} parent=63 // pred_region
          %505 = dma.done [#allocation17], 96
        $region104: #{forward.1} parent=63 // pred_fallthru
          _
        %s506 = sand.u32 %s38, 1
        %s507 = scalar_lea.sflag [#allocation3], %s506
        %s508 = sand.u32 %s38, 1
        %s509 = smul.addr %s508, 8
        %s510 = scalar_lea.vmem [#allocation2], %s509
        %p511 = pneg %p51
        %p512 = pneg %p48
        %p513 = pneg %p72
        %p514 = pneg %p69
        %p515 = pneg %p93
        %p516 = pneg %p90
        %p517 = pneg %p114
        %p518 = pneg %p111
        %p519 = pneg %p135
        %p520 = pneg %p132
        %p521 = pneg %p156
        %p522 = pneg %p153
        %p523 = pneg %p177
        %p524 = pneg %p174
        %p525 = pneg %p198
        %p526 = pneg %p195
        %p527 = pneg %p219
        %p528 = pneg %p216
        %p529 = pneg %p240
        %p530 = pneg %p237
        %p531 = pneg %p261
        %p532 = pneg %p258
        %p533 = pneg %p287
        %p534 = pneg %p284
        %p535 = scmp.lt.s32.totalorder %s30, 1
        %s536 = scalar_select %p535, %s30, 1
        %s537 = smul.addr %s536, 6
        %s538 = smul.addr %s537, 8
        %s539 = scalar_lea.vmem %s11, %s538
        %p540 = scmp.lt.s32.totalorder %s30, 1
        %s541 = scalar_select %p540, %s30, 1
        %s542 = smul.addr %s541, 6
        %s543 = smul.addr %s542, 8
        %s544 = scalar_lea.vmem %s11, %s543
        %v545 = vld [vmem:[%s455] sm:$0xff]
        %v546 = vld [vmem:[#allocation4] sm:$0xff]
        %v547 = vld [vmem:[#allocation4 + $0x8] sm:$0xff]
        %v548 = vld [vmem:[#allocation4 + $0x10] sm:$0xff]
        %v549 = vld [vmem:[#allocation4 + $0x18] sm:$0xff]
        %v550 = vld [vmem:[#allocation4 + $0x20] sm:$0xff]
        %v551 = vld [vmem:[#allocation4 + $0x28] sm:$0xff]
        %v552 = vld [vmem:[#allocation4 + $0x30] sm:$0xff]
        %v553 = vld [vmem:[#allocation4 + $0x38] sm:$0xff]
        %v554 = vld [vmem:[#allocation4 + $0x40] sm:$0xff]
        %v555 = vld [vmem:[#allocation4 + $0x48] sm:$0xff]
        %v556 = vld [vmem:[#allocation4 + $0x50] sm:$0xff]
        %v557 = vld [vmem:[#allocation4 + $0x58] sm:$0xff]
        %v558 = vld [vmem:[#allocation4 + $0x60] sm:$0xff]
        %v559 = vld [vmem:[#allocation4 + $0x68] sm:$0xff]
        %v560 = vld [vmem:[#allocation4 + $0x70] sm:$0xff]
        %v561 = vld [vmem:[#allocation4 + $0x78] sm:$0xff]
        %v562 = vld [vmem:[#allocation6] sm:$0x3]
        %v564 = vperm.slane %v562, 0
        %v565 = vperm.slane %v562, 1
        %vm568 = vcmask 523264
        %v570 = vsel %vm568, %v545, 0
        %572 = vmatpush.msra.mxu0 0.0
        %573 = vmatpush.msra.mxu0 0.0
        %574 = vmatpush.msra.mxu0 0.0
        %575 = vmatpush.msra.mxu0 0.0
        %576 = vmatpush.msra.mxu0 0.0
        %577 = vmatpush.msra.mxu0 0.0
        %578 = vmatpush.msra.mxu0 0.0
        %579 = vmatpush.msra.mxu0 0.0
        %580 = vmatpush.msra.mxu0 %v560
        %581 = vmatpush.msra.mxu0 %v558
        %582 = vmatpush.msra.mxu0 %v556
        %583 = vmatpush.msra.mxu0 %v554
        %584 = vmatpush.msra.mxu0 %v552
        %585 = vmatpush.msra.mxu0 %v550
        %586 = vmatpush.msra.mxu0 %v548
        %587 = vmatpush.msra.mxu0 %v546
        %588 = vmatmul.f32.gmra.mxu0 %v570
        %v589 = vpop.f32.mrf.mxu0
        %v590 = vadd.f32 %v564, %v589
        %591 = vdwg.mxu0
        %592 = vmatpush.msra.mxu0 0.0
        %593 = vmatpush.msra.mxu0 0.0
        %594 = vmatpush.msra.mxu0 0.0
        %595 = vmatpush.msra.mxu0 0.0
        %596 = vmatpush.msra.mxu0 0.0
        %597 = vmatpush.msra.mxu0 0.0
        %598 = vmatpush.msra.mxu0 0.0
        %599 = vmatpush.msra.mxu0 0.0
        %600 = vmatpush.msra.mxu0 %v561
        %601 = vmatpush.msra.mxu0 %v559
        %602 = vmatpush.msra.mxu0 %v557
        %603 = vmatpush.msra.mxu0 %v555
        %604 = vmatpush.msra.mxu0 %v553
        %605 = vmatpush.msra.mxu0 %v551
        %606 = vmatpush.msra.mxu0 %v549
        %607 = vmatpush.msra.mxu0 %v547
        %608 = vmatmul.f32.gmra.mxu0 %v570
        %v609 = vpop.f32.mrf.mxu0
        %v610 = vadd.f32 %v565, %v609
        %611 = vdwg.mxu0
        %v612 = vld [vmem:[%s3] sm:$0xff]
        %v613 = vld [vmem:[%s3 + $0x8] sm:$0xff]
        %v614 = vld [vmem:[%s3 + $0x10] sm:$0xff]
        %v615 = vld [vmem:[%s3 + $0x18] sm:$0xff]
        %v616 = vld [vmem:[%s3 + $0x20] sm:$0xff]
        %v617 = vld [vmem:[%s3 + $0x28] sm:$0xff]
        %v618 = vld [vmem:[%s3 + $0x30] sm:$0xff]
        %v619 = vld [vmem:[%s3 + $0x38] sm:$0xff]
        %v620 = vld [vmem:[%s3 + $0x40] sm:$0xff]
        %v621 = vld [vmem:[%s3 + $0x48] sm:$0xff]
        %v622 = vld [vmem:[%s3 + $0x50] sm:$0xff]
        %v623 = vld [vmem:[%s3 + $0x58] sm:$0xff]
        %v624 = vld [vmem:[%s3 + $0x60] sm:$0xff]
        %v625 = vld [vmem:[%s3 + $0x68] sm:$0xff]
        %v626 = vld [vmem:[%s3 + $0x70] sm:$0xff]
        %v627 = vld [vmem:[%s3 + $0x78] sm:$0xff]
        %v628 = vld [vmem:[%s3 + $0x80] sm:$0xff]
        %v629 = vld [vmem:[%s3 + $0x88] sm:$0xff]
        %v630 = vld [vmem:[%s3 + $0x90] sm:$0xff]
        %v631 = vld [vmem:[%s3 + $0x98] sm:$0xff]
        %v632 = vld [vmem:[%s3 + $0xa0] sm:$0xff]
        %v633 = vld [vmem:[%s3 + $0xa8] sm:$0xff]
        %v634 = vld [vmem:[%s3 + $0xb0] sm:$0xff]
        %v635 = vld [vmem:[%s3 + $0xb8] sm:$0xff]
        %v636 = vld [vmem:[%s3 + $0xc0] sm:$0xff]
        %v637 = vld [vmem:[%s3 + $0xc8] sm:$0xff]
        %v638 = vld [vmem:[%s3 + $0xd0] sm:$0xff]
        %v639 = vld [vmem:[%s3 + $0xd8] sm:$0xff]
        %v640 = vld [vmem:[%s3 + $0xe0] sm:$0xff]
        %v641 = vld [vmem:[%s3 + $0xe8] sm:$0xff]
        %v642 = vld [vmem:[%s3 + $0xf0] sm:$0xff]
        %v643 = vld [vmem:[%s3 + $0xf8] sm:$0xff]
        %v644 = vld [vmem:[%s3 + $0x100] sm:$0xff]
        %v645 = vld [vmem:[%s3 + $0x108] sm:$0xff]
        %v646 = vld [vmem:[%s3 + $0x110] sm:$0xff]
        %v647 = vld [vmem:[%s3 + $0x118] sm:$0xff]
        %v648 = vld [vmem:[%s3 + $0x120] sm:$0xff]
        %v649 = vld [vmem:[%s3 + $0x128] sm:$0xff]
        %v650 = vld [vmem:[%s3 + $0x130] sm:$0xff]
        %v651 = vld [vmem:[%s3 + $0x138] sm:$0xff]
        %v652 = vld [vmem:[%s3 + $0x140] sm:$0xff]
        %v653 = vld [vmem:[%s3 + $0x148] sm:$0xff]
        %v654 = vld [vmem:[%s3 + $0x150] sm:$0xff]
        %v655 = vld [vmem:[%s3 + $0x158] sm:$0xff]
        %v656 = vld [vmem:[%s3 + $0x160] sm:$0xff]
        %v657 = vld [vmem:[%s3 + $0x168] sm:$0xff]
        %v658 = vld [vmem:[%s3 + $0x170] sm:$0xff]
        %v659 = vld [vmem:[%s3 + $0x178] sm:$0xff]
        %v660 = vld [vmem:[%s3 + $0x180] sm:$0xff]
        %v661 = vld [vmem:[%s3 + $0x188] sm:$0xff]
        %v662 = vld [vmem:[%s3 + $0x190] sm:$0xff]
        %v663 = vld [vmem:[%s3 + $0x198] sm:$0xff]
        %v664 = vld [vmem:[%s3 + $0x1a0] sm:$0xff]
        %v665 = vld [vmem:[%s3 + $0x1a8] sm:$0xff]
        %v666 = vld [vmem:[%s3 + $0x1b0] sm:$0xff]
        %v667 = vld [vmem:[%s3 + $0x1b8] sm:$0xff]
        %v668 = vld [vmem:[%s3 + $0x1c0] sm:$0xff]
        %v669 = vld [vmem:[%s3 + $0x1c8] sm:$0xff]
        %v670 = vld [vmem:[%s3 + $0x1d0] sm:$0xff]
        %v671 = vld [vmem:[%s3 + $0x1d8] sm:$0xff]
        %v672 = vld [vmem:[%s3 + $0x1e0] sm:$0xff]
        %v673 = vld [vmem:[%s3 + $0x1e8] sm:$0xff]
        %v674 = vld [vmem:[%s3 + $0x1f0] sm:$0xff]
        %v675 = vld [vmem:[%s3 + $0x1f8] sm:$0xff]
        %v676 = vld [vmem:[%s3 + $0x200] sm:$0xff]
        %v677 = vld [vmem:[%s3 + $0x208] sm:$0xff]
        %v678 = vld [vmem:[%s3 + $0x210] sm:$0xff]
        %v679 = vld [vmem:[%s3 + $0x218] sm:$0xff]
        %v680 = vld [vmem:[%s3 + $0x220] sm:$0xff]
        %v681 = vld [vmem:[%s3 + $0x228] sm:$0xff]
        %v682 = vld [vmem:[%s3 + $0x230] sm:$0xff]
        %v683 = vld [vmem:[%s3 + $0x238] sm:$0xff]
        %v684 = vld [vmem:[%s3 + $0x240] sm:$0xff]
        %v685 = vld [vmem:[%s3 + $0x248] sm:$0xff]
        %v686 = vld [vmem:[%s3 + $0x250] sm:$0xff]
        %v687 = vld [vmem:[%s3 + $0x258] sm:$0xff]
        %v688 = vld [vmem:[%s3 + $0x260] sm:$0xff]
        %v689 = vld [vmem:[%s3 + $0x268] sm:$0xff]
        %v690 = vld [vmem:[%s3 + $0x270] sm:$0xff]
        %v691 = vld [vmem:[%s3 + $0x278] sm:$0xff]
        %v692 = vld [vmem:[%s3 + $0x280] sm:$0xff]
        %v693 = vld [vmem:[%s3 + $0x288] sm:$0xff]
        %v694 = vld [vmem:[%s3 + $0x290] sm:$0xff]
        %v695 = vld [vmem:[%s3 + $0x298] sm:$0xff]
        %v696 = vld [vmem:[%s3 + $0x2a0] sm:$0xff]
        %v697 = vld [vmem:[%s3 + $0x2a8] sm:$0xff]
        %v698 = vld [vmem:[%s3 + $0x2b0] sm:$0xff]
        %v699 = vld [vmem:[%s3 + $0x2b8] sm:$0xff]
        %v700 = vld [vmem:[%s3 + $0x2c0] sm:$0xff]
        %v701 = vld [vmem:[%s3 + $0x2c8] sm:$0xff]
        %v702 = vld [vmem:[%s3 + $0x2d0] sm:$0xff]
        %v703 = vld [vmem:[%s3 + $0x2d8] sm:$0xff]
        %v704 = vld [vmem:[%s3 + $0x2e0] sm:$0xff]
        %v705 = vld [vmem:[%s3 + $0x2e8] sm:$0xff]
        %v706 = vld [vmem:[%s3 + $0x2f0] sm:$0xff]
        %v707 = vld [vmem:[%s3 + $0x2f8] sm:$0xff]
        %v708 = vld [vmem:[%s3 + $0x300] sm:$0xff]
        %v709 = vld [vmem:[%s3 + $0x308] sm:$0xff]
        %v710 = vld [vmem:[%s3 + $0x310] sm:$0xff]
        %v711 = vld [vmem:[%s3 + $0x318] sm:$0xff]
        %v712 = vld [vmem:[%s3 + $0x320] sm:$0xff]
        %v713 = vld [vmem:[%s3 + $0x328] sm:$0xff]
        %v714 = vld [vmem:[%s3 + $0x330] sm:$0xff]
        %v715 = vld [vmem:[%s3 + $0x338] sm:$0xff]
        %v716 = vld [vmem:[%s3 + $0x340] sm:$0xff]
        %v717 = vld [vmem:[%s3 + $0x348] sm:$0xff]
        %v718 = vld [vmem:[%s3 + $0x350] sm:$0xff]
        %v719 = vld [vmem:[%s3 + $0x358] sm:$0xff]
        %v720 = vld [vmem:[%s3 + $0x360] sm:$0xff]
        %v721 = vld [vmem:[%s3 + $0x368] sm:$0xff]
        %v722 = vld [vmem:[%s3 + $0x370] sm:$0xff]
        %v723 = vld [vmem:[%s3 + $0x378] sm:$0xff]
        %v724 = vld [vmem:[%s3 + $0x380] sm:$0xff]
        %v725 = vld [vmem:[%s3 + $0x388] sm:$0xff]
        %v726 = vld [vmem:[%s3 + $0x390] sm:$0xff]
        %v727 = vld [vmem:[%s3 + $0x398] sm:$0xff]
        %v728 = vld [vmem:[%s3 + $0x3a0] sm:$0xff]
        %v729 = vld [vmem:[%s3 + $0x3a8] sm:$0xff]
        %v730 = vld [vmem:[%s3 + $0x3b0] sm:$0xff]
        %v731 = vld [vmem:[%s3 + $0x3b8] sm:$0xff]
        %v732 = vld [vmem:[%s3 + $0x3c0] sm:$0xff]
        %v733 = vld [vmem:[%s3 + $0x3c8] sm:$0xff]
        %v734 = vld [vmem:[%s3 + $0x3d0] sm:$0xff]
        %v735 = vld [vmem:[%s3 + $0x3d8] sm:$0xff]
        %v736 = vld [vmem:[%s3 + $0x3e0] sm:$0xff]
        %v737 = vld [vmem:[%s3 + $0x3e8] sm:$0xff]
        %v738 = vld [vmem:[%s3 + $0x3f0] sm:$0xff]
        %v739 = vld [vmem:[%s3 + $0x3f8] sm:$0xff]
        %v740 = vld [vmem:[#allocation7] sm:$0xf]
        %v742 = vperm.slane %v740, 0
        %v743 = vperm.slane %v740, 1
        %v744 = vperm.slane %v740, 2
        %v745 = vperm.slane %v740, 3
        %750 = vmatpush.msra.mxu0 %v672
        %751 = vmatpush.msra.mxu0 %v668
        %752 = vmatpush.msra.mxu0 %v664
        %753 = vmatpush.msra.mxu0 %v660
        %754 = vmatpush.msra.mxu0 %v656
        %755 = vmatpush.msra.mxu0 %v652
        %756 = vmatpush.msra.mxu0 %v648
        %757 = vmatpush.msra.mxu0 %v644
        %758 = vmatpush.msra.mxu0 %v640
        %759 = vmatpush.msra.mxu0 %v636
        %760 = vmatpush.msra.mxu0 %v632
        %761 = vmatpush.msra.mxu0 %v628
        %762 = vmatpush.msra.mxu0 %v624
        %763 = vmatpush.msra.mxu0 %v620
        %764 = vmatpush.msra.mxu0 %v616
        %765 = vmatpush.msra.mxu0 %v612
        %766 = vmatmul.f32.gmra.mxu0 %v590
        %v767 = vpop.f32.mrf.mxu0
        %v768 = vadd.f32 %v742, %v767
        %769 = vdwg.mxu0
        %770 = vmatpush.msra.mxu0 %v736
        %771 = vmatpush.msra.mxu0 %v732
        %772 = vmatpush.msra.mxu0 %v728
        %773 = vmatpush.msra.mxu0 %v724
        %774 = vmatpush.msra.mxu0 %v720
        %775 = vmatpush.msra.mxu0 %v716
        %776 = vmatpush.msra.mxu0 %v712
        %777 = vmatpush.msra.mxu0 %v708
        %778 = vmatpush.msra.mxu0 %v704
        %779 = vmatpush.msra.mxu0 %v700
        %780 = vmatpush.msra.mxu0 %v696
        %781 = vmatpush.msra.mxu0 %v692
        %782 = vmatpush.msra.mxu0 %v688
        %783 = vmatpush.msra.mxu0 %v684
        %784 = vmatpush.msra.mxu0 %v680
        %785 = vmatpush.msra.mxu0 %v676
        %786 = vmatmul.f32.gmra.mxu0 %v610
        %v787 = vpop.f32.mrf.mxu0
        %v788 = vadd.f32 %v768, %v787
        %789 = vdwg.mxu0
        %790 = vmatpush.msra.mxu0 %v673
        %791 = vmatpush.msra.mxu0 %v669
        %792 = vmatpush.msra.mxu0 %v665
        %793 = vmatpush.msra.mxu0 %v661
        %794 = vmatpush.msra.mxu0 %v657
        %795 = vmatpush.msra.mxu0 %v653
        %796 = vmatpush.msra.mxu0 %v649
        %797 = vmatpush.msra.mxu0 %v645
        %798 = vmatpush.msra.mxu0 %v641
        %799 = vmatpush.msra.mxu0 %v637
        %800 = vmatpush.msra.mxu0 %v633
        %801 = vmatpush.msra.mxu0 %v629
        %802 = vmatpush.msra.mxu0 %v625
        %803 = vmatpush.msra.mxu0 %v621
        %804 = vmatpush.msra.mxu0 %v617
        %805 = vmatpush.msra.mxu0 %v613
        %806 = vmatmul.f32.gmra.mxu0 %v590
        %v807 = vpop.f32.mrf.mxu0
        %v808 = vadd.f32 %v743, %v807
        %809 = vdwg.mxu0
        %810 = vmatpush.msra.mxu0 %v737
        %811 = vmatpush.msra.mxu0 %v733
        %812 = vmatpush.msra.mxu0 %v729
        %813 = vmatpush.msra.mxu0 %v725
        %814 = vmatpush.msra.mxu0 %v721
        %815 = vmatpush.msra.mxu0 %v717
        %816 = vmatpush.msra.mxu0 %v713
        %817 = vmatpush.msra.mxu0 %v709
        %818 = vmatpush.msra.mxu0 %v705
        %819 = vmatpush.msra.mxu0 %v701
        %820 = vmatpush.msra.mxu0 %v697
        %821 = vmatpush.msra.mxu0 %v693
        %822 = vmatpush.msra.mxu0 %v689
        %823 = vmatpush.msra.mxu0 %v685
        %824 = vmatpush.msra.mxu0 %v681
        %825 = vmatpush.msra.mxu0 %v677
        %826 = vmatmul.f32.gmra.mxu0 %v610
        %v827 = vpop.f32.mrf.mxu0
        %v828 = vadd.f32 %v808, %v827
        %829 = vdwg.mxu0
        %830 = vmatpush.msra.mxu0 %v674
        %831 = vmatpush.msra.mxu0 %v670
        %832 = vmatpush.msra.mxu0 %v666
        %833 = vmatpush.msra.mxu0 %v662
        %834 = vmatpush.msra.mxu0 %v658
        %835 = vmatpush.msra.mxu0 %v654
        %836 = vmatpush.msra.mxu0 %v650
        %837 = vmatpush.msra.mxu0 %v646
        %838 = vmatpush.msra.mxu0 %v642
        %839 = vmatpush.msra.mxu0 %v638
        %840 = vmatpush.msra.mxu0 %v634
        %841 = vmatpush.msra.mxu0 %v630
        %842 = vmatpush.msra.mxu0 %v626
        %843 = vmatpush.msra.mxu0 %v622
        %844 = vmatpush.msra.mxu0 %v618
        %845 = vmatpush.msra.mxu0 %v614
        %846 = vmatmul.f32.gmra.mxu0 %v590
        %v847 = vpop.f32.mrf.mxu0
        %v848 = vadd.f32 %v744, %v847
        %849 = vdwg.mxu0
        %850 = vmatpush.msra.mxu0 %v738
        %851 = vmatpush.msra.mxu0 %v734
        %852 = vmatpush.msra.mxu0 %v730
        %853 = vmatpush.msra.mxu0 %v726
        %854 = vmatpush.msra.mxu0 %v722
        %855 = vmatpush.msra.mxu0 %v718
        %856 = vmatpush.msra.mxu0 %v714
        %857 = vmatpush.msra.mxu0 %v710
        %858 = vmatpush.msra.mxu0 %v706
        %859 = vmatpush.msra.mxu0 %v702
        %860 = vmatpush.msra.mxu0 %v698
        %861 = vmatpush.msra.mxu0 %v694
        %862 = vmatpush.msra.mxu0 %v690
        %863 = vmatpush.msra.mxu0 %v686
        %864 = vmatpush.msra.mxu0 %v682
        %865 = vmatpush.msra.mxu0 %v678
        %866 = vmatmul.f32.gmra.mxu0 %v610
        %v867 = vpop.f32.mrf.mxu0
        %v868 = vadd.f32 %v848, %v867
        %869 = vdwg.mxu0
        %870 = vmatpush.msra.mxu0 %v675
        %871 = vmatpush.msra.mxu0 %v671
        %872 = vmatpush.msra.mxu0 %v667
        %873 = vmatpush.msra.mxu0 %v663
        %874 = vmatpush.msra.mxu0 %v659
        %875 = vmatpush.msra.mxu0 %v655
        %876 = vmatpush.msra.mxu0 %v651
        %877 = vmatpush.msra.mxu0 %v647
        %878 = vmatpush.msra.mxu0 %v643
        %879 = vmatpush.msra.mxu0 %v639
        %880 = vmatpush.msra.mxu0 %v635
        %881 = vmatpush.msra.mxu0 %v631
        %882 = vmatpush.msra.mxu0 %v627
        %883 = vmatpush.msra.mxu0 %v623
        %884 = vmatpush.msra.mxu0 %v619
        %885 = vmatpush.msra.mxu0 %v615
        %886 = vmatmul.f32.gmra.mxu0 %v590
        %v887 = vpop.f32.mrf.mxu0
        %v888 = vadd.f32 %v745, %v887
        %889 = vdwg.mxu0
        %890 = vmatpush.msra.mxu0 %v739
        %891 = vmatpush.msra.mxu0 %v735
        %892 = vmatpush.msra.mxu0 %v731
        %893 = vmatpush.msra.mxu0 %v727
        %894 = vmatpush.msra.mxu0 %v723
        %895 = vmatpush.msra.mxu0 %v719
        %896 = vmatpush.msra.mxu0 %v715
        %897 = vmatpush.msra.mxu0 %v711
        %898 = vmatpush.msra.mxu0 %v707
        %899 = vmatpush.msra.mxu0 %v703
        %900 = vmatpush.msra.mxu0 %v699
        %901 = vmatpush.msra.mxu0 %v695
        %902 = vmatpush.msra.mxu0 %v691
        %903 = vmatpush.msra.mxu0 %v687
        %904 = vmatpush.msra.mxu0 %v683
        %905 = vmatpush.msra.mxu0 %v679
        %906 = vmatmul.f32.gmra.mxu0 %v610
        %v907 = vpop.f32.mrf.mxu0
        %v908 = vadd.f32 %v888, %v907
        %909 = vdwg.mxu0
        %v910 = vmax.f32 %v788, 0.0
        %v911 = vmax.f32 %v828, 0.0
        %v912 = vmax.f32 %v868, 0.0
        %v913 = vmax.f32 %v908, 0.0
        %v914 = vld [vmem:[#allocation9] sm:$0xff]
        %v915 = vld [vmem:[#allocation9 + $0x8] sm:$0xff]
        %v916 = vld [vmem:[#allocation9 + $0x10] sm:$0xff]
        %v917 = vld [vmem:[#allocation9 + $0x18] sm:$0xff]
        %v918 = vld [vmem:[#allocation9 + $0x20] sm:$0xff]
        %v919 = vld [vmem:[#allocation9 + $0x28] sm:$0xff]
        %v920 = vld [vmem:[#allocation9 + $0x30] sm:$0xff]
        %v921 = vld [vmem:[#allocation9 + $0x38] sm:$0xff]
        %v922 = vld [vmem:[#allocation9 + $0x40] sm:$0xff]
        %v923 = vld [vmem:[#allocation9 + $0x48] sm:$0xff]
        %v924 = vld [vmem:[#allocation9 + $0x50] sm:$0xff]
        %v925 = vld [vmem:[#allocation9 + $0x58] sm:$0xff]
        %v926 = vld [vmem:[#allocation9 + $0x60] sm:$0xff]
        %v927 = vld [vmem:[#allocation9 + $0x68] sm:$0xff]
        %v928 = vld [vmem:[#allocation9 + $0x70] sm:$0xff]
        %v929 = vld [vmem:[#allocation9 + $0x78] sm:$0xff]
        %v930 = vld [vmem:[#allocation9 + $0x80] sm:$0xff]
        %v931 = vld [vmem:[#allocation9 + $0x88] sm:$0xff]
        %v932 = vld [vmem:[#allocation9 + $0x90] sm:$0xff]
        %v933 = vld [vmem:[#allocation9 + $0x98] sm:$0xff]
        %v934 = vld [vmem:[#allocation9 + $0xa0] sm:$0xff]
        %v935 = vld [vmem:[#allocation9 + $0xa8] sm:$0xff]
        %v936 = vld [vmem:[#allocation9 + $0xb0] sm:$0xff]
        %v937 = vld [vmem:[#allocation9 + $0xb8] sm:$0xff]
        %v938 = vld [vmem:[#allocation9 + $0xc0] sm:$0xff]
        %v939 = vld [vmem:[#allocation9 + $0xc8] sm:$0xff]
        %v940 = vld [vmem:[#allocation9 + $0xd0] sm:$0xff]
        %v941 = vld [vmem:[#allocation9 + $0xd8] sm:$0xff]
        %v942 = vld [vmem:[#allocation9 + $0xe0] sm:$0xff]
        %v943 = vld [vmem:[#allocation9 + $0xe8] sm:$0xff]
        %v944 = vld [vmem:[#allocation9 + $0xf0] sm:$0xff]
        %v945 = vld [vmem:[#allocation9 + $0xf8] sm:$0xff]
        %v946 = vld [vmem:[#allocation9 + $0x100] sm:$0xff]
        %v947 = vld [vmem:[#allocation9 + $0x108] sm:$0xff]
        %v948 = vld [vmem:[#allocation9 + $0x110] sm:$0xff]
        %v949 = vld [vmem:[#allocation9 + $0x118] sm:$0xff]
        %v950 = vld [vmem:[#allocation9 + $0x120] sm:$0xff]
        %v951 = vld [vmem:[#allocation9 + $0x128] sm:$0xff]
        %v952 = vld [vmem:[#allocation9 + $0x130] sm:$0xff]
        %v953 = vld [vmem:[#allocation9 + $0x138] sm:$0xff]
        %v954 = vld [vmem:[#allocation9 + $0x140] sm:$0xff]
        %v955 = vld [vmem:[#allocation9 + $0x148] sm:$0xff]
        %v956 = vld [vmem:[#allocation9 + $0x150] sm:$0xff]
        %v957 = vld [vmem:[#allocation9 + $0x158] sm:$0xff]
        %v958 = vld [vmem:[#allocation9 + $0x160] sm:$0xff]
        %v959 = vld [vmem:[#allocation9 + $0x168] sm:$0xff]
        %v960 = vld [vmem:[#allocation9 + $0x170] sm:$0xff]
        %v961 = vld [vmem:[#allocation9 + $0x178] sm:$0xff]
        %v962 = vld [vmem:[#allocation9 + $0x180] sm:$0xff]
        %v963 = vld [vmem:[#allocation9 + $0x188] sm:$0xff]
        %v964 = vld [vmem:[#allocation9 + $0x190] sm:$0xff]
        %v965 = vld [vmem:[#allocation9 + $0x198] sm:$0xff]
        %v966 = vld [vmem:[#allocation9 + $0x1a0] sm:$0xff]
        %v967 = vld [vmem:[#allocation9 + $0x1a8] sm:$0xff]
        %v968 = vld [vmem:[#allocation9 + $0x1b0] sm:$0xff]
        %v969 = vld [vmem:[#allocation9 + $0x1b8] sm:$0xff]
        %v970 = vld [vmem:[#allocation9 + $0x1c0] sm:$0xff]
        %v971 = vld [vmem:[#allocation9 + $0x1c8] sm:$0xff]
        %v972 = vld [vmem:[#allocation9 + $0x1d0] sm:$0xff]
        %v973 = vld [vmem:[#allocation9 + $0x1d8] sm:$0xff]
        %v974 = vld [vmem:[#allocation9 + $0x1e0] sm:$0xff]
        %v975 = vld [vmem:[#allocation9 + $0x1e8] sm:$0xff]
        %v976 = vld [vmem:[#allocation9 + $0x1f0] sm:$0xff]
        %v977 = vld [vmem:[#allocation9 + $0x1f8] sm:$0xff]
        %v978 = vld [vmem:[#allocation9 + $0x200] sm:$0xff]
        %v979 = vld [vmem:[#allocation9 + $0x208] sm:$0xff]
        %v980 = vld [vmem:[#allocation9 + $0x210] sm:$0xff]
        %v981 = vld [vmem:[#allocation9 + $0x218] sm:$0xff]
        %v982 = vld [vmem:[#allocation9 + $0x220] sm:$0xff]
        %v983 = vld [vmem:[#allocation9 + $0x228] sm:$0xff]
        %v984 = vld [vmem:[#allocation9 + $0x230] sm:$0xff]
        %v985 = vld [vmem:[#allocation9 + $0x238] sm:$0xff]
        %v986 = vld [vmem:[#allocation9 + $0x240] sm:$0xff]
        %v987 = vld [vmem:[#allocation9 + $0x248] sm:$0xff]
        %v988 = vld [vmem:[#allocation9 + $0x250] sm:$0xff]
        %v989 = vld [vmem:[#allocation9 + $0x258] sm:$0xff]
        %v990 = vld [vmem:[#allocation9 + $0x260] sm:$0xff]
        %v991 = vld [vmem:[#allocation9 + $0x268] sm:$0xff]
        %v992 = vld [vmem:[#allocation9 + $0x270] sm:$0xff]
        %v993 = vld [vmem:[#allocation9 + $0x278] sm:$0xff]
        %v994 = vld [vmem:[#allocation9 + $0x280] sm:$0xff]
        %v995 = vld [vmem:[#allocation9 + $0x288] sm:$0xff]
        %v996 = vld [vmem:[#allocation9 + $0x290] sm:$0xff]
        %v997 = vld [vmem:[#allocation9 + $0x298] sm:$0xff]
        %v998 = vld [vmem:[#allocation9 + $0x2a0] sm:$0xff]
        %v999 = vld [vmem:[#allocation9 + $0x2a8] sm:$0xff]
        %v1000 = vld [vmem:[#allocation9 + $0x2b0] sm:$0xff]
        %v1001 = vld [vmem:[#allocation9 + $0x2b8] sm:$0xff]
        %v1002 = vld [vmem:[#allocation9 + $0x2c0] sm:$0xff]
        %v1003 = vld [vmem:[#allocation9 + $0x2c8] sm:$0xff]
        %v1004 = vld [vmem:[#allocation9 + $0x2d0] sm:$0xff]
        %v1005 = vld [vmem:[#allocation9 + $0x2d8] sm:$0xff]
        %v1006 = vld [vmem:[#allocation9 + $0x2e0] sm:$0xff]
        %v1007 = vld [vmem:[#allocation9 + $0x2e8] sm:$0xff]
        %v1008 = vld [vmem:[#allocation9 + $0x2f0] sm:$0xff]
        %v1009 = vld [vmem:[#allocation9 + $0x2f8] sm:$0xff]
        %v1010 = vld [vmem:[#allocation9 + $0x300] sm:$0xff]
        %v1011 = vld [vmem:[#allocation9 + $0x308] sm:$0xff]
        %v1012 = vld [vmem:[#allocation9 + $0x310] sm:$0xff]
        %v1013 = vld [vmem:[#allocation9 + $0x318] sm:$0xff]
        %v1014 = vld [vmem:[#allocation9 + $0x320] sm:$0xff]
        %v1015 = vld [vmem:[#allocation9 + $0x328] sm:$0xff]
        %v1016 = vld [vmem:[#allocation9 + $0x330] sm:$0xff]
        %v1017 = vld [vmem:[#allocation9 + $0x338] sm:$0xff]
        %v1018 = vld [vmem:[#allocation9 + $0x340] sm:$0xff]
        %v1019 = vld [vmem:[#allocation9 + $0x348] sm:$0xff]
        %v1020 = vld [vmem:[#allocation9 + $0x350] sm:$0xff]
        %v1021 = vld [vmem:[#allocation9 + $0x358] sm:$0xff]
        %v1022 = vld [vmem:[#allocation9 + $0x360] sm:$0xff]
        %v1023 = vld [vmem:[#allocation9 + $0x368] sm:$0xff]
        %v1024 = vld [vmem:[#allocation9 + $0x370] sm:$0xff]
        %v1025 = vld [vmem:[#allocation9 + $0x378] sm:$0xff]
        %v1026 = vld [vmem:[#allocation9 + $0x380] sm:$0xff]
        %v1027 = vld [vmem:[#allocation9 + $0x388] sm:$0xff]
        %v1028 = vld [vmem:[#allocation9 + $0x390] sm:$0xff]
        %v1029 = vld [vmem:[#allocation9 + $0x398] sm:$0xff]
        %v1030 = vld [vmem:[#allocation9 + $0x3a0] sm:$0xff]
        %v1031 = vld [vmem:[#allocation9 + $0x3a8] sm:$0xff]
        %v1032 = vld [vmem:[#allocation9 + $0x3b0] sm:$0xff]
        %v1033 = vld [vmem:[#allocation9 + $0x3b8] sm:$0xff]
        %v1034 = vld [vmem:[#allocation9 + $0x3c0] sm:$0xff]
        %v1035 = vld [vmem:[#allocation9 + $0x3c8] sm:$0xff]
        %v1036 = vld [vmem:[#allocation9 + $0x3d0] sm:$0xff]
        %v1037 = vld [vmem:[#allocation9 + $0x3d8] sm:$0xff]
        %v1038 = vld [vmem:[#allocation9 + $0x3e0] sm:$0xff]
        %v1039 = vld [vmem:[#allocation9 + $0x3e8] sm:$0xff]
        %v1040 = vld [vmem:[#allocation9 + $0x3f0] sm:$0xff]
        %v1041 = vld [vmem:[#allocation9 + $0x3f8] sm:$0xff]
        %v1042 = vld [vmem:[#allocation9 + $0x400] sm:$0xff]
        %v1043 = vld [vmem:[#allocation9 + $0x408] sm:$0xff]
        %v1044 = vld [vmem:[#allocation9 + $0x410] sm:$0xff]
        %v1045 = vld [vmem:[#allocation9 + $0x418] sm:$0xff]
        %v1046 = vld [vmem:[#allocation9 + $0x420] sm:$0xff]
        %v1047 = vld [vmem:[#allocation9 + $0x428] sm:$0xff]
        %v1048 = vld [vmem:[#allocation9 + $0x430] sm:$0xff]
        %v1049 = vld [vmem:[#allocation9 + $0x438] sm:$0xff]
        %v1050 = vld [vmem:[#allocation9 + $0x440] sm:$0xff]
        %v1051 = vld [vmem:[#allocation9 + $0x448] sm:$0xff]
        %v1052 = vld [vmem:[#allocation9 + $0x450] sm:$0xff]
        %v1053 = vld [vmem:[#allocation9 + $0x458] sm:$0xff]
        %v1054 = vld [vmem:[#allocation9 + $0x460] sm:$0xff]
        %v1055 = vld [vmem:[#allocation9 + $0x468] sm:$0xff]
        %v1056 = vld [vmem:[#allocation9 + $0x470] sm:$0xff]
        %v1057 = vld [vmem:[#allocation9 + $0x478] sm:$0xff]
        %v1058 = vld [vmem:[#allocation9 + $0x480] sm:$0xff]
        %v1059 = vld [vmem:[#allocation9 + $0x488] sm:$0xff]
        %v1060 = vld [vmem:[#allocation9 + $0x490] sm:$0xff]
        %v1061 = vld [vmem:[#allocation9 + $0x498] sm:$0xff]
        %v1062 = vld [vmem:[#allocation9 + $0x4a0] sm:$0xff]
        %v1063 = vld [vmem:[#allocation9 + $0x4a8] sm:$0xff]
        %v1064 = vld [vmem:[#allocation9 + $0x4b0] sm:$0xff]
        %v1065 = vld [vmem:[#allocation9 + $0x4b8] sm:$0xff]
        %v1066 = vld [vmem:[#allocation9 + $0x4c0] sm:$0xff]
        %v1067 = vld [vmem:[#allocation9 + $0x4c8] sm:$0xff]
        %v1068 = vld [vmem:[#allocation9 + $0x4d0] sm:$0xff]
        %v1069 = vld [vmem:[#allocation9 + $0x4d8] sm:$0xff]
        %v1070 = vld [vmem:[#allocation9 + $0x4e0] sm:$0xff]
        %v1071 = vld [vmem:[#allocation9 + $0x4e8] sm:$0xff]
        %v1072 = vld [vmem:[#allocation9 + $0x4f0] sm:$0xff]
        %v1073 = vld [vmem:[#allocation9 + $0x4f8] sm:$0xff]
        %v1074 = vld [vmem:[#allocation9 + $0x500] sm:$0xff]
        %v1075 = vld [vmem:[#allocation9 + $0x508] sm:$0xff]
        %v1076 = vld [vmem:[#allocation9 + $0x510] sm:$0xff]
        %v1077 = vld [vmem:[#allocation9 + $0x518] sm:$0xff]
        %v1078 = vld [vmem:[#allocation9 + $0x520] sm:$0xff]
        %v1079 = vld [vmem:[#allocation9 + $0x528] sm:$0xff]
        %v1080 = vld [vmem:[#allocation9 + $0x530] sm:$0xff]
        %v1081 = vld [vmem:[#allocation9 + $0x538] sm:$0xff]
        %v1082 = vld [vmem:[#allocation9 + $0x540] sm:$0xff]
        %v1083 = vld [vmem:[#allocation9 + $0x548] sm:$0xff]
        %v1084 = vld [vmem:[#allocation9 + $0x550] sm:$0xff]
        %v1085 = vld [vmem:[#allocation9 + $0x558] sm:$0xff]
        %v1086 = vld [vmem:[#allocation9 + $0x560] sm:$0xff]
        %v1087 = vld [vmem:[#allocation9 + $0x568] sm:$0xff]
        %v1088 = vld [vmem:[#allocation9 + $0x570] sm:$0xff]
        %v1089 = vld [vmem:[#allocation9 + $0x578] sm:$0xff]
        %v1090 = vld [vmem:[#allocation9 + $0x580] sm:$0xff]
        %v1091 = vld [vmem:[#allocation9 + $0x588] sm:$0xff]
        %v1092 = vld [vmem:[#allocation9 + $0x590] sm:$0xff]
        %v1093 = vld [vmem:[#allocation9 + $0x598] sm:$0xff]
        %v1094 = vld [vmem:[#allocation9 + $0x5a0] sm:$0xff]
        %v1095 = vld [vmem:[#allocation9 + $0x5a8] sm:$0xff]
        %v1096 = vld [vmem:[#allocation9 + $0x5b0] sm:$0xff]
        %v1097 = vld [vmem:[#allocation9 + $0x5b8] sm:$0xff]
        %v1098 = vld [vmem:[#allocation9 + $0x5c0] sm:$0xff]
        %v1099 = vld [vmem:[#allocation9 + $0x5c8] sm:$0xff]
        %v1100 = vld [vmem:[#allocation9 + $0x5d0] sm:$0xff]
        %v1101 = vld [vmem:[#allocation9 + $0x5d8] sm:$0xff]
        %v1102 = vld [vmem:[#allocation9 + $0x5e0] sm:$0xff]
        %v1103 = vld [vmem:[#allocation9 + $0x5e8] sm:$0xff]
        %v1104 = vld [vmem:[#allocation9 + $0x5f0] sm:$0xff]
        %v1105 = vld [vmem:[#allocation9 + $0x5f8] sm:$0xff]
        %v1106 = vld [vmem:[#allocation9 + $0x600] sm:$0xff]
        %v1107 = vld [vmem:[#allocation9 + $0x608] sm:$0xff]
        %v1108 = vld [vmem:[#allocation9 + $0x610] sm:$0xff]
        %v1109 = vld [vmem:[#allocation9 + $0x618] sm:$0xff]
        %v1110 = vld [vmem:[#allocation9 + $0x620] sm:$0xff]
        %v1111 = vld [vmem:[#allocation9 + $0x628] sm:$0xff]
        %v1112 = vld [vmem:[#allocation9 + $0x630] sm:$0xff]
        %v1113 = vld [vmem:[#allocation9 + $0x638] sm:$0xff]
        %v1114 = vld [vmem:[#allocation9 + $0x640] sm:$0xff]
        %v1115 = vld [vmem:[#allocation9 + $0x648] sm:$0xff]
        %v1116 = vld [vmem:[#allocation9 + $0x650] sm:$0xff]
        %v1117 = vld [vmem:[#allocation9 + $0x658] sm:$0xff]
        %v1118 = vld [vmem:[#allocation9 + $0x660] sm:$0xff]
        %v1119 = vld [vmem:[#allocation9 + $0x668] sm:$0xff]
        %v1120 = vld [vmem:[#allocation9 + $0x670] sm:$0xff]
        %v1121 = vld [vmem:[#allocation9 + $0x678] sm:$0xff]
        %v1122 = vld [vmem:[#allocation9 + $0x680] sm:$0xff]
        %v1123 = vld [vmem:[#allocation9 + $0x688] sm:$0xff]
        %v1124 = vld [vmem:[#allocation9 + $0x690] sm:$0xff]
        %v1125 = vld [vmem:[#allocation9 + $0x698] sm:$0xff]
        %v1126 = vld [vmem:[#allocation9 + $0x6a0] sm:$0xff]
        %v1127 = vld [vmem:[#allocation9 + $0x6a8] sm:$0xff]
        %v1128 = vld [vmem:[#allocation9 + $0x6b0] sm:$0xff]
        %v1129 = vld [vmem:[#allocation9 + $0x6b8] sm:$0xff]
        %v1130 = vld [vmem:[#allocation9 + $0x6c0] sm:$0xff]
        %v1131 = vld [vmem:[#allocation9 + $0x6c8] sm:$0xff]
        %v1132 = vld [vmem:[#allocation9 + $0x6d0] sm:$0xff]
        %v1133 = vld [vmem:[#allocation9 + $0x6d8] sm:$0xff]
        %v1134 = vld [vmem:[#allocation9 + $0x6e0] sm:$0xff]
        %v1135 = vld [vmem:[#allocation9 + $0x6e8] sm:$0xff]
        %v1136 = vld [vmem:[#allocation9 + $0x6f0] sm:$0xff]
        %v1137 = vld [vmem:[#allocation9 + $0x6f8] sm:$0xff]
        %v1138 = vld [vmem:[#allocation9 + $0x700] sm:$0xff]
        %v1139 = vld [vmem:[#allocation9 + $0x708] sm:$0xff]
        %v1140 = vld [vmem:[#allocation9 + $0x710] sm:$0xff]
        %v1141 = vld [vmem:[#allocation9 + $0x718] sm:$0xff]
        %v1142 = vld [vmem:[#allocation9 + $0x720] sm:$0xff]
        %v1143 = vld [vmem:[#allocation9 + $0x728] sm:$0xff]
        %v1144 = vld [vmem:[#allocation9 + $0x730] sm:$0xff]
        %v1145 = vld [vmem:[#allocation9 + $0x738] sm:$0xff]
        %v1146 = vld [vmem:[#allocation9 + $0x740] sm:$0xff]
        %v1147 = vld [vmem:[#allocation9 + $0x748] sm:$0xff]
        %v1148 = vld [vmem:[#allocation9 + $0x750] sm:$0xff]
        %v1149 = vld [vmem:[#allocation9 + $0x758] sm:$0xff]
        %v1150 = vld [vmem:[#allocation9 + $0x760] sm:$0xff]
        %v1151 = vld [vmem:[#allocation9 + $0x768] sm:$0xff]
        %v1152 = vld [vmem:[#allocation9 + $0x770] sm:$0xff]
        %v1153 = vld [vmem:[#allocation9 + $0x778] sm:$0xff]
        %v1154 = vld [vmem:[#allocation9 + $0x780] sm:$0xff]
        %v1155 = vld [vmem:[#allocation9 + $0x788] sm:$0xff]
        %v1156 = vld [vmem:[#allocation9 + $0x790] sm:$0xff]
        %v1157 = vld [vmem:[#allocation9 + $0x798] sm:$0xff]
        %v1158 = vld [vmem:[#allocation9 + $0x7a0] sm:$0xff]
        %v1159 = vld [vmem:[#allocation9 + $0x7a8] sm:$0xff]
        %v1160 = vld [vmem:[#allocation9 + $0x7b0] sm:$0xff]
        %v1161 = vld [vmem:[#allocation9 + $0x7b8] sm:$0xff]
        %v1162 = vld [vmem:[#allocation9 + $0x7c0] sm:$0xff]
        %v1163 = vld [vmem:[#allocation9 + $0x7c8] sm:$0xff]
        %v1164 = vld [vmem:[#allocation9 + $0x7d0] sm:$0xff]
        %v1165 = vld [vmem:[#allocation9 + $0x7d8] sm:$0xff]
        %v1166 = vld [vmem:[#allocation9 + $0x7e0] sm:$0xff]
        %v1167 = vld [vmem:[#allocation9 + $0x7e8] sm:$0xff]
        %v1168 = vld [vmem:[#allocation9 + $0x7f0] sm:$0xff]
        %v1169 = vld [vmem:[#allocation9 + $0x7f8] sm:$0xff]
        %v1170 = vld [vmem:[#allocation9 + $0x800] sm:$0xff]
        %v1171 = vld [vmem:[#allocation9 + $0x808] sm:$0xff]
        %v1172 = vld [vmem:[#allocation9 + $0x810] sm:$0xff]
        %v1173 = vld [vmem:[#allocation9 + $0x818] sm:$0xff]
        %v1174 = vld [vmem:[#allocation9 + $0x820] sm:$0xff]
        %v1175 = vld [vmem:[#allocation9 + $0x828] sm:$0xff]
        %v1176 = vld [vmem:[#allocation9 + $0x830] sm:$0xff]
        %v1177 = vld [vmem:[#allocation9 + $0x838] sm:$0xff]
        %v1178 = vld [vmem:[#allocation9 + $0x840] sm:$0xff]
        %v1179 = vld [vmem:[#allocation9 + $0x848] sm:$0xff]
        %v1180 = vld [vmem:[#allocation9 + $0x850] sm:$0xff]
        %v1181 = vld [vmem:[#allocation9 + $0x858] sm:$0xff]
        %v1182 = vld [vmem:[#allocation9 + $0x860] sm:$0xff]
        %v1183 = vld [vmem:[#allocation9 + $0x868] sm:$0xff]
        %v1184 = vld [vmem:[#allocation9 + $0x870] sm:$0xff]
        %v1185 = vld [vmem:[#allocation9 + $0x878] sm:$0xff]
        %v1186 = vld [vmem:[#allocation9 + $0x880] sm:$0xff]
        %v1187 = vld [vmem:[#allocation9 + $0x888] sm:$0xff]
        %v1188 = vld [vmem:[#allocation9 + $0x890] sm:$0xff]
        %v1189 = vld [vmem:[#allocation9 + $0x898] sm:$0xff]
        %v1190 = vld [vmem:[#allocation9 + $0x8a0] sm:$0xff]
        %v1191 = vld [vmem:[#allocation9 + $0x8a8] sm:$0xff]
        %v1192 = vld [vmem:[#allocation9 + $0x8b0] sm:$0xff]
        %v1193 = vld [vmem:[#allocation9 + $0x8b8] sm:$0xff]
        %v1194 = vld [vmem:[#allocation9 + $0x8c0] sm:$0xff]
        %v1195 = vld [vmem:[#allocation9 + $0x8c8] sm:$0xff]
        %v1196 = vld [vmem:[#allocation9 + $0x8d0] sm:$0xff]
        %v1197 = vld [vmem:[#allocation9 + $0x8d8] sm:$0xff]
        %v1198 = vld [vmem:[#allocation9 + $0x8e0] sm:$0xff]
        %v1199 = vld [vmem:[#allocation9 + $0x8e8] sm:$0xff]
        %v1200 = vld [vmem:[#allocation9 + $0x8f0] sm:$0xff]
        %v1201 = vld [vmem:[#allocation9 + $0x8f8] sm:$0xff]
        %v1202 = vld [vmem:[#allocation9 + $0x900] sm:$0xff]
        %v1203 = vld [vmem:[#allocation9 + $0x908] sm:$0xff]
        %v1204 = vld [vmem:[#allocation9 + $0x910] sm:$0xff]
        %v1205 = vld [vmem:[#allocation9 + $0x918] sm:$0xff]
        %v1206 = vld [vmem:[#allocation9 + $0x920] sm:$0xff]
        %v1207 = vld [vmem:[#allocation9 + $0x928] sm:$0xff]
        %v1208 = vld [vmem:[#allocation10] sm:$0x3f]
        %v1210 = vperm.slane %v1208, 0
        %v1211 = vperm.slane %v1208, 1
        %v1212 = vperm.slane %v1208, 2
        %v1213 = vperm.slane %v1208, 3
        %v1214 = vperm.slane %v1208, 4
        %v1215 = vperm.slane %v1208, 5
        %vm1222 = vcmask 64512
        %v1224 = vsel %vm1222, %v913, 0
        %1226 = vmatpush.msra.mxu0 %v1004
        %1227 = vmatpush.msra.mxu0 %v998
        %1228 = vmatpush.msra.mxu0 %v992
        %1229 = vmatpush.msra.mxu0 %v986
        %1230 = vmatpush.msra.mxu0 %v980
        %1231 = vmatpush.msra.mxu0 %v974
        %1232 = vmatpush.msra.mxu0 %v968
        %1233 = vmatpush.msra.mxu0 %v962
        %1234 = vmatpush.msra.mxu0 %v956
        %1235 = vmatpush.msra.mxu0 %v950
        %1236 = vmatpush.msra.mxu0 %v944
        %1237 = vmatpush.msra.mxu0 %v938
        %1238 = vmatpush.msra.mxu0 %v932
        %1239 = vmatpush.msra.mxu0 %v926
        %1240 = vmatpush.msra.mxu0 %v920
        %1241 = vmatpush.msra.mxu0 %v914
        %1242 = vmatmul.f32.gmra.mxu0 %v910
        %v1243 = vpop.f32.mrf.mxu0
        %v1244 = vadd.f32 %v1210, %v1243
        %1245 = vdwg.mxu0
        %1246 = vmatpush.msra.mxu0 %v1100
        %1247 = vmatpush.msra.mxu0 %v1094
        %1248 = vmatpush.msra.mxu0 %v1088
        %1249 = vmatpush.msra.mxu0 %v1082
        %1250 = vmatpush.msra.mxu0 %v1076
        %1251 = vmatpush.msra.mxu0 %v1070
        %1252 = vmatpush.msra.mxu0 %v1064
        %1253 = vmatpush.msra.mxu0 %v1058
        %1254 = vmatpush.msra.mxu0 %v1052
        %1255 = vmatpush.msra.mxu0 %v1046
        %1256 = vmatpush.msra.mxu0 %v1040
        %1257 = vmatpush.msra.mxu0 %v1034
        %1258 = vmatpush.msra.mxu0 %v1028
        %1259 = vmatpush.msra.mxu0 %v1022
        %1260 = vmatpush.msra.mxu0 %v1016
        %1261 = vmatpush.msra.mxu0 %v1010
        %1262 = vmatmul.f32.gmra.mxu0 %v911
        %v1263 = vpop.f32.mrf.mxu0
        %v1264 = vadd.f32 %v1244, %v1263
        %1265 = vdwg.mxu0
        %1266 = vmatpush.msra.mxu0 %v1196
        %1267 = vmatpush.msra.mxu0 %v1190
        %1268 = vmatpush.msra.mxu0 %v1184
        %1269 = vmatpush.msra.mxu0 %v1178
        %1270 = vmatpush.msra.mxu0 %v1172
        %1271 = vmatpush.msra.mxu0 %v1166
        %1272 = vmatpush.msra.mxu0 %v1160
        %1273 = vmatpush.msra.mxu0 %v1154
        %1274 = vmatpush.msra.mxu0 %v1148
        %1275 = vmatpush.msra.mxu0 %v1142
        %1276 = vmatpush.msra.mxu0 %v1136
        %1277 = vmatpush.msra.mxu0 %v1130
        %1278 = vmatpush.msra.mxu0 %v1124
        %1279 = vmatpush.msra.mxu0 %v1118
        %1280 = vmatpush.msra.mxu0 %v1112
        %1281 = vmatpush.msra.mxu0 %v1106
        %1282 = vmatmul.f32.gmra.mxu0 %v912
        %v1283 = vpop.f32.mrf.mxu0
        %v1284 = vadd.f32 %v1264, %v1283
        %1285 = vdwg.mxu0
        %1286 = vmatpush.msra.mxu0 0.0
        %1287 = vmatpush.msra.mxu0 0.0
        %1288 = vmatpush.msra.mxu0 0.0
        %1289 = vmatpush.msra.mxu0 0.0
        %1290 = vmatpush.msra.mxu0 0.0
        %1291 = vmatpush.msra.mxu0 0.0
        %1292 = vmatpush.msra.mxu0 0.0
        %1293 = vmatpush.msra.mxu0 0.0
        %1294 = vmatpush.msra.mxu0 0.0
        %1295 = vmatpush.msra.mxu0 0.0
        %1296 = vmatpush.msra.mxu0 0.0
        %1297 = vmatpush.msra.mxu0 0.0
        %1298 = vmatpush.msra.mxu0 0.0
        %1299 = vmatpush.msra.mxu0 0.0
        %1300 = vmatpush.msra.mxu0 0.0
        %1301 = vmatpush.msra.mxu0 %v1202
        %1302 = vmatmul.f32.gmra.mxu0 %v1224
        %v1303 = vpop.f32.mrf.mxu0
        %v1304 = vadd.f32 %v1284, %v1303
        %1305 = vdwg.mxu0
        %1306 = vmatpush.msra.mxu0 %v1005
        %1307 = vmatpush.msra.mxu0 %v999
        %1308 = vmatpush.msra.mxu0 %v993
        %1309 = vmatpush.msra.mxu0 %v987
        %1310 = vmatpush.msra.mxu0 %v981
        %1311 = vmatpush.msra.mxu0 %v975
        %1312 = vmatpush.msra.mxu0 %v969
        %1313 = vmatpush.msra.mxu0 %v963
        %1314 = vmatpush.msra.mxu0 %v957
        %1315 = vmatpush.msra.mxu0 %v951
        %1316 = vmatpush.msra.mxu0 %v945
        %1317 = vmatpush.msra.mxu0 %v939
        %1318 = vmatpush.msra.mxu0 %v933
        %1319 = vmatpush.msra.mxu0 %v927
        %1320 = vmatpush.msra.mxu0 %v921
        %1321 = vmatpush.msra.mxu0 %v915
        %1322 = vmatmul.f32.gmra.mxu0 %v910
        %v1323 = vpop.f32.mrf.mxu0
        %v1324 = vadd.f32 %v1211, %v1323
        %1325 = vdwg.mxu0
        %1326 = vmatpush.msra.mxu0 %v1101
        %1327 = vmatpush.msra.mxu0 %v1095
        %1328 = vmatpush.msra.mxu0 %v1089
        %1329 = vmatpush.msra.mxu0 %v1083
        %1330 = vmatpush.msra.mxu0 %v1077
        %1331 = vmatpush.msra.mxu0 %v1071
        %1332 = vmatpush.msra.mxu0 %v1065
        %1333 = vmatpush.msra.mxu0 %v1059
        %1334 = vmatpush.msra.mxu0 %v1053
        %1335 = vmatpush.msra.mxu0 %v1047
        %1336 = vmatpush.msra.mxu0 %v1041
        %1337 = vmatpush.msra.mxu0 %v1035
        %1338 = vmatpush.msra.mxu0 %v1029
        %1339 = vmatpush.msra.mxu0 %v1023
        %1340 = vmatpush.msra.mxu0 %v1017
        %1341 = vmatpush.msra.mxu0 %v1011
        %1342 = vmatmul.f32.gmra.mxu0 %v911
        %v1343 = vpop.f32.mrf.mxu0
        %v1344 = vadd.f32 %v1324, %v1343
        %1345 = vdwg.mxu0
        %1346 = vmatpush.msra.mxu0 %v1197
        %1347 = vmatpush.msra.mxu0 %v1191
        %1348 = vmatpush.msra.mxu0 %v1185
        %1349 = vmatpush.msra.mxu0 %v1179
        %1350 = vmatpush.msra.mxu0 %v1173
        %1351 = vmatpush.msra.mxu0 %v1167
        %1352 = vmatpush.msra.mxu0 %v1161
        %1353 = vmatpush.msra.mxu0 %v1155
        %1354 = vmatpush.msra.mxu0 %v1149
        %1355 = vmatpush.msra.mxu0 %v1143
        %1356 = vmatpush.msra.mxu0 %v1137
        %1357 = vmatpush.msra.mxu0 %v1131
        %1358 = vmatpush.msra.mxu0 %v1125
        %1359 = vmatpush.msra.mxu0 %v1119
        %1360 = vmatpush.msra.mxu0 %v1113
        %1361 = vmatpush.msra.mxu0 %v1107
        %1362 = vmatmul.f32.gmra.mxu0 %v912
        %v1363 = vpop.f32.mrf.mxu0
        %v1364 = vadd.f32 %v1344, %v1363
        %1365 = vdwg.mxu0
        %1366 = vmatpush.msra.mxu0 0.0
        %1367 = vmatpush.msra.mxu0 0.0
        %1368 = vmatpush.msra.mxu0 0.0
        %1369 = vmatpush.msra.mxu0 0.0
        %1370 = vmatpush.msra.mxu0 0.0
        %1371 = vmatpush.msra.mxu0 0.0
        %1372 = vmatpush.msra.mxu0 0.0
        %1373 = vmatpush.msra.mxu0 0.0
        %1374 = vmatpush.msra.mxu0 0.0
        %1375 = vmatpush.msra.mxu0 0.0
        %1376 = vmatpush.msra.mxu0 0.0
        %1377 = vmatpush.msra.mxu0 0.0
        %1378 = vmatpush.msra.mxu0 0.0
        %1379 = vmatpush.msra.mxu0 0.0
        %1380 = vmatpush.msra.mxu0 0.0
        %1381 = vmatpush.msra.mxu0 %v1203
        %1382 = vmatmul.f32.gmra.mxu0 %v1224
        %v1383 = vpop.f32.mrf.mxu0
        %v1384 = vadd.f32 %v1364, %v1383
        %1385 = vdwg.mxu0
        %1386 = vmatpush.msra.mxu0 %v1006
        %1387 = vmatpush.msra.mxu0 %v1000
        %1388 = vmatpush.msra.mxu0 %v994
        %1389 = vmatpush.msra.mxu0 %v988
        %1390 = vmatpush.msra.mxu0 %v982
        %1391 = vmatpush.msra.mxu0 %v976
        %1392 = vmatpush.msra.mxu0 %v970
        %1393 = vmatpush.msra.mxu0 %v964
        %1394 = vmatpush.msra.mxu0 %v958
        %1395 = vmatpush.msra.mxu0 %v952
        %1396 = vmatpush.msra.mxu0 %v946
        %1397 = vmatpush.msra.mxu0 %v940
        %1398 = vmatpush.msra.mxu0 %v934
        %1399 = vmatpush.msra.mxu0 %v928
        %1400 = vmatpush.msra.mxu0 %v922
        %1401 = vmatpush.msra.mxu0 %v916
        %1402 = vmatmul.f32.gmra.mxu0 %v910
        %v1403 = vpop.f32.mrf.mxu0
        %v1404 = vadd.f32 %v1212, %v1403
        %1405 = vdwg.mxu0
        %1406 = vmatpush.msra.mxu0 %v1102
        %1407 = vmatpush.msra.mxu0 %v1096
        %1408 = vmatpush.msra.mxu0 %v1090
        %1409 = vmatpush.msra.mxu0 %v1084
        %1410 = vmatpush.msra.mxu0 %v1078
        %1411 = vmatpush.msra.mxu0 %v1072
        %1412 = vmatpush.msra.mxu0 %v1066
        %1413 = vmatpush.msra.mxu0 %v1060
        %1414 = vmatpush.msra.mxu0 %v1054
        %1415 = vmatpush.msra.mxu0 %v1048
        %1416 = vmatpush.msra.mxu0 %v1042
        %1417 = vmatpush.msra.mxu0 %v1036
        %1418 = vmatpush.msra.mxu0 %v1030
        %1419 = vmatpush.msra.mxu0 %v1024
        %1420 = vmatpush.msra.mxu0 %v1018
        %1421 = vmatpush.msra.mxu0 %v1012
        %1422 = vmatmul.f32.gmra.mxu0 %v911
        %v1423 = vpop.f32.mrf.mxu0
        %v1424 = vadd.f32 %v1404, %v1423
        %1425 = vdwg.mxu0
        %1426 = vmatpush.msra.mxu0 %v1198
        %1427 = vmatpush.msra.mxu0 %v1192
        %1428 = vmatpush.msra.mxu0 %v1186
        %1429 = vmatpush.msra.mxu0 %v1180
        %1430 = vmatpush.msra.mxu0 %v1174
        %1431 = vmatpush.msra.mxu0 %v1168
        %1432 = vmatpush.msra.mxu0 %v1162
        %1433 = vmatpush.msra.mxu0 %v1156
        %1434 = vmatpush.msra.mxu0 %v1150
        %1435 = vmatpush.msra.mxu0 %v1144
        %1436 = vmatpush.msra.mxu0 %v1138
        %1437 = vmatpush.msra.mxu0 %v1132
        %1438 = vmatpush.msra.mxu0 %v1126
        %1439 = vmatpush.msra.mxu0 %v1120
        %1440 = vmatpush.msra.mxu0 %v1114
        %1441 = vmatpush.msra.mxu0 %v1108
        %1442 = vmatmul.f32.gmra.mxu0 %v912
        %v1443 = vpop.f32.mrf.mxu0
        %v1444 = vadd.f32 %v1424, %v1443
        %1445 = vdwg.mxu0
        %1446 = vmatpush.msra.mxu0 0.0
        %1447 = vmatpush.msra.mxu0 0.0
        %1448 = vmatpush.msra.mxu0 0.0
        %1449 = vmatpush.msra.mxu0 0.0
        %1450 = vmatpush.msra.mxu0 0.0
        %1451 = vmatpush.msra.mxu0 0.0
        %1452 = vmatpush.msra.mxu0 0.0
        %1453 = vmatpush.msra.mxu0 0.0
        %1454 = vmatpush.msra.mxu0 0.0
        %1455 = vmatpush.msra.mxu0 0.0
        %1456 = vmatpush.msra.mxu0 0.0
        %1457 = vmatpush.msra.mxu0 0.0
        %1458 = vmatpush.msra.mxu0 0.0
        %1459 = vmatpush.msra.mxu0 0.0
        %1460 = vmatpush.msra.mxu0 0.0
        %1461 = vmatpush.msra.mxu0 %v1204
        %1462 = vmatmul.f32.gmra.mxu0 %v1224
        %v1463 = vpop.f32.mrf.mxu0
        %v1464 = vadd.f32 %v1444, %v1463
        %1465 = vdwg.mxu0
        %1466 = vmatpush.msra.mxu0 %v1007
        %1467 = vmatpush.msra.mxu0 %v1001
        %1468 = vmatpush.msra.mxu0 %v995
        %1469 = vmatpush.msra.mxu0 %v989
        %1470 = vmatpush.msra.mxu0 %v983
        %1471 = vmatpush.msra.mxu0 %v977
        %1472 = vmatpush.msra.mxu0 %v971
        %1473 = vmatpush.msra.mxu0 %v965
        %1474 = vmatpush.msra.mxu0 %v959
        %1475 = vmatpush.msra.mxu0 %v953
        %1476 = vmatpush.msra.mxu0 %v947
        %1477 = vmatpush.msra.mxu0 %v941
        %1478 = vmatpush.msra.mxu0 %v935
        %1479 = vmatpush.msra.mxu0 %v929
        %1480 = vmatpush.msra.mxu0 %v923
        %1481 = vmatpush.msra.mxu0 %v917
        %1482 = vmatmul.f32.gmra.mxu0 %v910
        %v1483 = vpop.f32.mrf.mxu0
        %v1484 = vadd.f32 %v1213, %v1483
        %1485 = vdwg.mxu0
        %1486 = vmatpush.msra.mxu0 %v1103
        %1487 = vmatpush.msra.mxu0 %v1097
        %1488 = vmatpush.msra.mxu0 %v1091
        %1489 = vmatpush.msra.mxu0 %v1085
        %1490 = vmatpush.msra.mxu0 %v1079
        %1491 = vmatpush.msra.mxu0 %v1073
        %1492 = vmatpush.msra.mxu0 %v1067
        %1493 = vmatpush.msra.mxu0 %v1061
        %1494 = vmatpush.msra.mxu0 %v1055
        %1495 = vmatpush.msra.mxu0 %v1049
        %1496 = vmatpush.msra.mxu0 %v1043
        %1497 = vmatpush.msra.mxu0 %v1037
        %1498 = vmatpush.msra.mxu0 %v1031
        %1499 = vmatpush.msra.mxu0 %v1025
        %1500 = vmatpush.msra.mxu0 %v1019
        %1501 = vmatpush.msra.mxu0 %v1013
        %1502 = vmatmul.f32.gmra.mxu0 %v911
        %v1503 = vpop.f32.mrf.mxu0
        %v1504 = vadd.f32 %v1484, %v1503
        %1505 = vdwg.mxu0
        %1506 = vmatpush.msra.mxu0 %v1199
        %1507 = vmatpush.msra.mxu0 %v1193
        %1508 = vmatpush.msra.mxu0 %v1187
        %1509 = vmatpush.msra.mxu0 %v1181
        %1510 = vmatpush.msra.mxu0 %v1175
        %1511 = vmatpush.msra.mxu0 %v1169
        %1512 = vmatpush.msra.mxu0 %v1163
        %1513 = vmatpush.msra.mxu0 %v1157
        %1514 = vmatpush.msra.mxu0 %v1151
        %1515 = vmatpush.msra.mxu0 %v1145
        %1516 = vmatpush.msra.mxu0 %v1139
        %1517 = vmatpush.msra.mxu0 %v1133
        %1518 = vmatpush.msra.mxu0 %v1127
        %1519 = vmatpush.msra.mxu0 %v1121
        %1520 = vmatpush.msra.mxu0 %v1115
        %1521 = vmatpush.msra.mxu0 %v1109
        %1522 = vmatmul.f32.gmra.mxu0 %v912
        %v1523 = vpop.f32.mrf.mxu0
        %v1524 = vadd.f32 %v1504, %v1523
        %1525 = vdwg.mxu0
        %1526 = vmatpush.msra.mxu0 0.0
        %1527 = vmatpush.msra.mxu0 0.0
        %1528 = vmatpush.msra.mxu0 0.0
        %1529 = vmatpush.msra.mxu0 0.0
        %1530 = vmatpush.msra.mxu0 0.0
        %1531 = vmatpush.msra.mxu0 0.0
        %1532 = vmatpush.msra.mxu0 0.0
        %1533 = vmatpush.msra.mxu0 0.0
        %1534 = vmatpush.msra.mxu0 0.0
        %1535 = vmatpush.msra.mxu0 0.0
        %1536 = vmatpush.msra.mxu0 0.0
        %1537 = vmatpush.msra.mxu0 0.0
        %1538 = vmatpush.msra.mxu0 0.0
        %1539 = vmatpush.msra.mxu0 0.0
        %1540 = vmatpush.msra.mxu0 0.0
        %1541 = vmatpush.msra.mxu0 %v1205
        %1542 = vmatmul.f32.gmra.mxu0 %v1224
        %v1543 = vpop.f32.mrf.mxu0
        %v1544 = vadd.f32 %v1524, %v1543
        %1545 = vdwg.mxu0
        %1546 = vmatpush.msra.mxu0 %v1008
        %1547 = vmatpush.msra.mxu0 %v1002
        %1548 = vmatpush.msra.mxu0 %v996
        %1549 = vmatpush.msra.mxu0 %v990
        %1550 = vmatpush.msra.mxu0 %v984
        %1551 = vmatpush.msra.mxu0 %v978
        %1552 = vmatpush.msra.mxu0 %v972
        %1553 = vmatpush.msra.mxu0 %v966
        %1554 = vmatpush.msra.mxu0 %v960
        %1555 = vmatpush.msra.mxu0 %v954
        %1556 = vmatpush.msra.mxu0 %v948
        %1557 = vmatpush.msra.mxu0 %v942
        %1558 = vmatpush.msra.mxu0 %v936
        %1559 = vmatpush.msra.mxu0 %v930
        %1560 = vmatpush.msra.mxu0 %v924
        %1561 = vmatpush.msra.mxu0 %v918
        %1562 = vmatmul.f32.gmra.mxu0 %v910
        %v1563 = vpop.f32.mrf.mxu0
        %v1564 = vadd.f32 %v1214, %v1563
        %1565 = vdwg.mxu0
        %1566 = vmatpush.msra.mxu0 %v1104
        %1567 = vmatpush.msra.mxu0 %v1098
        %1568 = vmatpush.msra.mxu0 %v1092
        %1569 = vmatpush.msra.mxu0 %v1086
        %1570 = vmatpush.msra.mxu0 %v1080
        %1571 = vmatpush.msra.mxu0 %v1074
        %1572 = vmatpush.msra.mxu0 %v1068
        %1573 = vmatpush.msra.mxu0 %v1062
        %1574 = vmatpush.msra.mxu0 %v1056
        %1575 = vmatpush.msra.mxu0 %v1050
        %1576 = vmatpush.msra.mxu0 %v1044
        %1577 = vmatpush.msra.mxu0 %v1038
        %1578 = vmatpush.msra.mxu0 %v1032
        %1579 = vmatpush.msra.mxu0 %v1026
        %1580 = vmatpush.msra.mxu0 %v1020
        %1581 = vmatpush.msra.mxu0 %v1014
        %1582 = vmatmul.f32.gmra.mxu0 %v911
        %v1583 = vpop.f32.mrf.mxu0
        %v1584 = vadd.f32 %v1564, %v1583
        %1585 = vdwg.mxu0
        %1586 = vmatpush.msra.mxu0 %v1200
        %1587 = vmatpush.msra.mxu0 %v1194
        %1588 = vmatpush.msra.mxu0 %v1188
        %1589 = vmatpush.msra.mxu0 %v1182
        %1590 = vmatpush.msra.mxu0 %v1176
        %1591 = vmatpush.msra.mxu0 %v1170
        %1592 = vmatpush.msra.mxu0 %v1164
        %1593 = vmatpush.msra.mxu0 %v1158
        %1594 = vmatpush.msra.mxu0 %v1152
        %1595 = vmatpush.msra.mxu0 %v1146
        %1596 = vmatpush.msra.mxu0 %v1140
        %1597 = vmatpush.msra.mxu0 %v1134
        %1598 = vmatpush.msra.mxu0 %v1128
        %1599 = vmatpush.msra.mxu0 %v1122
        %1600 = vmatpush.msra.mxu0 %v1116
        %1601 = vmatpush.msra.mxu0 %v1110
        %1602 = vmatmul.f32.gmra.mxu0 %v912
        %v1603 = vpop.f32.mrf.mxu0
        %v1604 = vadd.f32 %v1584, %v1603
        %1605 = vdwg.mxu0
        %1606 = vmatpush.msra.mxu0 0.0
        %1607 = vmatpush.msra.mxu0 0.0
        %1608 = vmatpush.msra.mxu0 0.0
        %1609 = vmatpush.msra.mxu0 0.0
        %1610 = vmatpush.msra.mxu0 0.0
        %1611 = vmatpush.msra.mxu0 0.0
        %1612 = vmatpush.msra.mxu0 0.0
        %1613 = vmatpush.msra.mxu0 0.0
        %1614 = vmatpush.msra.mxu0 0.0
        %1615 = vmatpush.msra.mxu0 0.0
        %1616 = vmatpush.msra.mxu0 0.0
        %1617 = vmatpush.msra.mxu0 0.0
        %1618 = vmatpush.msra.mxu0 0.0
        %1619 = vmatpush.msra.mxu0 0.0
        %1620 = vmatpush.msra.mxu0 0.0
        %1621 = vmatpush.msra.mxu0 %v1206
        %1622 = vmatmul.f32.gmra.mxu0 %v1224
        %v1623 = vpop.f32.mrf.mxu0
        %v1624 = vadd.f32 %v1604, %v1623
        %1625 = vdwg.mxu0
        %1626 = vmatpush.msra.mxu0 %v1009
        %1627 = vmatpush.msra.mxu0 %v1003
        %1628 = vmatpush.msra.mxu0 %v997
        %1629 = vmatpush.msra.mxu0 %v991
        %1630 = vmatpush.msra.mxu0 %v985
        %1631 = vmatpush.msra.mxu0 %v979
        %1632 = vmatpush.msra.mxu0 %v973
        %1633 = vmatpush.msra.mxu0 %v967
        %1634 = vmatpush.msra.mxu0 %v961
        %1635 = vmatpush.msra.mxu0 %v955
        %1636 = vmatpush.msra.mxu0 %v949
        %1637 = vmatpush.msra.mxu0 %v943
        %1638 = vmatpush.msra.mxu0 %v937
        %1639 = vmatpush.msra.mxu0 %v931
        %1640 = vmatpush.msra.mxu0 %v925
        %1641 = vmatpush.msra.mxu0 %v919
        %1642 = vmatmul.f32.gmra.mxu0 %v910
        %v1643 = vpop.f32.mrf.mxu0
        %v1644 = vadd.f32 %v1215, %v1643
        %1645 = vdwg.mxu0
        %1646 = vmatpush.msra.mxu0 %v1105
        %1647 = vmatpush.msra.mxu0 %v1099
        %1648 = vmatpush.msra.mxu0 %v1093
        %1649 = vmatpush.msra.mxu0 %v1087
        %1650 = vmatpush.msra.mxu0 %v1081
        %1651 = vmatpush.msra.mxu0 %v1075
        %1652 = vmatpush.msra.mxu0 %v1069
        %1653 = vmatpush.msra.mxu0 %v1063
        %1654 = vmatpush.msra.mxu0 %v1057
        %1655 = vmatpush.msra.mxu0 %v1051
        %1656 = vmatpush.msra.mxu0 %v1045
        %1657 = vmatpush.msra.mxu0 %v1039
        %1658 = vmatpush.msra.mxu0 %v1033
        %1659 = vmatpush.msra.mxu0 %v1027
        %1660 = vmatpush.msra.mxu0 %v1021
        %1661 = vmatpush.msra.mxu0 %v1015
        %1662 = vmatmul.f32.gmra.mxu0 %v911
        %v1663 = vpop.f32.mrf.mxu0
        %v1664 = vadd.f32 %v1644, %v1663
        %1665 = vdwg.mxu0
        %1666 = vmatpush.msra.mxu0 %v1201
        %1667 = vmatpush.msra.mxu0 %v1195
        %1668 = vmatpush.msra.mxu0 %v1189
        %1669 = vmatpush.msra.mxu0 %v1183
        %1670 = vmatpush.msra.mxu0 %v1177
        %1671 = vmatpush.msra.mxu0 %v1171
        %1672 = vmatpush.msra.mxu0 %v1165
        %1673 = vmatpush.msra.mxu0 %v1159
        %1674 = vmatpush.msra.mxu0 %v1153
        %1675 = vmatpush.msra.mxu0 %v1147
        %1676 = vmatpush.msra.mxu0 %v1141
        %1677 = vmatpush.msra.mxu0 %v1135
        %1678 = vmatpush.msra.mxu0 %v1129
        %1679 = vmatpush.msra.mxu0 %v1123
        %1680 = vmatpush.msra.mxu0 %v1117
        %1681 = vmatpush.msra.mxu0 %v1111
        %1682 = vmatmul.f32.gmra.mxu0 %v912
        %v1683 = vpop.f32.mrf.mxu0
        %v1684 = vadd.f32 %v1664, %v1683
        %1685 = vdwg.mxu0
        %1686 = vmatpush.msra.mxu0 0.0
        %1687 = vmatpush.msra.mxu0 0.0
        %1688 = vmatpush.msra.mxu0 0.0
        %1689 = vmatpush.msra.mxu0 0.0
        %1690 = vmatpush.msra.mxu0 0.0
        %1691 = vmatpush.msra.mxu0 0.0
        %1692 = vmatpush.msra.mxu0 0.0
        %1693 = vmatpush.msra.mxu0 0.0
        %1694 = vmatpush.msra.mxu0 0.0
        %1695 = vmatpush.msra.mxu0 0.0
        %1696 = vmatpush.msra.mxu0 0.0
        %1697 = vmatpush.msra.mxu0 0.0
        %1698 = vmatpush.msra.mxu0 0.0
        %1699 = vmatpush.msra.mxu0 0.0
        %1700 = vmatpush.msra.mxu0 0.0
        %1701 = vmatpush.msra.mxu0 %v1207
        %1702 = vmatmul.f32.gmra.mxu0 %v1224
        %v1703 = vpop.f32.mrf.mxu0
        %v1704 = vadd.f32 %v1684, %v1703
        %1705 = vdwg.mxu0
        %v1706 = vmax.f32 %v1304, 0.0
        %v1707 = vmax.f32 %v1384, 0.0
        %v1708 = vmax.f32 %v1464, 0.0
        %v1709 = vmax.f32 %v1544, 0.0
        %v1710 = vmax.f32 %v1624, 0.0
        %v1711 = vmax.f32 %v1704, 0.0
        %v1712 = vld [vmem:[#allocation12] sm:$0xff]
        %v1713 = vld [vmem:[#allocation12 + $0x8] sm:$0xff]
        %v1714 = vld [vmem:[#allocation12 + $0x10] sm:$0xff]
        %v1715 = vld [vmem:[#allocation12 + $0x18] sm:$0xff]
        %v1716 = vld [vmem:[#allocation12 + $0x20] sm:$0xff]
        %v1717 = vld [vmem:[#allocation12 + $0x28] sm:$0xff]
        %v1718 = vld [vmem:[#allocation12 + $0x30] sm:$0xff]
        %v1719 = vld [vmem:[#allocation12 + $0x38] sm:$0xff]
        %v1720 = vld [vmem:[#allocation12 + $0x40] sm:$0xff]
        %v1721 = vld [vmem:[#allocation12 + $0x48] sm:$0xff]
        %v1722 = vld [vmem:[#allocation12 + $0x50] sm:$0xff]
        %v1723 = vld [vmem:[#allocation12 + $0x58] sm:$0xff]
        %v1724 = vld [vmem:[#allocation12 + $0x60] sm:$0xff]
        %v1725 = vld [vmem:[#allocation12 + $0x68] sm:$0xff]
        %v1726 = vld [vmem:[#allocation12 + $0x70] sm:$0xff]
        %v1727 = vld [vmem:[#allocation12 + $0x78] sm:$0xff]
        %v1728 = vld [vmem:[#allocation12 + $0x80] sm:$0xff]
        %v1729 = vld [vmem:[#allocation12 + $0x88] sm:$0xff]
        %v1730 = vld [vmem:[#allocation12 + $0x90] sm:$0xff]
        %v1731 = vld [vmem:[#allocation12 + $0x98] sm:$0xff]
        %v1732 = vld [vmem:[#allocation12 + $0xa0] sm:$0xff]
        %v1733 = vld [vmem:[#allocation12 + $0xa8] sm:$0xff]
        %v1734 = vld [vmem:[#allocation12 + $0xb0] sm:$0xff]
        %v1735 = vld [vmem:[#allocation12 + $0xb8] sm:$0xff]
        %v1736 = vld [vmem:[#allocation12 + $0xc0] sm:$0xff]
        %v1737 = vld [vmem:[#allocation12 + $0xc8] sm:$0xff]
        %v1738 = vld [vmem:[#allocation12 + $0xd0] sm:$0xff]
        %v1739 = vld [vmem:[#allocation12 + $0xd8] sm:$0xff]
        %v1740 = vld [vmem:[#allocation12 + $0xe0] sm:$0xff]
        %v1741 = vld [vmem:[#allocation12 + $0xe8] sm:$0xff]
        %v1742 = vld [vmem:[#allocation12 + $0xf0] sm:$0xff]
        %v1743 = vld [vmem:[#allocation12 + $0xf8] sm:$0xff]
        %v1744 = vld [vmem:[#allocation12 + $0x100] sm:$0xff]
        %v1745 = vld [vmem:[#allocation12 + $0x108] sm:$0xff]
        %v1746 = vld [vmem:[#allocation12 + $0x110] sm:$0xff]
        %v1747 = vld [vmem:[#allocation12 + $0x118] sm:$0xff]
        %v1748 = vld [vmem:[#allocation12 + $0x120] sm:$0xff]
        %v1749 = vld [vmem:[#allocation12 + $0x128] sm:$0xff]
        %v1750 = vld [vmem:[#allocation12 + $0x130] sm:$0xff]
        %v1751 = vld [vmem:[#allocation12 + $0x138] sm:$0xff]
        %v1752 = vld [vmem:[#allocation12 + $0x140] sm:$0xff]
        %v1753 = vld [vmem:[#allocation12 + $0x148] sm:$0xff]
        %v1754 = vld [vmem:[#allocation12 + $0x150] sm:$0xff]
        %v1755 = vld [vmem:[#allocation12 + $0x158] sm:$0xff]
        %v1756 = vld [vmem:[#allocation12 + $0x160] sm:$0xff]
        %v1757 = vld [vmem:[#allocation12 + $0x168] sm:$0xff]
        %v1758 = vld [vmem:[#allocation12 + $0x170] sm:$0xff]
        %v1759 = vld [vmem:[#allocation12 + $0x178] sm:$0xff]
        %v1760 = vld [vmem:[#allocation12 + $0x180] sm:$0xff]
        %v1761 = vld [vmem:[#allocation12 + $0x188] sm:$0xff]
        %v1762 = vld [vmem:[#allocation12 + $0x190] sm:$0xff]
        %v1763 = vld [vmem:[#allocation12 + $0x198] sm:$0xff]
        %v1764 = vld [vmem:[#allocation12 + $0x1a0] sm:$0xff]
        %v1765 = vld [vmem:[#allocation12 + $0x1a8] sm:$0xff]
        %v1766 = vld [vmem:[#allocation12 + $0x1b0] sm:$0xff]
        %v1767 = vld [vmem:[#allocation12 + $0x1b8] sm:$0xff]
        %v1768 = vld [vmem:[#allocation12 + $0x1c0] sm:$0xff]
        %v1769 = vld [vmem:[#allocation12 + $0x1c8] sm:$0xff]
        %v1770 = vld [vmem:[#allocation12 + $0x1d0] sm:$0xff]
        %v1771 = vld [vmem:[#allocation12 + $0x1d8] sm:$0xff]
        %v1772 = vld [vmem:[#allocation12 + $0x1e0] sm:$0xff]
        %v1773 = vld [vmem:[#allocation12 + $0x1e8] sm:$0xff]
        %v1774 = vld [vmem:[#allocation12 + $0x1f0] sm:$0xff]
        %v1775 = vld [vmem:[#allocation12 + $0x1f8] sm:$0xff]
        %v1776 = vld [vmem:[#allocation12 + $0x200] sm:$0xff]
        %v1777 = vld [vmem:[#allocation12 + $0x208] sm:$0xff]
        %v1778 = vld [vmem:[#allocation12 + $0x210] sm:$0xff]
        %v1779 = vld [vmem:[#allocation12 + $0x218] sm:$0xff]
        %v1780 = vld [vmem:[#allocation12 + $0x220] sm:$0xff]
        %v1781 = vld [vmem:[#allocation12 + $0x228] sm:$0xff]
        %v1782 = vld [vmem:[#allocation12 + $0x230] sm:$0xff]
        %v1783 = vld [vmem:[#allocation12 + $0x238] sm:$0xff]
        %v1784 = vld [vmem:[#allocation12 + $0x240] sm:$0xff]
        %v1785 = vld [vmem:[#allocation12 + $0x248] sm:$0xff]
        %v1786 = vld [vmem:[#allocation12 + $0x250] sm:$0xff]
        %v1787 = vld [vmem:[#allocation12 + $0x258] sm:$0xff]
        %v1788 = vld [vmem:[#allocation12 + $0x260] sm:$0xff]
        %v1789 = vld [vmem:[#allocation12 + $0x268] sm:$0xff]
        %v1790 = vld [vmem:[#allocation12 + $0x270] sm:$0xff]
        %v1791 = vld [vmem:[#allocation12 + $0x278] sm:$0xff]
        %v1792 = vld [vmem:[#allocation12 + $0x280] sm:$0xff]
        %v1793 = vld [vmem:[#allocation12 + $0x288] sm:$0xff]
        %v1794 = vld [vmem:[#allocation12 + $0x290] sm:$0xff]
        %v1795 = vld [vmem:[#allocation12 + $0x298] sm:$0xff]
        %v1796 = vld [vmem:[#allocation12 + $0x2a0] sm:$0xff]
        %v1797 = vld [vmem:[#allocation12 + $0x2a8] sm:$0xff]
        %v1798 = vld [vmem:[#allocation12 + $0x2b0] sm:$0xff]
        %v1799 = vld [vmem:[#allocation12 + $0x2b8] sm:$0xff]
        %v1800 = vld [vmem:[#allocation12 + $0x2c0] sm:$0xff]
        %v1801 = vld [vmem:[#allocation12 + $0x2c8] sm:$0xff]
        %v1802 = vld [vmem:[#allocation12 + $0x2d0] sm:$0xff]
        %v1803 = vld [vmem:[#allocation12 + $0x2d8] sm:$0xff]
        %v1804 = vld [vmem:[#allocation12 + $0x2e0] sm:$0xff]
        %v1805 = vld [vmem:[#allocation12 + $0x2e8] sm:$0xff]
        %v1806 = vld [vmem:[#allocation12 + $0x2f0] sm:$0xff]
        %v1807 = vld [vmem:[#allocation12 + $0x2f8] sm:$0xff]
        %v1808 = vld [vmem:[#allocation12 + $0x300] sm:$0xff]
        %v1809 = vld [vmem:[#allocation12 + $0x308] sm:$0xff]
        %v1810 = vld [vmem:[#allocation12 + $0x310] sm:$0xff]
        %v1811 = vld [vmem:[#allocation12 + $0x318] sm:$0xff]
        %v1812 = vld [vmem:[#allocation12 + $0x320] sm:$0xff]
        %v1813 = vld [vmem:[#allocation12 + $0x328] sm:$0xff]
        %v1814 = vld [vmem:[#allocation12 + $0x330] sm:$0xff]
        %v1815 = vld [vmem:[#allocation12 + $0x338] sm:$0xff]
        %v1816 = vld [vmem:[#allocation12 + $0x340] sm:$0xff]
        %v1817 = vld [vmem:[#allocation12 + $0x348] sm:$0xff]
        %v1818 = vld [vmem:[#allocation12 + $0x350] sm:$0xff]
        %v1819 = vld [vmem:[#allocation12 + $0x358] sm:$0xff]
        %v1820 = vld [vmem:[#allocation12 + $0x360] sm:$0xff]
        %v1821 = vld [vmem:[#allocation12 + $0x368] sm:$0xff]
        %v1822 = vld [vmem:[#allocation12 + $0x370] sm:$0xff]
        %v1823 = vld [vmem:[#allocation12 + $0x378] sm:$0xff]
        %v1824 = vld [vmem:[#allocation12 + $0x380] sm:$0xff]
        %v1825 = vld [vmem:[#allocation12 + $0x388] sm:$0xff]
        %v1826 = vld [vmem:[#allocation12 + $0x390] sm:$0xff]
        %v1827 = vld [vmem:[#allocation12 + $0x398] sm:$0xff]
        %v1828 = vld [vmem:[#allocation12 + $0x3a0] sm:$0xff]
        %v1829 = vld [vmem:[#allocation12 + $0x3a8] sm:$0xff]
        %v1830 = vld [vmem:[#allocation12 + $0x3b0] sm:$0xff]
        %v1831 = vld [vmem:[#allocation12 + $0x3b8] sm:$0xff]
        %v1832 = vld [vmem:[#allocation12 + $0x3c0] sm:$0xff]
        %v1833 = vld [vmem:[#allocation12 + $0x3c8] sm:$0xff]
        %v1834 = vld [vmem:[#allocation12 + $0x3d0] sm:$0xff]
        %v1835 = vld [vmem:[#allocation12 + $0x3d8] sm:$0xff]
        %v1836 = vld [vmem:[#allocation12 + $0x3e0] sm:$0xff]
        %v1837 = vld [vmem:[#allocation12 + $0x3e8] sm:$0xff]
        %v1838 = vld [vmem:[#allocation12 + $0x3f0] sm:$0xff]
        %v1839 = vld [vmem:[#allocation12 + $0x3f8] sm:$0xff]
        %v1840 = vld [vmem:[#allocation12 + $0x400] sm:$0xff]
        %v1841 = vld [vmem:[#allocation12 + $0x408] sm:$0xff]
        %v1842 = vld [vmem:[#allocation12 + $0x410] sm:$0xff]
        %v1843 = vld [vmem:[#allocation12 + $0x418] sm:$0xff]
        %v1844 = vld [vmem:[#allocation12 + $0x420] sm:$0xff]
        %v1845 = vld [vmem:[#allocation12 + $0x428] sm:$0xff]
        %v1846 = vld [vmem:[#allocation12 + $0x430] sm:$0xff]
        %v1847 = vld [vmem:[#allocation12 + $0x438] sm:$0xff]
        %v1848 = vld [vmem:[#allocation12 + $0x440] sm:$0xff]
        %v1849 = vld [vmem:[#allocation12 + $0x448] sm:$0xff]
        %v1850 = vld [vmem:[#allocation12 + $0x450] sm:$0xff]
        %v1851 = vld [vmem:[#allocation12 + $0x458] sm:$0xff]
        %v1852 = vld [vmem:[#allocation12 + $0x460] sm:$0xff]
        %v1853 = vld [vmem:[#allocation12 + $0x468] sm:$0xff]
        %v1854 = vld [vmem:[#allocation12 + $0x470] sm:$0xff]
        %v1855 = vld [vmem:[#allocation12 + $0x478] sm:$0xff]
        %v1856 = vld [vmem:[#allocation12 + $0x480] sm:$0xff]
        %v1857 = vld [vmem:[#allocation12 + $0x488] sm:$0xff]
        %v1858 = vld [vmem:[#allocation12 + $0x490] sm:$0xff]
        %v1859 = vld [vmem:[#allocation12 + $0x498] sm:$0xff]
        %v1860 = vld [vmem:[#allocation12 + $0x4a0] sm:$0xff]
        %v1861 = vld [vmem:[#allocation12 + $0x4a8] sm:$0xff]
        %v1862 = vld [vmem:[#allocation12 + $0x4b0] sm:$0xff]
        %v1863 = vld [vmem:[#allocation12 + $0x4b8] sm:$0xff]
        %v1864 = vld [vmem:[#allocation12 + $0x4c0] sm:$0xff]
        %v1865 = vld [vmem:[#allocation12 + $0x4c8] sm:$0xff]
        %v1866 = vld [vmem:[#allocation12 + $0x4d0] sm:$0xff]
        %v1867 = vld [vmem:[#allocation12 + $0x4d8] sm:$0xff]
        %v1868 = vld [vmem:[#allocation12 + $0x4e0] sm:$0xff]
        %v1869 = vld [vmem:[#allocation12 + $0x4e8] sm:$0xff]
        %v1870 = vld [vmem:[#allocation12 + $0x4f0] sm:$0xff]
        %v1871 = vld [vmem:[#allocation12 + $0x4f8] sm:$0xff]
        %v1872 = vld [vmem:[#allocation12 + $0x500] sm:$0xff]
        %v1873 = vld [vmem:[#allocation12 + $0x508] sm:$0xff]
        %v1874 = vld [vmem:[#allocation12 + $0x510] sm:$0xff]
        %v1875 = vld [vmem:[#allocation12 + $0x518] sm:$0xff]
        %v1876 = vld [vmem:[#allocation12 + $0x520] sm:$0xff]
        %v1877 = vld [vmem:[#allocation12 + $0x528] sm:$0xff]
        %v1878 = vld [vmem:[#allocation12 + $0x530] sm:$0xff]
        %v1879 = vld [vmem:[#allocation12 + $0x538] sm:$0xff]
        %v1880 = vld [vmem:[#allocation12 + $0x540] sm:$0xff]
        %v1881 = vld [vmem:[#allocation12 + $0x548] sm:$0xff]
        %v1882 = vld [vmem:[#allocation12 + $0x550] sm:$0xff]
        %v1883 = vld [vmem:[#allocation12 + $0x558] sm:$0xff]
        %v1884 = vld [vmem:[#allocation12 + $0x560] sm:$0xff]
        %v1885 = vld [vmem:[#allocation12 + $0x568] sm:$0xff]
        %v1886 = vld [vmem:[#allocation12 + $0x570] sm:$0xff]
        %v1887 = vld [vmem:[#allocation12 + $0x578] sm:$0xff]
        %v1888 = vld [vmem:[#allocation12 + $0x580] sm:$0xff]
        %v1889 = vld [vmem:[#allocation12 + $0x588] sm:$0xff]
        %v1890 = vld [vmem:[#allocation12 + $0x590] sm:$0xff]
        %v1891 = vld [vmem:[#allocation12 + $0x598] sm:$0xff]
        %v1892 = vld [vmem:[#allocation12 + $0x5a0] sm:$0xff]
        %v1893 = vld [vmem:[#allocation12 + $0x5a8] sm:$0xff]
        %v1894 = vld [vmem:[#allocation12 + $0x5b0] sm:$0xff]
        %v1895 = vld [vmem:[#allocation12 + $0x5b8] sm:$0xff]
        %v1896 = vld [vmem:[#allocation12 + $0x5c0] sm:$0xff]
        %v1897 = vld [vmem:[#allocation12 + $0x5c8] sm:$0xff]
        %v1898 = vld [vmem:[#allocation12 + $0x5d0] sm:$0xff]
        %v1899 = vld [vmem:[#allocation12 + $0x5d8] sm:$0xff]
        %v1900 = vld [vmem:[#allocation12 + $0x5e0] sm:$0xff]
        %v1901 = vld [vmem:[#allocation12 + $0x5e8] sm:$0xff]
        %v1902 = vld [vmem:[#allocation12 + $0x5f0] sm:$0xff]
        %v1903 = vld [vmem:[#allocation12 + $0x5f8] sm:$0xff]
        %v1904 = vld [vmem:[#allocation12 + $0x600] sm:$0xff]
        %v1905 = vld [vmem:[#allocation12 + $0x608] sm:$0xff]
        %v1906 = vld [vmem:[#allocation12 + $0x610] sm:$0xff]
        %v1907 = vld [vmem:[#allocation12 + $0x618] sm:$0xff]
        %v1908 = vld [vmem:[#allocation12 + $0x620] sm:$0xff]
        %v1909 = vld [vmem:[#allocation12 + $0x628] sm:$0xff]
        %v1910 = vld [vmem:[#allocation12 + $0x630] sm:$0xff]
        %v1911 = vld [vmem:[#allocation12 + $0x638] sm:$0xff]
        %v1912 = vld [vmem:[#allocation12 + $0x640] sm:$0xff]
        %v1913 = vld [vmem:[#allocation12 + $0x648] sm:$0xff]
        %v1914 = vld [vmem:[#allocation12 + $0x650] sm:$0xff]
        %v1915 = vld [vmem:[#allocation12 + $0x658] sm:$0xff]
        %v1916 = vld [vmem:[#allocation12 + $0x660] sm:$0xff]
        %v1917 = vld [vmem:[#allocation12 + $0x668] sm:$0xff]
        %v1918 = vld [vmem:[#allocation12 + $0x670] sm:$0xff]
        %v1919 = vld [vmem:[#allocation12 + $0x678] sm:$0xff]
        %v1920 = vld [vmem:[#allocation12 + $0x680] sm:$0xff]
        %v1921 = vld [vmem:[#allocation12 + $0x688] sm:$0xff]
        %v1922 = vld [vmem:[#allocation12 + $0x690] sm:$0xff]
        %v1923 = vld [vmem:[#allocation12 + $0x698] sm:$0xff]
        %v1924 = vld [vmem:[#allocation12 + $0x6a0] sm:$0xff]
        %v1925 = vld [vmem:[#allocation12 + $0x6a8] sm:$0xff]
        %v1926 = vld [vmem:[#allocation12 + $0x6b0] sm:$0xff]
        %v1927 = vld [vmem:[#allocation12 + $0x6b8] sm:$0xff]
        %v1928 = vld [vmem:[#allocation12 + $0x6c0] sm:$0xff]
        %v1929 = vld [vmem:[#allocation12 + $0x6c8] sm:$0xff]
        %v1930 = vld [vmem:[#allocation12 + $0x6d0] sm:$0xff]
        %v1931 = vld [vmem:[#allocation12 + $0x6d8] sm:$0xff]
        %v1932 = vld [vmem:[#allocation12 + $0x6e0] sm:$0xff]
        %v1933 = vld [vmem:[#allocation12 + $0x6e8] sm:$0xff]
        %v1934 = vld [vmem:[#allocation12 + $0x6f0] sm:$0xff]
        %v1935 = vld [vmem:[#allocation12 + $0x6f8] sm:$0xff]
        %v1936 = vld [vmem:[#allocation12 + $0x700] sm:$0xff]
        %v1937 = vld [vmem:[#allocation12 + $0x708] sm:$0xff]
        %v1938 = vld [vmem:[#allocation12 + $0x710] sm:$0xff]
        %v1939 = vld [vmem:[#allocation12 + $0x718] sm:$0xff]
        %v1940 = vld [vmem:[#allocation12 + $0x720] sm:$0xff]
        %v1941 = vld [vmem:[#allocation12 + $0x728] sm:$0xff]
        %v1942 = vld [vmem:[#allocation12 + $0x730] sm:$0xff]
        %v1943 = vld [vmem:[#allocation12 + $0x738] sm:$0xff]
        %v1944 = vld [vmem:[#allocation12 + $0x740] sm:$0xff]
        %v1945 = vld [vmem:[#allocation12 + $0x748] sm:$0xff]
        %v1946 = vld [vmem:[#allocation12 + $0x750] sm:$0xff]
        %v1947 = vld [vmem:[#allocation12 + $0x758] sm:$0xff]
        %v1948 = vld [vmem:[#allocation12 + $0x760] sm:$0xff]
        %v1949 = vld [vmem:[#allocation12 + $0x768] sm:$0xff]
        %v1950 = vld [vmem:[#allocation12 + $0x770] sm:$0xff]
        %v1951 = vld [vmem:[#allocation12 + $0x778] sm:$0xff]
        %v1952 = vld [vmem:[#allocation12 + $0x780] sm:$0xff]
        %v1953 = vld [vmem:[#allocation12 + $0x788] sm:$0xff]
        %v1954 = vld [vmem:[#allocation12 + $0x790] sm:$0xff]
        %v1955 = vld [vmem:[#allocation12 + $0x798] sm:$0xff]
        %v1956 = vld [vmem:[#allocation12 + $0x7a0] sm:$0xff]
        %v1957 = vld [vmem:[#allocation12 + $0x7a8] sm:$0xff]
        %v1958 = vld [vmem:[#allocation12 + $0x7b0] sm:$0xff]
        %v1959 = vld [vmem:[#allocation12 + $0x7b8] sm:$0xff]
        %v1960 = vld [vmem:[#allocation12 + $0x7c0] sm:$0xff]
        %v1961 = vld [vmem:[#allocation12 + $0x7c8] sm:$0xff]
        %v1962 = vld [vmem:[#allocation12 + $0x7d0] sm:$0xff]
        %v1963 = vld [vmem:[#allocation12 + $0x7d8] sm:$0xff]
        %v1964 = vld [vmem:[#allocation12 + $0x7e0] sm:$0xff]
        %v1965 = vld [vmem:[#allocation12 + $0x7e8] sm:$0xff]
        %v1966 = vld [vmem:[#allocation12 + $0x7f0] sm:$0xff]
        %v1967 = vld [vmem:[#allocation12 + $0x7f8] sm:$0xff]
        %v1968 = vld [vmem:[#allocation12 + $0x800] sm:$0xff]
        %v1969 = vld [vmem:[#allocation12 + $0x808] sm:$0xff]
        %v1970 = vld [vmem:[#allocation12 + $0x810] sm:$0xff]
        %v1971 = vld [vmem:[#allocation12 + $0x818] sm:$0xff]
        %v1972 = vld [vmem:[#allocation12 + $0x820] sm:$0xff]
        %v1973 = vld [vmem:[#allocation12 + $0x828] sm:$0xff]
        %v1974 = vld [vmem:[#allocation12 + $0x830] sm:$0xff]
        %v1975 = vld [vmem:[#allocation12 + $0x838] sm:$0xff]
        %v1976 = vld [vmem:[#allocation12 + $0x840] sm:$0xff]
        %v1977 = vld [vmem:[#allocation12 + $0x848] sm:$0xff]
        %v1978 = vld [vmem:[#allocation12 + $0x850] sm:$0xff]
        %v1979 = vld [vmem:[#allocation12 + $0x858] sm:$0xff]
        %v1980 = vld [vmem:[#allocation12 + $0x860] sm:$0xff]
        %v1981 = vld [vmem:[#allocation12 + $0x868] sm:$0xff]
        %v1982 = vld [vmem:[#allocation12 + $0x870] sm:$0xff]
        %v1983 = vld [vmem:[#allocation12 + $0x878] sm:$0xff]
        %v1984 = vld [vmem:[#allocation12 + $0x880] sm:$0xff]
        %v1985 = vld [vmem:[#allocation12 + $0x888] sm:$0xff]
        %v1986 = vld [vmem:[#allocation12 + $0x890] sm:$0xff]
        %v1987 = vld [vmem:[#allocation12 + $0x898] sm:$0xff]
        %v1988 = vld [vmem:[#allocation12 + $0x8a0] sm:$0xff]
        %v1989 = vld [vmem:[#allocation12 + $0x8a8] sm:$0xff]
        %v1990 = vld [vmem:[#allocation12 + $0x8b0] sm:$0xff]
        %v1991 = vld [vmem:[#allocation12 + $0x8b8] sm:$0xff]
        %v1992 = vld [vmem:[#allocation12 + $0x8c0] sm:$0xff]
        %v1993 = vld [vmem:[#allocation12 + $0x8c8] sm:$0xff]
        %v1994 = vld [vmem:[#allocation12 + $0x8d0] sm:$0xff]
        %v1995 = vld [vmem:[#allocation12 + $0x8d8] sm:$0xff]
        %v1996 = vld [vmem:[#allocation12 + $0x8e0] sm:$0xff]
        %v1997 = vld [vmem:[#allocation12 + $0x8e8] sm:$0xff]
        %v1998 = vld [vmem:[#allocation12 + $0x8f0] sm:$0xff]
        %v1999 = vld [vmem:[#allocation12 + $0x8f8] sm:$0xff]
        %v2000 = vld [vmem:[#allocation12 + $0x900] sm:$0xff]
        %v2001 = vld [vmem:[#allocation12 + $0x908] sm:$0xff]
        %v2002 = vld [vmem:[#allocation12 + $0x910] sm:$0xff]
        %v2003 = vld [vmem:[#allocation12 + $0x918] sm:$0xff]
        %v2004 = vld [vmem:[#allocation12 + $0x920] sm:$0xff]
        %v2005 = vld [vmem:[#allocation12 + $0x928] sm:$0xff]
        %v2006 = vld [vmem:[#allocation12 + $0x930] sm:$0xff]
        %v2007 = vld [vmem:[#allocation12 + $0x938] sm:$0xff]
        %v2008 = vld [vmem:[#allocation12 + $0x940] sm:$0xff]
        %v2009 = vld [vmem:[#allocation12 + $0x948] sm:$0xff]
        %v2010 = vld [vmem:[#allocation12 + $0x950] sm:$0xff]
        %v2011 = vld [vmem:[#allocation12 + $0x958] sm:$0xff]
        %v2012 = vld [vmem:[#allocation12 + $0x960] sm:$0xff]
        %v2013 = vld [vmem:[#allocation12 + $0x968] sm:$0xff]
        %v2014 = vld [vmem:[#allocation12 + $0x970] sm:$0xff]
        %v2015 = vld [vmem:[#allocation12 + $0x978] sm:$0xff]
        %v2016 = vld [vmem:[#allocation12 + $0x980] sm:$0xff]
        %v2017 = vld [vmem:[#allocation12 + $0x988] sm:$0xff]
        %v2018 = vld [vmem:[#allocation12 + $0x990] sm:$0xff]
        %v2019 = vld [vmem:[#allocation12 + $0x998] sm:$0xff]
        %v2020 = vld [vmem:[#allocation12 + $0x9a0] sm:$0xff]
        %v2021 = vld [vmem:[#allocation12 + $0x9a8] sm:$0xff]
        %v2022 = vld [vmem:[#allocation12 + $0x9b0] sm:$0xff]
        %v2023 = vld [vmem:[#allocation12 + $0x9b8] sm:$0xff]
        %v2024 = vld [vmem:[#allocation12 + $0x9c0] sm:$0xff]
        %v2025 = vld [vmem:[#allocation12 + $0x9c8] sm:$0xff]
        %v2026 = vld [vmem:[#allocation12 + $0x9d0] sm:$0xff]
        %v2027 = vld [vmem:[#allocation12 + $0x9d8] sm:$0xff]
        %v2028 = vld [vmem:[#allocation12 + $0x9e0] sm:$0xff]
        %v2029 = vld [vmem:[#allocation12 + $0x9e8] sm:$0xff]
        %v2030 = vld [vmem:[#allocation12 + $0x9f0] sm:$0xff]
        %v2031 = vld [vmem:[#allocation12 + $0x9f8] sm:$0xff]
        %v2032 = vld [vmem:[#allocation12 + $0xa00] sm:$0xff]
        %v2033 = vld [vmem:[#allocation12 + $0xa08] sm:$0xff]
        %v2034 = vld [vmem:[#allocation12 + $0xa10] sm:$0xff]
        %v2035 = vld [vmem:[#allocation12 + $0xa18] sm:$0xff]
        %v2036 = vld [vmem:[#allocation12 + $0xa20] sm:$0xff]
        %v2037 = vld [vmem:[#allocation12 + $0xa28] sm:$0xff]
        %v2038 = vld [vmem:[#allocation12 + $0xa30] sm:$0xff]
        %v2039 = vld [vmem:[#allocation12 + $0xa38] sm:$0xff]
        %v2040 = vld [vmem:[#allocation12 + $0xa40] sm:$0xff]
        %v2041 = vld [vmem:[#allocation12 + $0xa48] sm:$0xff]
        %v2042 = vld [vmem:[#allocation12 + $0xa50] sm:$0xff]
        %v2043 = vld [vmem:[#allocation12 + $0xa58] sm:$0xff]
        %v2044 = vld [vmem:[#allocation12 + $0xa60] sm:$0xff]
        %v2045 = vld [vmem:[#allocation12 + $0xa68] sm:$0xff]
        %v2046 = vld [vmem:[#allocation12 + $0xa70] sm:$0xff]
        %v2047 = vld [vmem:[#allocation12 + $0xa78] sm:$0xff]
        %v2048 = vld [vmem:[#allocation12 + $0xa80] sm:$0xff]
        %v2049 = vld [vmem:[#allocation12 + $0xa88] sm:$0xff]
        %v2050 = vld [vmem:[#allocation12 + $0xa90] sm:$0xff]
        %v2051 = vld [vmem:[#allocation12 + $0xa98] sm:$0xff]
        %v2052 = vld [vmem:[#allocation12 + $0xaa0] sm:$0xff]
        %v2053 = vld [vmem:[#allocation12 + $0xaa8] sm:$0xff]
        %v2054 = vld [vmem:[#allocation12 + $0xab0] sm:$0xff]
        %v2055 = vld [vmem:[#allocation12 + $0xab8] sm:$0xff]
        %v2056 = vld [vmem:[#allocation12 + $0xac0] sm:$0xff]
        %v2057 = vld [vmem:[#allocation12 + $0xac8] sm:$0xff]
        %v2058 = vld [vmem:[#allocation12 + $0xad0] sm:$0xff]
        %v2059 = vld [vmem:[#allocation12 + $0xad8] sm:$0xff]
        %v2060 = vld [vmem:[#allocation12 + $0xae0] sm:$0xff]
        %v2061 = vld [vmem:[#allocation12 + $0xae8] sm:$0xff]
        %v2062 = vld [vmem:[#allocation12 + $0xaf0] sm:$0xff]
        %v2063 = vld [vmem:[#allocation12 + $0xaf8] sm:$0xff]
        %v2064 = vld [vmem:[#allocation12 + $0xb00] sm:$0xff]
        %v2065 = vld [vmem:[#allocation12 + $0xb08] sm:$0xff]
        %v2066 = vld [vmem:[#allocation12 + $0xb10] sm:$0xff]
        %v2067 = vld [vmem:[#allocation12 + $0xb18] sm:$0xff]
        %v2068 = vld [vmem:[#allocation12 + $0xb20] sm:$0xff]
        %v2069 = vld [vmem:[#allocation12 + $0xb28] sm:$0xff]
        %v2070 = vld [vmem:[#allocation12 + $0xb30] sm:$0xff]
        %v2071 = vld [vmem:[#allocation12 + $0xb38] sm:$0xff]
        %v2072 = vld [vmem:[#allocation12 + $0xb40] sm:$0xff]
        %v2073 = vld [vmem:[#allocation12 + $0xb48] sm:$0xff]
        %v2074 = vld [vmem:[#allocation12 + $0xb50] sm:$0xff]
        %v2075 = vld [vmem:[#allocation12 + $0xb58] sm:$0xff]
        %v2076 = vld [vmem:[#allocation12 + $0xb60] sm:$0xff]
        %v2077 = vld [vmem:[#allocation12 + $0xb68] sm:$0xff]
        %v2078 = vld [vmem:[#allocation12 + $0xb70] sm:$0xff]
        %v2079 = vld [vmem:[#allocation12 + $0xb78] sm:$0xff]
        %v2080 = vld [vmem:[#allocation12 + $0xb80] sm:$0xff]
        %v2081 = vld [vmem:[#allocation12 + $0xb88] sm:$0xff]
        %v2082 = vld [vmem:[#allocation12 + $0xb90] sm:$0xff]
        %v2083 = vld [vmem:[#allocation12 + $0xb98] sm:$0xff]
        %v2084 = vld [vmem:[#allocation12 + $0xba0] sm:$0xff]
        %v2085 = vld [vmem:[#allocation12 + $0xba8] sm:$0xff]
        %v2086 = vld [vmem:[#allocation12 + $0xbb0] sm:$0xff]
        %v2087 = vld [vmem:[#allocation12 + $0xbb8] sm:$0xff]
        %v2088 = vld [vmem:[#allocation12 + $0xbc0] sm:$0xff]
        %v2089 = vld [vmem:[#allocation12 + $0xbc8] sm:$0xff]
        %v2090 = vld [vmem:[#allocation12 + $0xbd0] sm:$0xff]
        %v2091 = vld [vmem:[#allocation12 + $0xbd8] sm:$0xff]
        %v2092 = vld [vmem:[#allocation12 + $0xbe0] sm:$0xff]
        %v2093 = vld [vmem:[#allocation12 + $0xbe8] sm:$0xff]
        %v2094 = vld [vmem:[#allocation12 + $0xbf0] sm:$0xff]
        %v2095 = vld [vmem:[#allocation12 + $0xbf8] sm:$0xff]
        %v2096 = vld [vmem:[#allocation12 + $0xc00] sm:$0xff]
        %v2097 = vld [vmem:[#allocation12 + $0xc08] sm:$0xff]
        %v2098 = vld [vmem:[#allocation12 + $0xc10] sm:$0xff]
        %v2099 = vld [vmem:[#allocation12 + $0xc18] sm:$0xff]
        %v2100 = vld [vmem:[#allocation12 + $0xc20] sm:$0xff]
        %v2101 = vld [vmem:[#allocation12 + $0xc28] sm:$0xff]
        %v2102 = vld [vmem:[#allocation12 + $0xc30] sm:$0xff]
        %v2103 = vld [vmem:[#allocation12 + $0xc38] sm:$0xff]
        %v2104 = vld [vmem:[#allocation12 + $0xc40] sm:$0xff]
        %v2105 = vld [vmem:[#allocation12 + $0xc48] sm:$0xff]
        %v2106 = vld [vmem:[#allocation12 + $0xc50] sm:$0xff]
        %v2107 = vld [vmem:[#allocation12 + $0xc58] sm:$0xff]
        %v2108 = vld [vmem:[#allocation12 + $0xc60] sm:$0xff]
        %v2109 = vld [vmem:[#allocation12 + $0xc68] sm:$0xff]
        %v2110 = vld [vmem:[#allocation12 + $0xc70] sm:$0xff]
        %v2111 = vld [vmem:[#allocation12 + $0xc78] sm:$0xff]
        %v2112 = vld [vmem:[#allocation12 + $0xc80] sm:$0xff]
        %v2113 = vld [vmem:[#allocation12 + $0xc88] sm:$0xff]
        %v2114 = vld [vmem:[#allocation12 + $0xc90] sm:$0xff]
        %v2115 = vld [vmem:[#allocation12 + $0xc98] sm:$0xff]
        %v2116 = vld [vmem:[#allocation12 + $0xca0] sm:$0xff]
        %v2117 = vld [vmem:[#allocation12 + $0xca8] sm:$0xff]
        %v2118 = vld [vmem:[#allocation12 + $0xcb0] sm:$0xff]
        %v2119 = vld [vmem:[#allocation12 + $0xcb8] sm:$0xff]
        %v2120 = vld [vmem:[#allocation12 + $0xcc0] sm:$0xff]
        %v2121 = vld [vmem:[#allocation12 + $0xcc8] sm:$0xff]
        %v2122 = vld [vmem:[#allocation12 + $0xcd0] sm:$0xff]
        %v2123 = vld [vmem:[#allocation12 + $0xcd8] sm:$0xff]
        %v2124 = vld [vmem:[#allocation12 + $0xce0] sm:$0xff]
        %v2125 = vld [vmem:[#allocation12 + $0xce8] sm:$0xff]
        %v2126 = vld [vmem:[#allocation12 + $0xcf0] sm:$0xff]
        %v2127 = vld [vmem:[#allocation12 + $0xcf8] sm:$0xff]
        %v2128 = vld [vmem:[#allocation12 + $0xd00] sm:$0xff]
        %v2129 = vld [vmem:[#allocation12 + $0xd08] sm:$0xff]
        %v2130 = vld [vmem:[#allocation12 + $0xd10] sm:$0xff]
        %v2131 = vld [vmem:[#allocation12 + $0xd18] sm:$0xff]
        %v2132 = vld [vmem:[#allocation12 + $0xd20] sm:$0xff]
        %v2133 = vld [vmem:[#allocation12 + $0xd28] sm:$0xff]
        %v2134 = vld [vmem:[#allocation12 + $0xd30] sm:$0xff]
        %v2135 = vld [vmem:[#allocation12 + $0xd38] sm:$0xff]
        %v2136 = vld [vmem:[#allocation12 + $0xd40] sm:$0xff]
        %v2137 = vld [vmem:[#allocation12 + $0xd48] sm:$0xff]
        %v2138 = vld [vmem:[#allocation12 + $0xd50] sm:$0xff]
        %v2139 = vld [vmem:[#allocation12 + $0xd58] sm:$0xff]
        %v2140 = vld [vmem:[#allocation12 + $0xd60] sm:$0xff]
        %v2141 = vld [vmem:[#allocation12 + $0xd68] sm:$0xff]
        %v2142 = vld [vmem:[#allocation12 + $0xd70] sm:$0xff]
        %v2143 = vld [vmem:[#allocation12 + $0xd78] sm:$0xff]
        %v2144 = vld [vmem:[#allocation12 + $0xd80] sm:$0xff]
        %v2145 = vld [vmem:[#allocation12 + $0xd88] sm:$0xff]
        %v2146 = vld [vmem:[#allocation12 + $0xd90] sm:$0xff]
        %v2147 = vld [vmem:[#allocation12 + $0xd98] sm:$0xff]
        %v2148 = vld [vmem:[#allocation12 + $0xda0] sm:$0xff]
        %v2149 = vld [vmem:[#allocation12 + $0xda8] sm:$0xff]
        %v2150 = vld [vmem:[#allocation12 + $0xdb0] sm:$0xff]
        %v2151 = vld [vmem:[#allocation12 + $0xdb8] sm:$0xff]
        %v2152 = vld [vmem:[#allocation12 + $0xdc0] sm:$0xff]
        %v2153 = vld [vmem:[#allocation12 + $0xdc8] sm:$0xff]
        %v2154 = vld [vmem:[#allocation12 + $0xdd0] sm:$0xff]
        %v2155 = vld [vmem:[#allocation12 + $0xdd8] sm:$0xff]
        %v2156 = vld [vmem:[#allocation12 + $0xde0] sm:$0xff]
        %v2157 = vld [vmem:[#allocation12 + $0xde8] sm:$0xff]
        %v2158 = vld [vmem:[#allocation12 + $0xdf0] sm:$0xff]
        %v2159 = vld [vmem:[#allocation12 + $0xdf8] sm:$0xff]
        %v2160 = vld [vmem:[#allocation12 + $0xe00] sm:$0xff]
        %v2161 = vld [vmem:[#allocation12 + $0xe08] sm:$0xff]
        %v2162 = vld [vmem:[#allocation12 + $0xe10] sm:$0xff]
        %v2163 = vld [vmem:[#allocation12 + $0xe18] sm:$0xff]
        %v2164 = vld [vmem:[#allocation12 + $0xe20] sm:$0xff]
        %v2165 = vld [vmem:[#allocation12 + $0xe28] sm:$0xff]
        %v2166 = vld [vmem:[#allocation12 + $0xe30] sm:$0xff]
        %v2167 = vld [vmem:[#allocation12 + $0xe38] sm:$0xff]
        %v2168 = vld [vmem:[#allocation12 + $0xe40] sm:$0xff]
        %v2169 = vld [vmem:[#allocation12 + $0xe48] sm:$0xff]
        %v2170 = vld [vmem:[#allocation12 + $0xe50] sm:$0xff]
        %v2171 = vld [vmem:[#allocation12 + $0xe58] sm:$0xff]
        %v2172 = vld [vmem:[#allocation12 + $0xe60] sm:$0xff]
        %v2173 = vld [vmem:[#allocation12 + $0xe68] sm:$0xff]
        %v2174 = vld [vmem:[#allocation12 + $0xe70] sm:$0xff]
        %v2175 = vld [vmem:[#allocation12 + $0xe78] sm:$0xff]
        %v2176 = vld [vmem:[#allocation12 + $0xe80] sm:$0xff]
        %v2177 = vld [vmem:[#allocation12 + $0xe88] sm:$0xff]
        %v2178 = vld [vmem:[#allocation12 + $0xe90] sm:$0xff]
        %v2179 = vld [vmem:[#allocation12 + $0xe98] sm:$0xff]
        %v2180 = vld [vmem:[#allocation12 + $0xea0] sm:$0xff]
        %v2181 = vld [vmem:[#allocation12 + $0xea8] sm:$0xff]
        %v2182 = vld [vmem:[#allocation12 + $0xeb0] sm:$0xff]
        %v2183 = vld [vmem:[#allocation12 + $0xeb8] sm:$0xff]
        %v2184 = vld [vmem:[#allocation12 + $0xec0] sm:$0xff]
        %v2185 = vld [vmem:[#allocation12 + $0xec8] sm:$0xff]
        %v2186 = vld [vmem:[#allocation12 + $0xed0] sm:$0xff]
        %v2187 = vld [vmem:[#allocation12 + $0xed8] sm:$0xff]
        %v2188 = vld [vmem:[#allocation12 + $0xee0] sm:$0xff]
        %v2189 = vld [vmem:[#allocation12 + $0xee8] sm:$0xff]
        %v2190 = vld [vmem:[#allocation12 + $0xef0] sm:$0xff]
        %v2191 = vld [vmem:[#allocation12 + $0xef8] sm:$0xff]
        %v2192 = vld [vmem:[#allocation12 + $0xf00] sm:$0xff]
        %v2193 = vld [vmem:[#allocation12 + $0xf08] sm:$0xff]
        %v2194 = vld [vmem:[#allocation12 + $0xf10] sm:$0xff]
        %v2195 = vld [vmem:[#allocation12 + $0xf18] sm:$0xff]
        %v2196 = vld [vmem:[#allocation12 + $0xf20] sm:$0xff]
        %v2197 = vld [vmem:[#allocation12 + $0xf28] sm:$0xff]
        %v2198 = vld [vmem:[#allocation12 + $0xf30] sm:$0xff]
        %v2199 = vld [vmem:[#allocation12 + $0xf38] sm:$0xff]
        %v2200 = vld [vmem:[#allocation12 + $0xf40] sm:$0xff]
        %v2201 = vld [vmem:[#allocation12 + $0xf48] sm:$0xff]
        %v2202 = vld [vmem:[#allocation12 + $0xf50] sm:$0xff]
        %v2203 = vld [vmem:[#allocation12 + $0xf58] sm:$0xff]
        %v2204 = vld [vmem:[#allocation12 + $0xf60] sm:$0xff]
        %v2205 = vld [vmem:[#allocation12 + $0xf68] sm:$0xff]
        %v2206 = vld [vmem:[#allocation12 + $0xf70] sm:$0xff]
        %v2207 = vld [vmem:[#allocation12 + $0xf78] sm:$0xff]
        %v2208 = vld [vmem:[#allocation12 + $0xf80] sm:$0xff]
        %v2209 = vld [vmem:[#allocation12 + $0xf88] sm:$0xff]
        %v2210 = vld [vmem:[#allocation12 + $0xf90] sm:$0xff]
        %v2211 = vld [vmem:[#allocation12 + $0xf98] sm:$0xff]
        %v2212 = vld [vmem:[#allocation12 + $0xfa0] sm:$0xff]
        %v2213 = vld [vmem:[#allocation12 + $0xfa8] sm:$0xff]
        %v2214 = vld [vmem:[#allocation12 + $0xfb0] sm:$0xff]
        %v2215 = vld [vmem:[#allocation12 + $0xfb8] sm:$0xff]
        %v2216 = vld [vmem:[#allocation12 + $0xfc0] sm:$0xf]
        %v2217 = vld [vmem:[#allocation12 + $0xfc8] sm:$0xf]
        %v2218 = vld [vmem:[#allocation12 + $0xfd0] sm:$0xf]
        %v2219 = vld [vmem:[#allocation12 + $0xfd8] sm:$0xf]
        %v2220 = vld [vmem:[#allocation12 + $0xfe0] sm:$0xf]
        %v2221 = vld [vmem:[#allocation12 + $0xfe8] sm:$0xf]
        %v2222 = vld [vmem:[#allocation13] sm:$0x3f]
        %v2224 = vperm.slane %v2222, 0
        %v2225 = vperm.slane %v2222, 1
        %v2226 = vperm.slane %v2222, 2
        %v2227 = vperm.slane %v2222, 3
        %v2228 = vperm.slane %v2222, 4
        %v2229 = vperm.slane %v2222, 5
        %vm2236 = vcmask 293888
        %v2238 = vsel %vm2236, %v1711, 0
        %vm2240 = vcmask 1043456
        %v2242 = vsel %vm2240, %v2216, 0
        %v2245 = vsel %vm2240, %v2217, 0
        %v2248 = vsel %vm2240, %v2218, 0
        %v2251 = vsel %vm2240, %v2219, 0
        %v2254 = vsel %vm2240, %v2220, 0
        %v2257 = vsel %vm2240, %v2221, 0
        %2259 = vmatpush.msra.mxu0 %v1802
        %2260 = vmatpush.msra.mxu0 %v1796
        %2261 = vmatpush.msra.mxu0 %v1790
        %2262 = vmatpush.msra.mxu0 %v1784
        %2263 = vmatpush.msra.mxu0 %v1778
        %2264 = vmatpush.msra.mxu0 %v1772
        %2265 = vmatpush.msra.mxu0 %v1766
        %2266 = vmatpush.msra.mxu0 %v1760
        %2267 = vmatpush.msra.mxu0 %v1754
        %2268 = vmatpush.msra.mxu0 %v1748
        %2269 = vmatpush.msra.mxu0 %v1742
        %2270 = vmatpush.msra.mxu0 %v1736
        %2271 = vmatpush.msra.mxu0 %v1730
        %2272 = vmatpush.msra.mxu0 %v1724
        %2273 = vmatpush.msra.mxu0 %v1718
        %2274 = vmatpush.msra.mxu0 %v1712
        %2275 = vmatmul.f32.gmra.mxu0 %v1706
        %v2276 = vpop.f32.mrf.mxu0
        %v2277 = vadd.f32 %v2224, %v2276
        %2278 = vdwg.mxu0
        %2279 = vmatpush.msra.mxu0 %v1898
        %2280 = vmatpush.msra.mxu0 %v1892
        %2281 = vmatpush.msra.mxu0 %v1886
        %2282 = vmatpush.msra.mxu0 %v1880
        %2283 = vmatpush.msra.mxu0 %v1874
        %2284 = vmatpush.msra.mxu0 %v1868
        %2285 = vmatpush.msra.mxu0 %v1862
        %2286 = vmatpush.msra.mxu0 %v1856
        %2287 = vmatpush.msra.mxu0 %v1850
        %2288 = vmatpush.msra.mxu0 %v1844
        %2289 = vmatpush.msra.mxu0 %v1838
        %2290 = vmatpush.msra.mxu0 %v1832
        %2291 = vmatpush.msra.mxu0 %v1826
        %2292 = vmatpush.msra.mxu0 %v1820
        %2293 = vmatpush.msra.mxu0 %v1814
        %2294 = vmatpush.msra.mxu0 %v1808
        %2295 = vmatmul.f32.gmra.mxu0 %v1707
        %v2296 = vpop.f32.mrf.mxu0
        %v2297 = vadd.f32 %v2277, %v2296
        %2298 = vdwg.mxu0
        %2299 = vmatpush.msra.mxu0 %v1994
        %2300 = vmatpush.msra.mxu0 %v1988
        %2301 = vmatpush.msra.mxu0 %v1982
        %2302 = vmatpush.msra.mxu0 %v1976
        %2303 = vmatpush.msra.mxu0 %v1970
        %2304 = vmatpush.msra.mxu0 %v1964
        %2305 = vmatpush.msra.mxu0 %v1958
        %2306 = vmatpush.msra.mxu0 %v1952
        %2307 = vmatpush.msra.mxu0 %v1946
        %2308 = vmatpush.msra.mxu0 %v1940
        %2309 = vmatpush.msra.mxu0 %v1934
        %2310 = vmatpush.msra.mxu0 %v1928
        %2311 = vmatpush.msra.mxu0 %v1922
        %2312 = vmatpush.msra.mxu0 %v1916
        %2313 = vmatpush.msra.mxu0 %v1910
        %2314 = vmatpush.msra.mxu0 %v1904
        %2315 = vmatmul.f32.gmra.mxu0 %v1708
        %v2316 = vpop.f32.mrf.mxu0
        %v2317 = vadd.f32 %v2297, %v2316
        %2318 = vdwg.mxu0
        %2319 = vmatpush.msra.mxu0 %v2090
        %2320 = vmatpush.msra.mxu0 %v2084
        %2321 = vmatpush.msra.mxu0 %v2078
        %2322 = vmatpush.msra.mxu0 %v2072
        %2323 = vmatpush.msra.mxu0 %v2066
        %2324 = vmatpush.msra.mxu0 %v2060
        %2325 = vmatpush.msra.mxu0 %v2054
        %2326 = vmatpush.msra.mxu0 %v2048
        %2327 = vmatpush.msra.mxu0 %v2042
        %2328 = vmatpush.msra.mxu0 %v2036
        %2329 = vmatpush.msra.mxu0 %v2030
        %2330 = vmatpush.msra.mxu0 %v2024
        %2331 = vmatpush.msra.mxu0 %v2018
        %2332 = vmatpush.msra.mxu0 %v2012
        %2333 = vmatpush.msra.mxu0 %v2006
        %2334 = vmatpush.msra.mxu0 %v2000
        %2335 = vmatmul.f32.gmra.mxu0 %v1709
        %v2336 = vpop.f32.mrf.mxu0
        %v2337 = vadd.f32 %v2317, %v2336
        %2338 = vdwg.mxu0
        %2339 = vmatpush.msra.mxu0 %v2186
        %2340 = vmatpush.msra.mxu0 %v2180
        %2341 = vmatpush.msra.mxu0 %v2174
        %2342 = vmatpush.msra.mxu0 %v2168
        %2343 = vmatpush.msra.mxu0 %v2162
        %2344 = vmatpush.msra.mxu0 %v2156
        %2345 = vmatpush.msra.mxu0 %v2150
        %2346 = vmatpush.msra.mxu0 %v2144
        %2347 = vmatpush.msra.mxu0 %v2138
        %2348 = vmatpush.msra.mxu0 %v2132
        %2349 = vmatpush.msra.mxu0 %v2126
        %2350 = vmatpush.msra.mxu0 %v2120
        %2351 = vmatpush.msra.mxu0 %v2114
        %2352 = vmatpush.msra.mxu0 %v2108
        %2353 = vmatpush.msra.mxu0 %v2102
        %2354 = vmatpush.msra.mxu0 %v2096
        %2355 = vmatmul.f32.gmra.mxu0 %v1710
        %v2356 = vpop.f32.mrf.mxu0
        %v2357 = vadd.f32 %v2337, %v2356
        %2358 = vdwg.mxu0
        %2359 = vmatpush.msra.mxu0 0.0
        %2360 = vmatpush.msra.mxu0 0.0
        %2361 = vmatpush.msra.mxu0 0.0
        %2362 = vmatpush.msra.mxu0 0.0
        %2363 = vmatpush.msra.mxu0 0.0
        %2364 = vmatpush.msra.mxu0 0.0
        %2365 = vmatpush.msra.mxu0 0.0
        %2366 = vmatpush.msra.mxu0 0.0
        %2367 = vmatpush.msra.mxu0 0.0
        %2368 = vmatpush.msra.mxu0 0.0
        %2369 = vmatpush.msra.mxu0 0.0
        %2370 = vmatpush.msra.mxu0 %v2242
        %2371 = vmatpush.msra.mxu0 %v2210
        %2372 = vmatpush.msra.mxu0 %v2204
        %2373 = vmatpush.msra.mxu0 %v2198
        %2374 = vmatpush.msra.mxu0 %v2192
        %2375 = vmatmul.f32.gmra.mxu0 %v2238
        %v2376 = vpop.f32.mrf.mxu0
        %v2377 = vadd.f32 %v2357, %v2376
        %2378 = vdwg.mxu0
        %2379 = vmatpush.msra.mxu0 %v1803
        %2380 = vmatpush.msra.mxu0 %v1797
        %2381 = vmatpush.msra.mxu0 %v1791
        %2382 = vmatpush.msra.mxu0 %v1785
        %2383 = vmatpush.msra.mxu0 %v1779
        %2384 = vmatpush.msra.mxu0 %v1773
        %2385 = vmatpush.msra.mxu0 %v1767
        %2386 = vmatpush.msra.mxu0 %v1761
        %2387 = vmatpush.msra.mxu0 %v1755
        %2388 = vmatpush.msra.mxu0 %v1749
        %2389 = vmatpush.msra.mxu0 %v1743
        %2390 = vmatpush.msra.mxu0 %v1737
        %2391 = vmatpush.msra.mxu0 %v1731
        %2392 = vmatpush.msra.mxu0 %v1725
        %2393 = vmatpush.msra.mxu0 %v1719
        %2394 = vmatpush.msra.mxu0 %v1713
        %2395 = vmatmul.f32.gmra.mxu0 %v1706
        %v2396 = vpop.f32.mrf.mxu0
        %v2397 = vadd.f32 %v2225, %v2396
        %2398 = vdwg.mxu0
        %2399 = vmatpush.msra.mxu0 %v1899
        %2400 = vmatpush.msra.mxu0 %v1893
        %2401 = vmatpush.msra.mxu0 %v1887
        %2402 = vmatpush.msra.mxu0 %v1881
        %2403 = vmatpush.msra.mxu0 %v1875
        %2404 = vmatpush.msra.mxu0 %v1869
        %2405 = vmatpush.msra.mxu0 %v1863
        %2406 = vmatpush.msra.mxu0 %v1857
        %2407 = vmatpush.msra.mxu0 %v1851
        %2408 = vmatpush.msra.mxu0 %v1845
        %2409 = vmatpush.msra.mxu0 %v1839
        %2410 = vmatpush.msra.mxu0 %v1833
        %2411 = vmatpush.msra.mxu0 %v1827
        %2412 = vmatpush.msra.mxu0 %v1821
        %2413 = vmatpush.msra.mxu0 %v1815
        %2414 = vmatpush.msra.mxu0 %v1809
        %2415 = vmatmul.f32.gmra.mxu0 %v1707
        %v2416 = vpop.f32.mrf.mxu0
        %v2417 = vadd.f32 %v2397, %v2416
        %2418 = vdwg.mxu0
        %2419 = vmatpush.msra.mxu0 %v1995
        %2420 = vmatpush.msra.mxu0 %v1989
        %2421 = vmatpush.msra.mxu0 %v1983
        %2422 = vmatpush.msra.mxu0 %v1977
        %2423 = vmatpush.msra.mxu0 %v1971
        %2424 = vmatpush.msra.mxu0 %v1965
        %2425 = vmatpush.msra.mxu0 %v1959
        %2426 = vmatpush.msra.mxu0 %v1953
        %2427 = vmatpush.msra.mxu0 %v1947
        %2428 = vmatpush.msra.mxu0 %v1941
        %2429 = vmatpush.msra.mxu0 %v1935
        %2430 = vmatpush.msra.mxu0 %v1929
        %2431 = vmatpush.msra.mxu0 %v1923
        %2432 = vmatpush.msra.mxu0 %v1917
        %2433 = vmatpush.msra.mxu0 %v1911
        %2434 = vmatpush.msra.mxu0 %v1905
        %2435 = vmatmul.f32.gmra.mxu0 %v1708
        %v2436 = vpop.f32.mrf.mxu0
        %v2437 = vadd.f32 %v2417, %v2436
        %2438 = vdwg.mxu0
        %2439 = vmatpush.msra.mxu0 %v2091
        %2440 = vmatpush.msra.mxu0 %v2085
        %2441 = vmatpush.msra.mxu0 %v2079
        %2442 = vmatpush.msra.mxu0 %v2073
        %2443 = vmatpush.msra.mxu0 %v2067
        %2444 = vmatpush.msra.mxu0 %v2061
        %2445 = vmatpush.msra.mxu0 %v2055
        %2446 = vmatpush.msra.mxu0 %v2049
        %2447 = vmatpush.msra.mxu0 %v2043
        %2448 = vmatpush.msra.mxu0 %v2037
        %2449 = vmatpush.msra.mxu0 %v2031
        %2450 = vmatpush.msra.mxu0 %v2025
        %2451 = vmatpush.msra.mxu0 %v2019
        %2452 = vmatpush.msra.mxu0 %v2013
        %2453 = vmatpush.msra.mxu0 %v2007
        %2454 = vmatpush.msra.mxu0 %v2001
        %2455 = vmatmul.f32.gmra.mxu0 %v1709
        %v2456 = vpop.f32.mrf.mxu0
        %v2457 = vadd.f32 %v2437, %v2456
        %2458 = vdwg.mxu0
        %2459 = vmatpush.msra.mxu0 %v2187
        %2460 = vmatpush.msra.mxu0 %v2181
        %2461 = vmatpush.msra.mxu0 %v2175
        %2462 = vmatpush.msra.mxu0 %v2169
        %2463 = vmatpush.msra.mxu0 %v2163
        %2464 = vmatpush.msra.mxu0 %v2157
        %2465 = vmatpush.msra.mxu0 %v2151
        %2466 = vmatpush.msra.mxu0 %v2145
        %2467 = vmatpush.msra.mxu0 %v2139
        %2468 = vmatpush.msra.mxu0 %v2133
        %2469 = vmatpush.msra.mxu0 %v2127
        %2470 = vmatpush.msra.mxu0 %v2121
        %2471 = vmatpush.msra.mxu0 %v2115
        %2472 = vmatpush.msra.mxu0 %v2109
        %2473 = vmatpush.msra.mxu0 %v2103
        %2474 = vmatpush.msra.mxu0 %v2097
        %2475 = vmatmul.f32.gmra.mxu0 %v1710
        %v2476 = vpop.f32.mrf.mxu0
        %v2477 = vadd.f32 %v2457, %v2476
        %2478 = vdwg.mxu0
        %2479 = vmatpush.msra.mxu0 0.0
        %2480 = vmatpush.msra.mxu0 0.0
        %2481 = vmatpush.msra.mxu0 0.0
        %2482 = vmatpush.msra.mxu0 0.0
        %2483 = vmatpush.msra.mxu0 0.0
        %2484 = vmatpush.msra.mxu0 0.0
        %2485 = vmatpush.msra.mxu0 0.0
        %2486 = vmatpush.msra.mxu0 0.0
        %2487 = vmatpush.msra.mxu0 0.0
        %2488 = vmatpush.msra.mxu0 0.0
        %2489 = vmatpush.msra.mxu0 0.0
        %2490 = vmatpush.msra.mxu0 %v2245
        %2491 = vmatpush.msra.mxu0 %v2211
        %2492 = vmatpush.msra.mxu0 %v2205
        %2493 = vmatpush.msra.mxu0 %v2199
        %2494 = vmatpush.msra.mxu0 %v2193
        %2495 = vmatmul.f32.gmra.mxu0 %v2238
        %v2496 = vpop.f32.mrf.mxu0
        %v2497 = vadd.f32 %v2477, %v2496
        %2498 = vdwg.mxu0
        %2499 = vmatpush.msra.mxu0 %v1804
        %2500 = vmatpush.msra.mxu0 %v1798
        %2501 = vmatpush.msra.mxu0 %v1792
        %2502 = vmatpush.msra.mxu0 %v1786
        %2503 = vmatpush.msra.mxu0 %v1780
        %2504 = vmatpush.msra.mxu0 %v1774
        %2505 = vmatpush.msra.mxu0 %v1768
        %2506 = vmatpush.msra.mxu0 %v1762
        %2507 = vmatpush.msra.mxu0 %v1756
        %2508 = vmatpush.msra.mxu0 %v1750
        %2509 = vmatpush.msra.mxu0 %v1744
        %2510 = vmatpush.msra.mxu0 %v1738
        %2511 = vmatpush.msra.mxu0 %v1732
        %2512 = vmatpush.msra.mxu0 %v1726
        %2513 = vmatpush.msra.mxu0 %v1720
        %2514 = vmatpush.msra.mxu0 %v1714
        %2515 = vmatmul.f32.gmra.mxu0 %v1706
        %v2516 = vpop.f32.mrf.mxu0
        %v2517 = vadd.f32 %v2226, %v2516
        %2518 = vdwg.mxu0
        %2519 = vmatpush.msra.mxu0 %v1900
        %2520 = vmatpush.msra.mxu0 %v1894
        %2521 = vmatpush.msra.mxu0 %v1888
        %2522 = vmatpush.msra.mxu0 %v1882
        %2523 = vmatpush.msra.mxu0 %v1876
        %2524 = vmatpush.msra.mxu0 %v1870
        %2525 = vmatpush.msra.mxu0 %v1864
        %2526 = vmatpush.msra.mxu0 %v1858
        %2527 = vmatpush.msra.mxu0 %v1852
        %2528 = vmatpush.msra.mxu0 %v1846
        %2529 = vmatpush.msra.mxu0 %v1840
        %2530 = vmatpush.msra.mxu0 %v1834
        %2531 = vmatpush.msra.mxu0 %v1828
        %2532 = vmatpush.msra.mxu0 %v1822
        %2533 = vmatpush.msra.mxu0 %v1816
        %2534 = vmatpush.msra.mxu0 %v1810
        %2535 = vmatmul.f32.gmra.mxu0 %v1707
        %v2536 = vpop.f32.mrf.mxu0
        %v2537 = vadd.f32 %v2517, %v2536
        %2538 = vdwg.mxu0
        %2539 = vmatpush.msra.mxu0 %v1996
        %2540 = vmatpush.msra.mxu0 %v1990
        %2541 = vmatpush.msra.mxu0 %v1984
        %2542 = vmatpush.msra.mxu0 %v1978
        %2543 = vmatpush.msra.mxu0 %v1972
        %2544 = vmatpush.msra.mxu0 %v1966
        %2545 = vmatpush.msra.mxu0 %v1960
        %2546 = vmatpush.msra.mxu0 %v1954
        %2547 = vmatpush.msra.mxu0 %v1948
        %2548 = vmatpush.msra.mxu0 %v1942
        %2549 = vmatpush.msra.mxu0 %v1936
        %2550 = vmatpush.msra.mxu0 %v1930
        %2551 = vmatpush.msra.mxu0 %v1924
        %2552 = vmatpush.msra.mxu0 %v1918
        %2553 = vmatpush.msra.mxu0 %v1912
        %2554 = vmatpush.msra.mxu0 %v1906
        %2555 = vmatmul.f32.gmra.mxu0 %v1708
        %v2556 = vpop.f32.mrf.mxu0
        %v2557 = vadd.f32 %v2537, %v2556
        %2558 = vdwg.mxu0
        %2559 = vmatpush.msra.mxu0 %v2092
        %2560 = vmatpush.msra.mxu0 %v2086
        %2561 = vmatpush.msra.mxu0 %v2080
        %2562 = vmatpush.msra.mxu0 %v2074
        %2563 = vmatpush.msra.mxu0 %v2068
        %2564 = vmatpush.msra.mxu0 %v2062
        %2565 = vmatpush.msra.mxu0 %v2056
        %2566 = vmatpush.msra.mxu0 %v2050
        %2567 = vmatpush.msra.mxu0 %v2044
        %2568 = vmatpush.msra.mxu0 %v2038
        %2569 = vmatpush.msra.mxu0 %v2032
        %2570 = vmatpush.msra.mxu0 %v2026
        %2571 = vmatpush.msra.mxu0 %v2020
        %2572 = vmatpush.msra.mxu0 %v2014
        %2573 = vmatpush.msra.mxu0 %v2008
        %2574 = vmatpush.msra.mxu0 %v2002
        %2575 = vmatmul.f32.gmra.mxu0 %v1709
        %v2576 = vpop.f32.mrf.mxu0
        %v2577 = vadd.f32 %v2557, %v2576
        %2578 = vdwg.mxu0
        %2579 = vmatpush.msra.mxu0 %v2188
        %2580 = vmatpush.msra.mxu0 %v2182
        %2581 = vmatpush.msra.mxu0 %v2176
        %2582 = vmatpush.msra.mxu0 %v2170
        %2583 = vmatpush.msra.mxu0 %v2164
        %2584 = vmatpush.msra.mxu0 %v2158
        %2585 = vmatpush.msra.mxu0 %v2152
        %2586 = vmatpush.msra.mxu0 %v2146
        %2587 = vmatpush.msra.mxu0 %v2140
        %2588 = vmatpush.msra.mxu0 %v2134
        %2589 = vmatpush.msra.mxu0 %v2128
        %2590 = vmatpush.msra.mxu0 %v2122
        %2591 = vmatpush.msra.mxu0 %v2116
        %2592 = vmatpush.msra.mxu0 %v2110
        %2593 = vmatpush.msra.mxu0 %v2104
        %2594 = vmatpush.msra.mxu0 %v2098
        %2595 = vmatmul.f32.gmra.mxu0 %v1710
        %v2596 = vpop.f32.mrf.mxu0
        %v2597 = vadd.f32 %v2577, %v2596
        %2598 = vdwg.mxu0
        %2599 = vmatpush.msra.mxu0 0.0
        %2600 = vmatpush.msra.mxu0 0.0
        %2601 = vmatpush.msra.mxu0 0.0
        %2602 = vmatpush.msra.mxu0 0.0
        %2603 = vmatpush.msra.mxu0 0.0
        %2604 = vmatpush.msra.mxu0 0.0
        %2605 = vmatpush.msra.mxu0 0.0
        %2606 = vmatpush.msra.mxu0 0.0
        %2607 = vmatpush.msra.mxu0 0.0
        %2608 = vmatpush.msra.mxu0 0.0
        %2609 = vmatpush.msra.mxu0 0.0
        %2610 = vmatpush.msra.mxu0 %v2248
        %2611 = vmatpush.msra.mxu0 %v2212
        %2612 = vmatpush.msra.mxu0 %v2206
        %2613 = vmatpush.msra.mxu0 %v2200
        %2614 = vmatpush.msra.mxu0 %v2194
        %2615 = vmatmul.f32.gmra.mxu0 %v2238
        %v2616 = vpop.f32.mrf.mxu0
        %v2617 = vadd.f32 %v2597, %v2616
        %2618 = vdwg.mxu0
        %2619 = vmatpush.msra.mxu0 %v1805
        %2620 = vmatpush.msra.mxu0 %v1799
        %2621 = vmatpush.msra.mxu0 %v1793
        %2622 = vmatpush.msra.mxu0 %v1787
        %2623 = vmatpush.msra.mxu0 %v1781
        %2624 = vmatpush.msra.mxu0 %v1775
        %2625 = vmatpush.msra.mxu0 %v1769
        %2626 = vmatpush.msra.mxu0 %v1763
        %2627 = vmatpush.msra.mxu0 %v1757
        %2628 = vmatpush.msra.mxu0 %v1751
        %2629 = vmatpush.msra.mxu0 %v1745
        %2630 = vmatpush.msra.mxu0 %v1739
        %2631 = vmatpush.msra.mxu0 %v1733
        %2632 = vmatpush.msra.mxu0 %v1727
        %2633 = vmatpush.msra.mxu0 %v1721
        %2634 = vmatpush.msra.mxu0 %v1715
        %2635 = vmatmul.f32.gmra.mxu0 %v1706
        %v2636 = vpop.f32.mrf.mxu0
        %v2637 = vadd.f32 %v2227, %v2636
        %2638 = vdwg.mxu0
        %2639 = vmatpush.msra.mxu0 %v1901
        %2640 = vmatpush.msra.mxu0 %v1895
        %2641 = vmatpush.msra.mxu0 %v1889
        %2642 = vmatpush.msra.mxu0 %v1883
        %2643 = vmatpush.msra.mxu0 %v1877
        %2644 = vmatpush.msra.mxu0 %v1871
        %2645 = vmatpush.msra.mxu0 %v1865
        %2646 = vmatpush.msra.mxu0 %v1859
        %2647 = vmatpush.msra.mxu0 %v1853
        %2648 = vmatpush.msra.mxu0 %v1847
        %2649 = vmatpush.msra.mxu0 %v1841
        %2650 = vmatpush.msra.mxu0 %v1835
        %2651 = vmatpush.msra.mxu0 %v1829
        %2652 = vmatpush.msra.mxu0 %v1823
        %2653 = vmatpush.msra.mxu0 %v1817
        %2654 = vmatpush.msra.mxu0 %v1811
        %2655 = vmatmul.f32.gmra.mxu0 %v1707
        %v2656 = vpop.f32.mrf.mxu0
        %v2657 = vadd.f32 %v2637, %v2656
        %2658 = vdwg.mxu0
        %2659 = vmatpush.msra.mxu0 %v1997
        %2660 = vmatpush.msra.mxu0 %v1991
        %2661 = vmatpush.msra.mxu0 %v1985
        %2662 = vmatpush.msra.mxu0 %v1979
        %2663 = vmatpush.msra.mxu0 %v1973
        %2664 = vmatpush.msra.mxu0 %v1967
        %2665 = vmatpush.msra.mxu0 %v1961
        %2666 = vmatpush.msra.mxu0 %v1955
        %2667 = vmatpush.msra.mxu0 %v1949
        %2668 = vmatpush.msra.mxu0 %v1943
        %2669 = vmatpush.msra.mxu0 %v1937
        %2670 = vmatpush.msra.mxu0 %v1931
        %2671 = vmatpush.msra.mxu0 %v1925
        %2672 = vmatpush.msra.mxu0 %v1919
        %2673 = vmatpush.msra.mxu0 %v1913
        %2674 = vmatpush.msra.mxu0 %v1907
        %2675 = vmatmul.f32.gmra.mxu0 %v1708
        %v2676 = vpop.f32.mrf.mxu0
        %v2677 = vadd.f32 %v2657, %v2676
        %2678 = vdwg.mxu0
        %2679 = vmatpush.msra.mxu0 %v2093
        %2680 = vmatpush.msra.mxu0 %v2087
        %2681 = vmatpush.msra.mxu0 %v2081
        %2682 = vmatpush.msra.mxu0 %v2075
        %2683 = vmatpush.msra.mxu0 %v2069
        %2684 = vmatpush.msra.mxu0 %v2063
        %2685 = vmatpush.msra.mxu0 %v2057
        %2686 = vmatpush.msra.mxu0 %v2051
        %2687 = vmatpush.msra.mxu0 %v2045
        %2688 = vmatpush.msra.mxu0 %v2039
        %2689 = vmatpush.msra.mxu0 %v2033
        %2690 = vmatpush.msra.mxu0 %v2027
        %2691 = vmatpush.msra.mxu0 %v2021
        %2692 = vmatpush.msra.mxu0 %v2015
        %2693 = vmatpush.msra.mxu0 %v2009
        %2694 = vmatpush.msra.mxu0 %v2003
        %2695 = vmatmul.f32.gmra.mxu0 %v1709
        %v2696 = vpop.f32.mrf.mxu0
        %v2697 = vadd.f32 %v2677, %v2696
        %2698 = vdwg.mxu0
        %2699 = vmatpush.msra.mxu0 %v2189
        %2700 = vmatpush.msra.mxu0 %v2183
        %2701 = vmatpush.msra.mxu0 %v2177
        %2702 = vmatpush.msra.mxu0 %v2171
        %2703 = vmatpush.msra.mxu0 %v2165
        %2704 = vmatpush.msra.mxu0 %v2159
        %2705 = vmatpush.msra.mxu0 %v2153
        %2706 = vmatpush.msra.mxu0 %v2147
        %2707 = vmatpush.msra.mxu0 %v2141
        %2708 = vmatpush.msra.mxu0 %v2135
        %2709 = vmatpush.msra.mxu0 %v2129
        %2710 = vmatpush.msra.mxu0 %v2123
        %2711 = vmatpush.msra.mxu0 %v2117
        %2712 = vmatpush.msra.mxu0 %v2111
        %2713 = vmatpush.msra.mxu0 %v2105
        %2714 = vmatpush.msra.mxu0 %v2099
        %2715 = vmatmul.f32.gmra.mxu0 %v1710
        %v2716 = vpop.f32.mrf.mxu0
        %v2717 = vadd.f32 %v2697, %v2716
        %2718 = vdwg.mxu0
        %2719 = vmatpush.msra.mxu0 0.0
        %2720 = vmatpush.msra.mxu0 0.0
        %2721 = vmatpush.msra.mxu0 0.0
        %2722 = vmatpush.msra.mxu0 0.0
        %2723 = vmatpush.msra.mxu0 0.0
        %2724 = vmatpush.msra.mxu0 0.0
        %2725 = vmatpush.msra.mxu0 0.0
        %2726 = vmatpush.msra.mxu0 0.0
        %2727 = vmatpush.msra.mxu0 0.0
        %2728 = vmatpush.msra.mxu0 0.0
        %2729 = vmatpush.msra.mxu0 0.0
        %2730 = vmatpush.msra.mxu0 %v2251
        %2731 = vmatpush.msra.mxu0 %v2213
        %2732 = vmatpush.msra.mxu0 %v2207
        %2733 = vmatpush.msra.mxu0 %v2201
        %2734 = vmatpush.msra.mxu0 %v2195
        %2735 = vmatmul.f32.gmra.mxu0 %v2238
        %v2736 = vpop.f32.mrf.mxu0
        %v2737 = vadd.f32 %v2717, %v2736
        %2738 = vdwg.mxu0
        %2739 = vmatpush.msra.mxu0 %v1806
        %2740 = vmatpush.msra.mxu0 %v1800
        %2741 = vmatpush.msra.mxu0 %v1794
        %2742 = vmatpush.msra.mxu0 %v1788
        %2743 = vmatpush.msra.mxu0 %v1782
        %2744 = vmatpush.msra.mxu0 %v1776
        %2745 = vmatpush.msra.mxu0 %v1770
        %2746 = vmatpush.msra.mxu0 %v1764
        %2747 = vmatpush.msra.mxu0 %v1758
        %2748 = vmatpush.msra.mxu0 %v1752
        %2749 = vmatpush.msra.mxu0 %v1746
        %2750 = vmatpush.msra.mxu0 %v1740
        %2751 = vmatpush.msra.mxu0 %v1734
        %2752 = vmatpush.msra.mxu0 %v1728
        %2753 = vmatpush.msra.mxu0 %v1722
        %2754 = vmatpush.msra.mxu0 %v1716
        %2755 = vmatmul.f32.gmra.mxu0 %v1706
        %v2756 = vpop.f32.mrf.mxu0
        %v2757 = vadd.f32 %v2228, %v2756
        %2758 = vdwg.mxu0
        %2759 = vmatpush.msra.mxu0 %v1902
        %2760 = vmatpush.msra.mxu0 %v1896
        %2761 = vmatpush.msra.mxu0 %v1890
        %2762 = vmatpush.msra.mxu0 %v1884
        %2763 = vmatpush.msra.mxu0 %v1878
        %2764 = vmatpush.msra.mxu0 %v1872
        %2765 = vmatpush.msra.mxu0 %v1866
        %2766 = vmatpush.msra.mxu0 %v1860
        %2767 = vmatpush.msra.mxu0 %v1854
        %2768 = vmatpush.msra.mxu0 %v1848
        %2769 = vmatpush.msra.mxu0 %v1842
        %2770 = vmatpush.msra.mxu0 %v1836
        %2771 = vmatpush.msra.mxu0 %v1830
        %2772 = vmatpush.msra.mxu0 %v1824
        %2773 = vmatpush.msra.mxu0 %v1818
        %2774 = vmatpush.msra.mxu0 %v1812
        %2775 = vmatmul.f32.gmra.mxu0 %v1707
        %v2776 = vpop.f32.mrf.mxu0
        %v2777 = vadd.f32 %v2757, %v2776
        %2778 = vdwg.mxu0
        %2779 = vmatpush.msra.mxu0 %v1998
        %2780 = vmatpush.msra.mxu0 %v1992
        %2781 = vmatpush.msra.mxu0 %v1986
        %2782 = vmatpush.msra.mxu0 %v1980
        %2783 = vmatpush.msra.mxu0 %v1974
        %2784 = vmatpush.msra.mxu0 %v1968
        %2785 = vmatpush.msra.mxu0 %v1962
        %2786 = vmatpush.msra.mxu0 %v1956
        %2787 = vmatpush.msra.mxu0 %v1950
        %2788 = vmatpush.msra.mxu0 %v1944
        %2789 = vmatpush.msra.mxu0 %v1938
        %2790 = vmatpush.msra.mxu0 %v1932
        %2791 = vmatpush.msra.mxu0 %v1926
        %2792 = vmatpush.msra.mxu0 %v1920
        %2793 = vmatpush.msra.mxu0 %v1914
        %2794 = vmatpush.msra.mxu0 %v1908
        %2795 = vmatmul.f32.gmra.mxu0 %v1708
        %v2796 = vpop.f32.mrf.mxu0
        %v2797 = vadd.f32 %v2777, %v2796
        %2798 = vdwg.mxu0
        %2799 = vmatpush.msra.mxu0 %v2094
        %2800 = vmatpush.msra.mxu0 %v2088
        %2801 = vmatpush.msra.mxu0 %v2082
        %2802 = vmatpush.msra.mxu0 %v2076
        %2803 = vmatpush.msra.mxu0 %v2070
        %2804 = vmatpush.msra.mxu0 %v2064
        %2805 = vmatpush.msra.mxu0 %v2058
        %2806 = vmatpush.msra.mxu0 %v2052
        %2807 = vmatpush.msra.mxu0 %v2046
        %2808 = vmatpush.msra.mxu0 %v2040
        %2809 = vmatpush.msra.mxu0 %v2034
        %2810 = vmatpush.msra.mxu0 %v2028
        %2811 = vmatpush.msra.mxu0 %v2022
        %2812 = vmatpush.msra.mxu0 %v2016
        %2813 = vmatpush.msra.mxu0 %v2010
        %2814 = vmatpush.msra.mxu0 %v2004
        %2815 = vmatmul.f32.gmra.mxu0 %v1709
        %v2816 = vpop.f32.mrf.mxu0
        %v2817 = vadd.f32 %v2797, %v2816
        %2818 = vdwg.mxu0
        %2819 = vmatpush.msra.mxu0 %v2190
        %2820 = vmatpush.msra.mxu0 %v2184
        %2821 = vmatpush.msra.mxu0 %v2178
        %2822 = vmatpush.msra.mxu0 %v2172
        %2823 = vmatpush.msra.mxu0 %v2166
        %2824 = vmatpush.msra.mxu0 %v2160
        %2825 = vmatpush.msra.mxu0 %v2154
        %2826 = vmatpush.msra.mxu0 %v2148
        %2827 = vmatpush.msra.mxu0 %v2142
        %2828 = vmatpush.msra.mxu0 %v2136
        %2829 = vmatpush.msra.mxu0 %v2130
        %2830 = vmatpush.msra.mxu0 %v2124
        %2831 = vmatpush.msra.mxu0 %v2118
        %2832 = vmatpush.msra.mxu0 %v2112
        %2833 = vmatpush.msra.mxu0 %v2106
        %2834 = vmatpush.msra.mxu0 %v2100
        %2835 = vmatmul.f32.gmra.mxu0 %v1710
        %v2836 = vpop.f32.mrf.mxu0
        %v2837 = vadd.f32 %v2817, %v2836
        %2838 = vdwg.mxu0
        %2839 = vmatpush.msra.mxu0 0.0
        %2840 = vmatpush.msra.mxu0 0.0
        %2841 = vmatpush.msra.mxu0 0.0
        %2842 = vmatpush.msra.mxu0 0.0
        %2843 = vmatpush.msra.mxu0 0.0
        %2844 = vmatpush.msra.mxu0 0.0
        %2845 = vmatpush.msra.mxu0 0.0
        %2846 = vmatpush.msra.mxu0 0.0
        %2847 = vmatpush.msra.mxu0 0.0
        %2848 = vmatpush.msra.mxu0 0.0
        %2849 = vmatpush.msra.mxu0 0.0
        %2850 = vmatpush.msra.mxu0 %v2254
        %2851 = vmatpush.msra.mxu0 %v2214
        %2852 = vmatpush.msra.mxu0 %v2208
        %2853 = vmatpush.msra.mxu0 %v2202
        %2854 = vmatpush.msra.mxu0 %v2196
        %2855 = vmatmul.f32.gmra.mxu0 %v2238
        %v2856 = vpop.f32.mrf.mxu0
        %v2857 = vadd.f32 %v2837, %v2856
        %2858 = vdwg.mxu0
        %2859 = vmatpush.msra.mxu0 %v1807
        %2860 = vmatpush.msra.mxu0 %v1801
        %2861 = vmatpush.msra.mxu0 %v1795
        %2862 = vmatpush.msra.mxu0 %v1789
        %2863 = vmatpush.msra.mxu0 %v1783
        %2864 = vmatpush.msra.mxu0 %v1777
        %2865 = vmatpush.msra.mxu0 %v1771
        %2866 = vmatpush.msra.mxu0 %v1765
        %2867 = vmatpush.msra.mxu0 %v1759
        %2868 = vmatpush.msra.mxu0 %v1753
        %2869 = vmatpush.msra.mxu0 %v1747
        %2870 = vmatpush.msra.mxu0 %v1741
        %2871 = vmatpush.msra.mxu0 %v1735
        %2872 = vmatpush.msra.mxu0 %v1729
        %2873 = vmatpush.msra.mxu0 %v1723
        %2874 = vmatpush.msra.mxu0 %v1717
        %2875 = vmatmul.f32.gmra.mxu0 %v1706
        %v2876 = vpop.f32.mrf.mxu0
        %v2877 = vadd.f32 %v2229, %v2876
        %2878 = vdwg.mxu0
        %2879 = vmatpush.msra.mxu0 %v1903
        %2880 = vmatpush.msra.mxu0 %v1897
        %2881 = vmatpush.msra.mxu0 %v1891
        %2882 = vmatpush.msra.mxu0 %v1885
        %2883 = vmatpush.msra.mxu0 %v1879
        %2884 = vmatpush.msra.mxu0 %v1873
        %2885 = vmatpush.msra.mxu0 %v1867
        %2886 = vmatpush.msra.mxu0 %v1861
        %2887 = vmatpush.msra.mxu0 %v1855
        %2888 = vmatpush.msra.mxu0 %v1849
        %2889 = vmatpush.msra.mxu0 %v1843
        %2890 = vmatpush.msra.mxu0 %v1837
        %2891 = vmatpush.msra.mxu0 %v1831
        %2892 = vmatpush.msra.mxu0 %v1825
        %2893 = vmatpush.msra.mxu0 %v1819
        %2894 = vmatpush.msra.mxu0 %v1813
        %2895 = vmatmul.f32.gmra.mxu0 %v1707
        %v2896 = vpop.f32.mrf.mxu0
        %v2897 = vadd.f32 %v2877, %v2896
        %2898 = vdwg.mxu0
        %2899 = vmatpush.msra.mxu0 %v1999
        %2900 = vmatpush.msra.mxu0 %v1993
        %2901 = vmatpush.msra.mxu0 %v1987
        %2902 = vmatpush.msra.mxu0 %v1981
        %2903 = vmatpush.msra.mxu0 %v1975
        %2904 = vmatpush.msra.mxu0 %v1969
        %2905 = vmatpush.msra.mxu0 %v1963
        %2906 = vmatpush.msra.mxu0 %v1957
        %2907 = vmatpush.msra.mxu0 %v1951
        %2908 = vmatpush.msra.mxu0 %v1945
        %2909 = vmatpush.msra.mxu0 %v1939
        %2910 = vmatpush.msra.mxu0 %v1933
        %2911 = vmatpush.msra.mxu0 %v1927
        %2912 = vmatpush.msra.mxu0 %v1921
        %2913 = vmatpush.msra.mxu0 %v1915
        %2914 = vmatpush.msra.mxu0 %v1909
        %2915 = vmatmul.f32.gmra.mxu0 %v1708
        %v2916 = vpop.f32.mrf.mxu0
        %v2917 = vadd.f32 %v2897, %v2916
        %2918 = vdwg.mxu0
        %2919 = vmatpush.msra.mxu0 %v2095
        %2920 = vmatpush.msra.mxu0 %v2089
        %2921 = vmatpush.msra.mxu0 %v2083
        %2922 = vmatpush.msra.mxu0 %v2077
        %2923 = vmatpush.msra.mxu0 %v2071
        %2924 = vmatpush.msra.mxu0 %v2065
        %2925 = vmatpush.msra.mxu0 %v2059
        %2926 = vmatpush.msra.mxu0 %v2053
        %2927 = vmatpush.msra.mxu0 %v2047
        %2928 = vmatpush.msra.mxu0 %v2041
        %2929 = vmatpush.msra.mxu0 %v2035
        %2930 = vmatpush.msra.mxu0 %v2029
        %2931 = vmatpush.msra.mxu0 %v2023
        %2932 = vmatpush.msra.mxu0 %v2017
        %2933 = vmatpush.msra.mxu0 %v2011
        %2934 = vmatpush.msra.mxu0 %v2005
        %2935 = vmatmul.f32.gmra.mxu0 %v1709
        %v2936 = vpop.f32.mrf.mxu0
        %v2937 = vadd.f32 %v2917, %v2936
        %2938 = vdwg.mxu0
        %2939 = vmatpush.msra.mxu0 %v2191
        %2940 = vmatpush.msra.mxu0 %v2185
        %2941 = vmatpush.msra.mxu0 %v2179
        %2942 = vmatpush.msra.mxu0 %v2173
        %2943 = vmatpush.msra.mxu0 %v2167
        %2944 = vmatpush.msra.mxu0 %v2161
        %2945 = vmatpush.msra.mxu0 %v2155
        %2946 = vmatpush.msra.mxu0 %v2149
        %2947 = vmatpush.msra.mxu0 %v2143
        %2948 = vmatpush.msra.mxu0 %v2137
        %2949 = vmatpush.msra.mxu0 %v2131
        %2950 = vmatpush.msra.mxu0 %v2125
        %2951 = vmatpush.msra.mxu0 %v2119
        %2952 = vmatpush.msra.mxu0 %v2113
        %2953 = vmatpush.msra.mxu0 %v2107
        %2954 = vmatpush.msra.mxu0 %v2101
        %2955 = vmatmul.f32.gmra.mxu0 %v1710
        %v2956 = vpop.f32.mrf.mxu0
        %v2957 = vadd.f32 %v2937, %v2956
        %2958 = vdwg.mxu0
        %2959 = vmatpush.msra.mxu0 0.0
        %2960 = vmatpush.msra.mxu0 0.0
        %2961 = vmatpush.msra.mxu0 0.0
        %2962 = vmatpush.msra.mxu0 0.0
        %2963 = vmatpush.msra.mxu0 0.0
        %2964 = vmatpush.msra.mxu0 0.0
        %2965 = vmatpush.msra.mxu0 0.0
        %2966 = vmatpush.msra.mxu0 0.0
        %2967 = vmatpush.msra.mxu0 0.0
        %2968 = vmatpush.msra.mxu0 0.0
        %2969 = vmatpush.msra.mxu0 0.0
        %2970 = vmatpush.msra.mxu0 %v2257
        %2971 = vmatpush.msra.mxu0 %v2215
        %2972 = vmatpush.msra.mxu0 %v2209
        %2973 = vmatpush.msra.mxu0 %v2203
        %2974 = vmatpush.msra.mxu0 %v2197
        %2975 = vmatmul.f32.gmra.mxu0 %v2238
        %v2976 = vpop.f32.mrf.mxu0
        %v2977 = vadd.f32 %v2957, %v2976
        %2978 = vdwg.mxu0
        %v2979 = vmax.f32 %v2377, 0.0
        %v2980 = vmax.f32 %v2497, 0.0
        %v2981 = vmax.f32 %v2617, 0.0
        %v2982 = vmax.f32 %v2737, 0.0
        %v2983 = vmax.f32 %v2857, 0.0
        %v2984 = vmax.f32 %v2977, 0.0
        %v2985 = vld [vmem:[#allocation15] sm:$0xff]
        %v2986 = vld [vmem:[#allocation15 + $0x8] sm:$0xff]
        %v2987 = vld [vmem:[#allocation15 + $0x10] sm:$0xff]
        %v2988 = vld [vmem:[#allocation15 + $0x18] sm:$0xff]
        %v2989 = vld [vmem:[#allocation15 + $0x20] sm:$0xff]
        %v2990 = vld [vmem:[#allocation15 + $0x28] sm:$0xff]
        %v2991 = vld [vmem:[#allocation15 + $0x30] sm:$0xff]
        %v2992 = vld [vmem:[#allocation15 + $0x38] sm:$0xff]
        %v2993 = vld [vmem:[#allocation15 + $0x40] sm:$0xff]
        %v2994 = vld [vmem:[#allocation15 + $0x48] sm:$0xff]
        %v2995 = vld [vmem:[#allocation15 + $0x50] sm:$0xff]
        %v2996 = vld [vmem:[#allocation15 + $0x58] sm:$0xff]
        %v2997 = vld [vmem:[#allocation15 + $0x60] sm:$0xff]
        %v2998 = vld [vmem:[#allocation15 + $0x68] sm:$0xff]
        %v2999 = vld [vmem:[#allocation15 + $0x70] sm:$0xff]
        %v3000 = vld [vmem:[#allocation15 + $0x78] sm:$0xff]
        %v3001 = vld [vmem:[#allocation15 + $0x80] sm:$0xff]
        %v3002 = vld [vmem:[#allocation15 + $0x88] sm:$0xff]
        %v3003 = vld [vmem:[#allocation15 + $0x90] sm:$0xff]
        %v3004 = vld [vmem:[#allocation15 + $0x98] sm:$0xff]
        %v3005 = vld [vmem:[#allocation15 + $0xa0] sm:$0xff]
        %v3006 = vld [vmem:[#allocation15 + $0xa8] sm:$0xff]
        %v3007 = vld [vmem:[#allocation15 + $0xb0] sm:$0xff]
        %v3008 = vld [vmem:[#allocation15 + $0xb8] sm:$0xff]
        %v3009 = vld [vmem:[#allocation15 + $0xc0] sm:$0xff]
        %v3010 = vld [vmem:[#allocation15 + $0xc8] sm:$0xff]
        %v3011 = vld [vmem:[#allocation15 + $0xd0] sm:$0xff]
        %v3012 = vld [vmem:[#allocation15 + $0xd8] sm:$0xff]
        %v3013 = vld [vmem:[#allocation15 + $0xe0] sm:$0xff]
        %v3014 = vld [vmem:[#allocation15 + $0xe8] sm:$0xff]
        %v3015 = vld [vmem:[#allocation15 + $0xf0] sm:$0xff]
        %v3016 = vld [vmem:[#allocation15 + $0xf8] sm:$0xff]
        %v3017 = vld [vmem:[#allocation15 + $0x100] sm:$0xff]
        %v3018 = vld [vmem:[#allocation15 + $0x108] sm:$0xff]
        %v3019 = vld [vmem:[#allocation15 + $0x110] sm:$0xff]
        %v3020 = vld [vmem:[#allocation15 + $0x118] sm:$0xff]
        %v3021 = vld [vmem:[#allocation15 + $0x120] sm:$0xff]
        %v3022 = vld [vmem:[#allocation15 + $0x128] sm:$0xff]
        %v3023 = vld [vmem:[#allocation15 + $0x130] sm:$0xff]
        %v3024 = vld [vmem:[#allocation15 + $0x138] sm:$0xff]
        %v3025 = vld [vmem:[#allocation15 + $0x140] sm:$0xff]
        %v3026 = vld [vmem:[#allocation15 + $0x148] sm:$0xff]
        %v3027 = vld [vmem:[#allocation15 + $0x150] sm:$0xff]
        %v3028 = vld [vmem:[#allocation15 + $0x158] sm:$0xff]
        %v3029 = vld [vmem:[#allocation15 + $0x160] sm:$0xff]
        %v3030 = vld [vmem:[#allocation15 + $0x168] sm:$0xff]
        %v3031 = vld [vmem:[#allocation15 + $0x170] sm:$0xff]
        %v3032 = vld [vmem:[#allocation15 + $0x178] sm:$0xff]
        %v3033 = vld [vmem:[#allocation15 + $0x180] sm:$0xff]
        %v3034 = vld [vmem:[#allocation15 + $0x188] sm:$0xff]
        %v3035 = vld [vmem:[#allocation15 + $0x190] sm:$0xff]
        %v3036 = vld [vmem:[#allocation15 + $0x198] sm:$0xff]
        %v3037 = vld [vmem:[#allocation15 + $0x1a0] sm:$0xff]
        %v3038 = vld [vmem:[#allocation15 + $0x1a8] sm:$0xff]
        %v3039 = vld [vmem:[#allocation15 + $0x1b0] sm:$0xff]
        %v3040 = vld [vmem:[#allocation15 + $0x1b8] sm:$0xff]
        %v3041 = vld [vmem:[#allocation15 + $0x1c0] sm:$0xff]
        %v3042 = vld [vmem:[#allocation15 + $0x1c8] sm:$0xff]
        %v3043 = vld [vmem:[#allocation15 + $0x1d0] sm:$0xff]
        %v3044 = vld [vmem:[#allocation15 + $0x1d8] sm:$0xff]
        %v3045 = vld [vmem:[#allocation15 + $0x1e0] sm:$0xff]
        %v3046 = vld [vmem:[#allocation15 + $0x1e8] sm:$0xff]
        %v3047 = vld [vmem:[#allocation15 + $0x1f0] sm:$0xff]
        %v3048 = vld [vmem:[#allocation15 + $0x1f8] sm:$0xff]
        %v3049 = vld [vmem:[#allocation15 + $0x200] sm:$0xff]
        %v3050 = vld [vmem:[#allocation15 + $0x208] sm:$0xff]
        %v3051 = vld [vmem:[#allocation15 + $0x210] sm:$0xff]
        %v3052 = vld [vmem:[#allocation15 + $0x218] sm:$0xff]
        %v3053 = vld [vmem:[#allocation15 + $0x220] sm:$0xff]
        %v3054 = vld [vmem:[#allocation15 + $0x228] sm:$0xff]
        %v3055 = vld [vmem:[#allocation15 + $0x230] sm:$0xff]
        %v3056 = vld [vmem:[#allocation15 + $0x238] sm:$0xff]
        %v3057 = vld [vmem:[#allocation15 + $0x240] sm:$0xff]
        %v3058 = vld [vmem:[#allocation15 + $0x248] sm:$0xff]
        %v3059 = vld [vmem:[#allocation15 + $0x250] sm:$0xff]
        %v3060 = vld [vmem:[#allocation15 + $0x258] sm:$0xff]
        %v3061 = vld [vmem:[#allocation15 + $0x260] sm:$0xff]
        %v3062 = vld [vmem:[#allocation15 + $0x268] sm:$0xff]
        %v3063 = vld [vmem:[#allocation15 + $0x270] sm:$0xff]
        %v3064 = vld [vmem:[#allocation15 + $0x278] sm:$0xff]
        %v3065 = vld [vmem:[#allocation15 + $0x280] sm:$0xff]
        %v3066 = vld [vmem:[#allocation15 + $0x288] sm:$0xff]
        %v3067 = vld [vmem:[#allocation15 + $0x290] sm:$0xff]
        %v3068 = vld [vmem:[#allocation15 + $0x298] sm:$0xff]
        %v3069 = vld [vmem:[#allocation15 + $0x2a0] sm:$0xff]
        %v3070 = vld [vmem:[#allocation15 + $0x2a8] sm:$0xff]
        %v3071 = vld [vmem:[#allocation15 + $0x2b0] sm:$0xff]
        %v3072 = vld [vmem:[#allocation15 + $0x2b8] sm:$0xff]
        %v3073 = vld [vmem:[#allocation15 + $0x2c0] sm:$0xff]
        %v3074 = vld [vmem:[#allocation15 + $0x2c8] sm:$0xff]
        %v3075 = vld [vmem:[#allocation15 + $0x2d0] sm:$0xff]
        %v3076 = vld [vmem:[#allocation15 + $0x2d8] sm:$0xff]
        %v3077 = vld [vmem:[#allocation15 + $0x2e0] sm:$0xff]
        %v3078 = vld [vmem:[#allocation15 + $0x2e8] sm:$0xff]
        %v3079 = vld [vmem:[#allocation15 + $0x2f0] sm:$0xff]
        %v3080 = vld [vmem:[#allocation15 + $0x2f8] sm:$0xff]
        %v3081 = vld [vmem:[#allocation15 + $0x300] sm:$0xff]
        %v3082 = vld [vmem:[#allocation15 + $0x308] sm:$0xff]
        %v3083 = vld [vmem:[#allocation15 + $0x310] sm:$0xff]
        %v3084 = vld [vmem:[#allocation15 + $0x318] sm:$0xff]
        %v3085 = vld [vmem:[#allocation15 + $0x320] sm:$0xff]
        %v3086 = vld [vmem:[#allocation15 + $0x328] sm:$0xff]
        %v3087 = vld [vmem:[#allocation15 + $0x330] sm:$0xff]
        %v3088 = vld [vmem:[#allocation15 + $0x338] sm:$0xff]
        %v3089 = vld [vmem:[#allocation15 + $0x340] sm:$0xff]
        %v3090 = vld [vmem:[#allocation15 + $0x348] sm:$0xff]
        %v3091 = vld [vmem:[#allocation15 + $0x350] sm:$0xff]
        %v3092 = vld [vmem:[#allocation15 + $0x358] sm:$0xff]
        %v3093 = vld [vmem:[#allocation15 + $0x360] sm:$0xff]
        %v3094 = vld [vmem:[#allocation15 + $0x368] sm:$0xff]
        %v3095 = vld [vmem:[#allocation15 + $0x370] sm:$0xff]
        %v3096 = vld [vmem:[#allocation15 + $0x378] sm:$0xff]
        %v3097 = vld [vmem:[#allocation15 + $0x380] sm:$0xff]
        %v3098 = vld [vmem:[#allocation15 + $0x388] sm:$0xff]
        %v3099 = vld [vmem:[#allocation15 + $0x390] sm:$0xff]
        %v3100 = vld [vmem:[#allocation15 + $0x398] sm:$0xff]
        %v3101 = vld [vmem:[#allocation15 + $0x3a0] sm:$0xff]
        %v3102 = vld [vmem:[#allocation15 + $0x3a8] sm:$0xff]
        %v3103 = vld [vmem:[#allocation15 + $0x3b0] sm:$0xff]
        %v3104 = vld [vmem:[#allocation15 + $0x3b8] sm:$0xff]
        %v3105 = vld [vmem:[#allocation15 + $0x3c0] sm:$0xff]
        %v3106 = vld [vmem:[#allocation15 + $0x3c8] sm:$0xff]
        %v3107 = vld [vmem:[#allocation15 + $0x3d0] sm:$0xff]
        %v3108 = vld [vmem:[#allocation15 + $0x3d8] sm:$0xff]
        %v3109 = vld [vmem:[#allocation15 + $0x3e0] sm:$0xff]
        %v3110 = vld [vmem:[#allocation15 + $0x3e8] sm:$0xff]
        %v3111 = vld [vmem:[#allocation15 + $0x3f0] sm:$0xff]
        %v3112 = vld [vmem:[#allocation15 + $0x3f8] sm:$0xff]
        %v3113 = vld [vmem:[#allocation15 + $0x400] sm:$0xff]
        %v3114 = vld [vmem:[#allocation15 + $0x408] sm:$0xff]
        %v3115 = vld [vmem:[#allocation15 + $0x410] sm:$0xff]
        %v3116 = vld [vmem:[#allocation15 + $0x418] sm:$0xff]
        %v3117 = vld [vmem:[#allocation15 + $0x420] sm:$0xff]
        %v3118 = vld [vmem:[#allocation15 + $0x428] sm:$0xff]
        %v3119 = vld [vmem:[#allocation15 + $0x430] sm:$0xff]
        %v3120 = vld [vmem:[#allocation15 + $0x438] sm:$0xff]
        %v3121 = vld [vmem:[#allocation15 + $0x440] sm:$0xff]
        %v3122 = vld [vmem:[#allocation15 + $0x448] sm:$0xff]
        %v3123 = vld [vmem:[#allocation15 + $0x450] sm:$0xff]
        %v3124 = vld [vmem:[#allocation15 + $0x458] sm:$0xff]
        %v3125 = vld [vmem:[#allocation15 + $0x460] sm:$0xff]
        %v3126 = vld [vmem:[#allocation15 + $0x468] sm:$0xff]
        %v3127 = vld [vmem:[#allocation15 + $0x470] sm:$0xff]
        %v3128 = vld [vmem:[#allocation15 + $0x478] sm:$0xff]
        %v3129 = vld [vmem:[#allocation15 + $0x480] sm:$0xff]
        %v3130 = vld [vmem:[#allocation15 + $0x488] sm:$0xff]
        %v3131 = vld [vmem:[#allocation15 + $0x490] sm:$0xff]
        %v3132 = vld [vmem:[#allocation15 + $0x498] sm:$0xff]
        %v3133 = vld [vmem:[#allocation15 + $0x4a0] sm:$0xff]
        %v3134 = vld [vmem:[#allocation15 + $0x4a8] sm:$0xff]
        %v3135 = vld [vmem:[#allocation15 + $0x4b0] sm:$0xff]
        %v3136 = vld [vmem:[#allocation15 + $0x4b8] sm:$0xff]
        %v3137 = vld [vmem:[#allocation15 + $0x4c0] sm:$0xff]
        %v3138 = vld [vmem:[#allocation15 + $0x4c8] sm:$0xff]
        %v3139 = vld [vmem:[#allocation15 + $0x4d0] sm:$0xff]
        %v3140 = vld [vmem:[#allocation15 + $0x4d8] sm:$0xff]
        %v3141 = vld [vmem:[#allocation15 + $0x4e0] sm:$0xff]
        %v3142 = vld [vmem:[#allocation15 + $0x4e8] sm:$0xff]
        %v3143 = vld [vmem:[#allocation15 + $0x4f0] sm:$0xff]
        %v3144 = vld [vmem:[#allocation15 + $0x4f8] sm:$0xff]
        %v3145 = vld [vmem:[#allocation15 + $0x500] sm:$0xff]
        %v3146 = vld [vmem:[#allocation15 + $0x508] sm:$0xff]
        %v3147 = vld [vmem:[#allocation15 + $0x510] sm:$0xff]
        %v3148 = vld [vmem:[#allocation15 + $0x518] sm:$0xff]
        %v3149 = vld [vmem:[#allocation15 + $0x520] sm:$0xff]
        %v3150 = vld [vmem:[#allocation15 + $0x528] sm:$0xff]
        %v3151 = vld [vmem:[#allocation15 + $0x530] sm:$0xff]
        %v3152 = vld [vmem:[#allocation15 + $0x538] sm:$0xff]
        %v3153 = vld [vmem:[#allocation15 + $0x540] sm:$0xff]
        %v3154 = vld [vmem:[#allocation15 + $0x548] sm:$0xff]
        %v3155 = vld [vmem:[#allocation15 + $0x550] sm:$0xff]
        %v3156 = vld [vmem:[#allocation15 + $0x558] sm:$0xff]
        %v3157 = vld [vmem:[#allocation15 + $0x560] sm:$0xff]
        %v3158 = vld [vmem:[#allocation15 + $0x568] sm:$0xff]
        %v3159 = vld [vmem:[#allocation15 + $0x570] sm:$0xff]
        %v3160 = vld [vmem:[#allocation15 + $0x578] sm:$0xff]
        %v3161 = vld [vmem:[#allocation15 + $0x580] sm:$0xff]
        %v3162 = vld [vmem:[#allocation15 + $0x588] sm:$0xff]
        %v3163 = vld [vmem:[#allocation15 + $0x590] sm:$0xff]
        %v3164 = vld [vmem:[#allocation15 + $0x598] sm:$0xff]
        %v3165 = vld [vmem:[#allocation15 + $0x5a0] sm:$0xff]
        %v3166 = vld [vmem:[#allocation15 + $0x5a8] sm:$0xff]
        %v3167 = vld [vmem:[#allocation15 + $0x5b0] sm:$0xff]
        %v3168 = vld [vmem:[#allocation15 + $0x5b8] sm:$0xff]
        %v3169 = vld [vmem:[#allocation15 + $0x5c0] sm:$0xff]
        %v3170 = vld [vmem:[#allocation15 + $0x5c8] sm:$0xff]
        %v3171 = vld [vmem:[#allocation15 + $0x5d0] sm:$0xff]
        %v3172 = vld [vmem:[#allocation15 + $0x5d8] sm:$0xff]
        %v3173 = vld [vmem:[#allocation15 + $0x5e0] sm:$0xff]
        %v3174 = vld [vmem:[#allocation15 + $0x5e8] sm:$0xff]
        %v3175 = vld [vmem:[#allocation15 + $0x5f0] sm:$0xff]
        %v3176 = vld [vmem:[#allocation15 + $0x5f8] sm:$0xff]
        %v3177 = vld [vmem:[#allocation15 + $0x600] sm:$0xff]
        %v3178 = vld [vmem:[#allocation15 + $0x608] sm:$0xff]
        %v3179 = vld [vmem:[#allocation15 + $0x610] sm:$0xff]
        %v3180 = vld [vmem:[#allocation15 + $0x618] sm:$0xff]
        %v3181 = vld [vmem:[#allocation15 + $0x620] sm:$0xff]
        %v3182 = vld [vmem:[#allocation15 + $0x628] sm:$0xff]
        %v3183 = vld [vmem:[#allocation15 + $0x630] sm:$0xff]
        %v3184 = vld [vmem:[#allocation15 + $0x638] sm:$0xff]
        %v3185 = vld [vmem:[#allocation15 + $0x640] sm:$0xff]
        %v3186 = vld [vmem:[#allocation15 + $0x648] sm:$0xff]
        %v3187 = vld [vmem:[#allocation15 + $0x650] sm:$0xff]
        %v3188 = vld [vmem:[#allocation15 + $0x658] sm:$0xff]
        %v3189 = vld [vmem:[#allocation15 + $0x660] sm:$0xff]
        %v3190 = vld [vmem:[#allocation15 + $0x668] sm:$0xff]
        %v3191 = vld [vmem:[#allocation15 + $0x670] sm:$0xff]
        %v3192 = vld [vmem:[#allocation15 + $0x678] sm:$0xff]
        %v3193 = vld [vmem:[#allocation15 + $0x680] sm:$0xff]
        %v3194 = vld [vmem:[#allocation15 + $0x688] sm:$0xff]
        %v3195 = vld [vmem:[#allocation15 + $0x690] sm:$0xff]
        %v3196 = vld [vmem:[#allocation15 + $0x698] sm:$0xff]
        %v3197 = vld [vmem:[#allocation15 + $0x6a0] sm:$0xff]
        %v3198 = vld [vmem:[#allocation15 + $0x6a8] sm:$0xff]
        %v3199 = vld [vmem:[#allocation15 + $0x6b0] sm:$0xff]
        %v3200 = vld [vmem:[#allocation15 + $0x6b8] sm:$0xff]
        %v3201 = vld [vmem:[#allocation15 + $0x6c0] sm:$0xff]
        %v3202 = vld [vmem:[#allocation15 + $0x6c8] sm:$0xff]
        %v3203 = vld [vmem:[#allocation15 + $0x6d0] sm:$0xff]
        %v3204 = vld [vmem:[#allocation15 + $0x6d8] sm:$0xff]
        %v3205 = vld [vmem:[#allocation15 + $0x6e0] sm:$0xff]
        %v3206 = vld [vmem:[#allocation15 + $0x6e8] sm:$0xff]
        %v3207 = vld [vmem:[#allocation15 + $0x6f0] sm:$0xff]
        %v3208 = vld [vmem:[#allocation15 + $0x6f8] sm:$0xff]
        %v3209 = vld [vmem:[#allocation15 + $0x700] sm:$0xff]
        %v3210 = vld [vmem:[#allocation15 + $0x708] sm:$0xff]
        %v3211 = vld [vmem:[#allocation15 + $0x710] sm:$0xff]
        %v3212 = vld [vmem:[#allocation15 + $0x718] sm:$0xff]
        %v3213 = vld [vmem:[#allocation15 + $0x720] sm:$0xff]
        %v3214 = vld [vmem:[#allocation15 + $0x728] sm:$0xff]
        %v3215 = vld [vmem:[#allocation15 + $0x730] sm:$0xff]
        %v3216 = vld [vmem:[#allocation15 + $0x738] sm:$0xff]
        %v3217 = vld [vmem:[#allocation15 + $0x740] sm:$0xff]
        %v3218 = vld [vmem:[#allocation15 + $0x748] sm:$0xff]
        %v3219 = vld [vmem:[#allocation15 + $0x750] sm:$0xff]
        %v3220 = vld [vmem:[#allocation15 + $0x758] sm:$0xff]
        %v3221 = vld [vmem:[#allocation15 + $0x760] sm:$0xff]
        %v3222 = vld [vmem:[#allocation15 + $0x768] sm:$0xff]
        %v3223 = vld [vmem:[#allocation15 + $0x770] sm:$0xff]
        %v3224 = vld [vmem:[#allocation15 + $0x778] sm:$0xff]
        %v3225 = vld [vmem:[#allocation15 + $0x780] sm:$0xff]
        %v3226 = vld [vmem:[#allocation15 + $0x788] sm:$0xff]
        %v3227 = vld [vmem:[#allocation15 + $0x790] sm:$0xff]
        %v3228 = vld [vmem:[#allocation15 + $0x798] sm:$0xff]
        %v3229 = vld [vmem:[#allocation15 + $0x7a0] sm:$0xff]
        %v3230 = vld [vmem:[#allocation15 + $0x7a8] sm:$0xff]
        %v3231 = vld [vmem:[#allocation15 + $0x7b0] sm:$0xff]
        %v3232 = vld [vmem:[#allocation15 + $0x7b8] sm:$0xff]
        %v3233 = vld [vmem:[#allocation15 + $0x7c0] sm:$0xff]
        %v3234 = vld [vmem:[#allocation15 + $0x7c8] sm:$0xff]
        %v3235 = vld [vmem:[#allocation15 + $0x7d0] sm:$0xff]
        %v3236 = vld [vmem:[#allocation15 + $0x7d8] sm:$0xff]
        %v3237 = vld [vmem:[#allocation15 + $0x7e0] sm:$0xff]
        %v3238 = vld [vmem:[#allocation15 + $0x7e8] sm:$0xff]
        %v3239 = vld [vmem:[#allocation15 + $0x7f0] sm:$0xff]
        %v3240 = vld [vmem:[#allocation15 + $0x7f8] sm:$0xff]
        %v3241 = vld [vmem:[#allocation15 + $0x800] sm:$0xff]
        %v3242 = vld [vmem:[#allocation15 + $0x808] sm:$0xff]
        %v3243 = vld [vmem:[#allocation15 + $0x810] sm:$0xff]
        %v3244 = vld [vmem:[#allocation15 + $0x818] sm:$0xff]
        %v3245 = vld [vmem:[#allocation15 + $0x820] sm:$0xff]
        %v3246 = vld [vmem:[#allocation15 + $0x828] sm:$0xff]
        %v3247 = vld [vmem:[#allocation15 + $0x830] sm:$0xff]
        %v3248 = vld [vmem:[#allocation15 + $0x838] sm:$0xff]
        %v3249 = vld [vmem:[#allocation15 + $0x840] sm:$0xff]
        %v3250 = vld [vmem:[#allocation15 + $0x848] sm:$0xff]
        %v3251 = vld [vmem:[#allocation15 + $0x850] sm:$0xff]
        %v3252 = vld [vmem:[#allocation15 + $0x858] sm:$0xff]
        %v3253 = vld [vmem:[#allocation15 + $0x860] sm:$0xff]
        %v3254 = vld [vmem:[#allocation15 + $0x868] sm:$0xff]
        %v3255 = vld [vmem:[#allocation15 + $0x870] sm:$0xff]
        %v3256 = vld [vmem:[#allocation15 + $0x878] sm:$0xff]
        %v3257 = vld [vmem:[#allocation15 + $0x880] sm:$0xff]
        %v3258 = vld [vmem:[#allocation15 + $0x888] sm:$0xff]
        %v3259 = vld [vmem:[#allocation15 + $0x890] sm:$0xff]
        %v3260 = vld [vmem:[#allocation15 + $0x898] sm:$0xff]
        %v3261 = vld [vmem:[#allocation15 + $0x8a0] sm:$0xff]
        %v3262 = vld [vmem:[#allocation15 + $0x8a8] sm:$0xff]
        %v3263 = vld [vmem:[#allocation15 + $0x8b0] sm:$0xff]
        %v3264 = vld [vmem:[#allocation15 + $0x8b8] sm:$0xff]
        %v3265 = vld [vmem:[#allocation15 + $0x8c0] sm:$0xff]
        %v3266 = vld [vmem:[#allocation15 + $0x8c8] sm:$0xff]
        %v3267 = vld [vmem:[#allocation15 + $0x8d0] sm:$0xff]
        %v3268 = vld [vmem:[#allocation15 + $0x8d8] sm:$0xff]
        %v3269 = vld [vmem:[#allocation15 + $0x8e0] sm:$0xff]
        %v3270 = vld [vmem:[#allocation15 + $0x8e8] sm:$0xff]
        %v3271 = vld [vmem:[#allocation15 + $0x8f0] sm:$0xff]
        %v3272 = vld [vmem:[#allocation15 + $0x8f8] sm:$0xff]
        %v3273 = vld [vmem:[#allocation15 + $0x900] sm:$0xff]
        %v3274 = vld [vmem:[#allocation15 + $0x908] sm:$0xff]
        %v3275 = vld [vmem:[#allocation15 + $0x910] sm:$0xff]
        %v3276 = vld [vmem:[#allocation15 + $0x918] sm:$0xff]
        %v3277 = vld [vmem:[#allocation15 + $0x920] sm:$0xff]
        %v3278 = vld [vmem:[#allocation15 + $0x928] sm:$0xff]
        %v3279 = vld [vmem:[#allocation15 + $0x930] sm:$0xff]
        %v3280 = vld [vmem:[#allocation15 + $0x938] sm:$0xff]
        %v3281 = vld [vmem:[#allocation15 + $0x940] sm:$0xff]
        %v3282 = vld [vmem:[#allocation15 + $0x948] sm:$0xff]
        %v3283 = vld [vmem:[#allocation15 + $0x950] sm:$0xff]
        %v3284 = vld [vmem:[#allocation15 + $0x958] sm:$0xff]
        %v3285 = vld [vmem:[#allocation15 + $0x960] sm:$0xff]
        %v3286 = vld [vmem:[#allocation15 + $0x968] sm:$0xff]
        %v3287 = vld [vmem:[#allocation15 + $0x970] sm:$0xff]
        %v3288 = vld [vmem:[#allocation15 + $0x978] sm:$0xff]
        %v3289 = vld [vmem:[#allocation15 + $0x980] sm:$0xff]
        %v3290 = vld [vmem:[#allocation15 + $0x988] sm:$0xff]
        %v3291 = vld [vmem:[#allocation15 + $0x990] sm:$0xff]
        %v3292 = vld [vmem:[#allocation15 + $0x998] sm:$0xff]
        %v3293 = vld [vmem:[#allocation15 + $0x9a0] sm:$0xff]
        %v3294 = vld [vmem:[#allocation15 + $0x9a8] sm:$0xff]
        %v3295 = vld [vmem:[#allocation15 + $0x9b0] sm:$0xff]
        %v3296 = vld [vmem:[#allocation15 + $0x9b8] sm:$0xff]
        %v3297 = vld [vmem:[#allocation15 + $0x9c0] sm:$0xff]
        %v3298 = vld [vmem:[#allocation15 + $0x9c8] sm:$0xff]
        %v3299 = vld [vmem:[#allocation15 + $0x9d0] sm:$0xff]
        %v3300 = vld [vmem:[#allocation15 + $0x9d8] sm:$0xff]
        %v3301 = vld [vmem:[#allocation15 + $0x9e0] sm:$0xff]
        %v3302 = vld [vmem:[#allocation15 + $0x9e8] sm:$0xff]
        %v3303 = vld [vmem:[#allocation15 + $0x9f0] sm:$0xff]
        %v3304 = vld [vmem:[#allocation15 + $0x9f8] sm:$0xff]
        %v3305 = vld [vmem:[#allocation15 + $0xa00] sm:$0xff]
        %v3306 = vld [vmem:[#allocation15 + $0xa08] sm:$0xff]
        %v3307 = vld [vmem:[#allocation15 + $0xa10] sm:$0xff]
        %v3308 = vld [vmem:[#allocation15 + $0xa18] sm:$0xff]
        %v3309 = vld [vmem:[#allocation15 + $0xa20] sm:$0xff]
        %v3310 = vld [vmem:[#allocation15 + $0xa28] sm:$0xff]
        %v3311 = vld [vmem:[#allocation15 + $0xa30] sm:$0xff]
        %v3312 = vld [vmem:[#allocation15 + $0xa38] sm:$0xff]
        %v3313 = vld [vmem:[#allocation15 + $0xa40] sm:$0xff]
        %v3314 = vld [vmem:[#allocation15 + $0xa48] sm:$0xff]
        %v3315 = vld [vmem:[#allocation15 + $0xa50] sm:$0xff]
        %v3316 = vld [vmem:[#allocation15 + $0xa58] sm:$0xff]
        %v3317 = vld [vmem:[#allocation15 + $0xa60] sm:$0xff]
        %v3318 = vld [vmem:[#allocation15 + $0xa68] sm:$0xff]
        %v3319 = vld [vmem:[#allocation15 + $0xa70] sm:$0xff]
        %v3320 = vld [vmem:[#allocation15 + $0xa78] sm:$0xff]
        %v3321 = vld [vmem:[#allocation15 + $0xa80] sm:$0xff]
        %v3322 = vld [vmem:[#allocation15 + $0xa88] sm:$0xff]
        %v3323 = vld [vmem:[#allocation15 + $0xa90] sm:$0xff]
        %v3324 = vld [vmem:[#allocation15 + $0xa98] sm:$0xff]
        %v3325 = vld [vmem:[#allocation15 + $0xaa0] sm:$0xff]
        %v3326 = vld [vmem:[#allocation15 + $0xaa8] sm:$0xff]
        %v3327 = vld [vmem:[#allocation15 + $0xab0] sm:$0xff]
        %v3328 = vld [vmem:[#allocation15 + $0xab8] sm:$0xff]
        %v3329 = vld [vmem:[#allocation15 + $0xac0] sm:$0xff]
        %v3330 = vld [vmem:[#allocation15 + $0xac8] sm:$0xff]
        %v3331 = vld [vmem:[#allocation15 + $0xad0] sm:$0xff]
        %v3332 = vld [vmem:[#allocation15 + $0xad8] sm:$0xff]
        %v3333 = vld [vmem:[#allocation15 + $0xae0] sm:$0xff]
        %v3334 = vld [vmem:[#allocation15 + $0xae8] sm:$0xff]
        %v3335 = vld [vmem:[#allocation15 + $0xaf0] sm:$0xff]
        %v3336 = vld [vmem:[#allocation15 + $0xaf8] sm:$0xff]
        %v3337 = vld [vmem:[#allocation15 + $0xb00] sm:$0xff]
        %v3338 = vld [vmem:[#allocation15 + $0xb08] sm:$0xff]
        %v3339 = vld [vmem:[#allocation15 + $0xb10] sm:$0xff]
        %v3340 = vld [vmem:[#allocation15 + $0xb18] sm:$0xff]
        %v3341 = vld [vmem:[#allocation15 + $0xb20] sm:$0xff]
        %v3342 = vld [vmem:[#allocation15 + $0xb28] sm:$0xff]
        %v3343 = vld [vmem:[#allocation15 + $0xb30] sm:$0xff]
        %v3344 = vld [vmem:[#allocation15 + $0xb38] sm:$0xff]
        %v3345 = vld [vmem:[#allocation15 + $0xb40] sm:$0xff]
        %v3346 = vld [vmem:[#allocation15 + $0xb48] sm:$0xff]
        %v3347 = vld [vmem:[#allocation15 + $0xb50] sm:$0xff]
        %v3348 = vld [vmem:[#allocation15 + $0xb58] sm:$0xff]
        %v3349 = vld [vmem:[#allocation15 + $0xb60] sm:$0xff]
        %v3350 = vld [vmem:[#allocation15 + $0xb68] sm:$0xff]
        %v3351 = vld [vmem:[#allocation15 + $0xb70] sm:$0xff]
        %v3352 = vld [vmem:[#allocation15 + $0xb78] sm:$0xff]
        %v3353 = vld [vmem:[#allocation15 + $0xb80] sm:$0xff]
        %v3354 = vld [vmem:[#allocation15 + $0xb88] sm:$0xff]
        %v3355 = vld [vmem:[#allocation15 + $0xb90] sm:$0xff]
        %v3356 = vld [vmem:[#allocation15 + $0xb98] sm:$0xff]
        %v3357 = vld [vmem:[#allocation15 + $0xba0] sm:$0xff]
        %v3358 = vld [vmem:[#allocation15 + $0xba8] sm:$0xff]
        %v3359 = vld [vmem:[#allocation15 + $0xbb0] sm:$0xff]
        %v3360 = vld [vmem:[#allocation15 + $0xbb8] sm:$0xff]
        %v3361 = vld [vmem:[#allocation15 + $0xbc0] sm:$0xff]
        %v3362 = vld [vmem:[#allocation15 + $0xbc8] sm:$0xff]
        %v3363 = vld [vmem:[#allocation15 + $0xbd0] sm:$0xff]
        %v3364 = vld [vmem:[#allocation15 + $0xbd8] sm:$0xff]
        %v3365 = vld [vmem:[#allocation15 + $0xbe0] sm:$0xff]
        %v3366 = vld [vmem:[#allocation15 + $0xbe8] sm:$0xff]
        %v3367 = vld [vmem:[#allocation15 + $0xbf0] sm:$0xff]
        %v3368 = vld [vmem:[#allocation15 + $0xbf8] sm:$0xff]
        %v3369 = vld [vmem:[#allocation15 + $0xc00] sm:$0xff]
        %v3370 = vld [vmem:[#allocation15 + $0xc08] sm:$0xff]
        %v3371 = vld [vmem:[#allocation15 + $0xc10] sm:$0xff]
        %v3372 = vld [vmem:[#allocation15 + $0xc18] sm:$0xff]
        %v3373 = vld [vmem:[#allocation15 + $0xc20] sm:$0xff]
        %v3374 = vld [vmem:[#allocation15 + $0xc28] sm:$0xff]
        %v3375 = vld [vmem:[#allocation15 + $0xc30] sm:$0xff]
        %v3376 = vld [vmem:[#allocation15 + $0xc38] sm:$0xff]
        %v3377 = vld [vmem:[#allocation15 + $0xc40] sm:$0xff]
        %v3378 = vld [vmem:[#allocation15 + $0xc48] sm:$0xff]
        %v3379 = vld [vmem:[#allocation15 + $0xc50] sm:$0xff]
        %v3380 = vld [vmem:[#allocation15 + $0xc58] sm:$0xff]
        %v3381 = vld [vmem:[#allocation15 + $0xc60] sm:$0xff]
        %v3382 = vld [vmem:[#allocation15 + $0xc68] sm:$0xff]
        %v3383 = vld [vmem:[#allocation15 + $0xc70] sm:$0xff]
        %v3384 = vld [vmem:[#allocation15 + $0xc78] sm:$0xff]
        %v3385 = vld [vmem:[#allocation15 + $0xc80] sm:$0xff]
        %v3386 = vld [vmem:[#allocation15 + $0xc88] sm:$0xff]
        %v3387 = vld [vmem:[#allocation15 + $0xc90] sm:$0xff]
        %v3388 = vld [vmem:[#allocation15 + $0xc98] sm:$0xff]
        %v3389 = vld [vmem:[#allocation15 + $0xca0] sm:$0xff]
        %v3390 = vld [vmem:[#allocation15 + $0xca8] sm:$0xff]
        %v3391 = vld [vmem:[#allocation15 + $0xcb0] sm:$0xff]
        %v3392 = vld [vmem:[#allocation15 + $0xcb8] sm:$0xff]
        %v3393 = vld [vmem:[#allocation15 + $0xcc0] sm:$0xff]
        %v3394 = vld [vmem:[#allocation15 + $0xcc8] sm:$0xff]
        %v3395 = vld [vmem:[#allocation15 + $0xcd0] sm:$0xff]
        %v3396 = vld [vmem:[#allocation15 + $0xcd8] sm:$0xff]
        %v3397 = vld [vmem:[#allocation15 + $0xce0] sm:$0xff]
        %v3398 = vld [vmem:[#allocation15 + $0xce8] sm:$0xff]
        %v3399 = vld [vmem:[#allocation15 + $0xcf0] sm:$0xff]
        %v3400 = vld [vmem:[#allocation15 + $0xcf8] sm:$0xff]
        %v3401 = vld [vmem:[#allocation15 + $0xd00] sm:$0xff]
        %v3402 = vld [vmem:[#allocation15 + $0xd08] sm:$0xff]
        %v3403 = vld [vmem:[#allocation15 + $0xd10] sm:$0xff]
        %v3404 = vld [vmem:[#allocation15 + $0xd18] sm:$0xff]
        %v3405 = vld [vmem:[#allocation15 + $0xd20] sm:$0xff]
        %v3406 = vld [vmem:[#allocation15 + $0xd28] sm:$0xff]
        %v3407 = vld [vmem:[#allocation15 + $0xd30] sm:$0xff]
        %v3408 = vld [vmem:[#allocation15 + $0xd38] sm:$0xff]
        %v3409 = vld [vmem:[#allocation15 + $0xd40] sm:$0xff]
        %v3410 = vld [vmem:[#allocation15 + $0xd48] sm:$0xff]
        %v3411 = vld [vmem:[#allocation15 + $0xd50] sm:$0xff]
        %v3412 = vld [vmem:[#allocation15 + $0xd58] sm:$0xff]
        %v3413 = vld [vmem:[#allocation15 + $0xd60] sm:$0xff]
        %v3414 = vld [vmem:[#allocation15 + $0xd68] sm:$0xff]
        %v3415 = vld [vmem:[#allocation15 + $0xd70] sm:$0xff]
        %v3416 = vld [vmem:[#allocation15 + $0xd78] sm:$0xff]
        %v3417 = vld [vmem:[#allocation15 + $0xd80] sm:$0xff]
        %v3418 = vld [vmem:[#allocation15 + $0xd88] sm:$0xff]
        %v3419 = vld [vmem:[#allocation15 + $0xd90] sm:$0xff]
        %v3420 = vld [vmem:[#allocation15 + $0xd98] sm:$0xff]
        %v3421 = vld [vmem:[#allocation15 + $0xda0] sm:$0xff]
        %v3422 = vld [vmem:[#allocation15 + $0xda8] sm:$0xff]
        %v3423 = vld [vmem:[#allocation15 + $0xdb0] sm:$0xff]
        %v3424 = vld [vmem:[#allocation15 + $0xdb8] sm:$0xff]
        %v3425 = vld [vmem:[#allocation15 + $0xdc0] sm:$0xff]
        %v3426 = vld [vmem:[#allocation15 + $0xdc8] sm:$0xff]
        %v3427 = vld [vmem:[#allocation15 + $0xdd0] sm:$0xff]
        %v3428 = vld [vmem:[#allocation15 + $0xdd8] sm:$0xff]
        %v3429 = vld [vmem:[#allocation15 + $0xde0] sm:$0xff]
        %v3430 = vld [vmem:[#allocation15 + $0xde8] sm:$0xff]
        %v3431 = vld [vmem:[#allocation15 + $0xdf0] sm:$0xff]
        %v3432 = vld [vmem:[#allocation15 + $0xdf8] sm:$0xff]
        %v3433 = vld [vmem:[#allocation15 + $0xe00] sm:$0xff]
        %v3434 = vld [vmem:[#allocation15 + $0xe08] sm:$0xff]
        %v3435 = vld [vmem:[#allocation15 + $0xe10] sm:$0xff]
        %v3436 = vld [vmem:[#allocation15 + $0xe18] sm:$0xff]
        %v3437 = vld [vmem:[#allocation15 + $0xe20] sm:$0xff]
        %v3438 = vld [vmem:[#allocation15 + $0xe28] sm:$0xff]
        %v3439 = vld [vmem:[#allocation15 + $0xe30] sm:$0xff]
        %v3440 = vld [vmem:[#allocation15 + $0xe38] sm:$0xff]
        %v3441 = vld [vmem:[#allocation15 + $0xe40] sm:$0xff]
        %v3442 = vld [vmem:[#allocation15 + $0xe48] sm:$0xff]
        %v3443 = vld [vmem:[#allocation15 + $0xe50] sm:$0xff]
        %v3444 = vld [vmem:[#allocation15 + $0xe58] sm:$0xff]
        %v3445 = vld [vmem:[#allocation15 + $0xe60] sm:$0xff]
        %v3446 = vld [vmem:[#allocation15 + $0xe68] sm:$0xff]
        %v3447 = vld [vmem:[#allocation15 + $0xe70] sm:$0xff]
        %v3448 = vld [vmem:[#allocation15 + $0xe78] sm:$0xff]
        %v3449 = vld [vmem:[#allocation15 + $0xe80] sm:$0xff]
        %v3450 = vld [vmem:[#allocation15 + $0xe88] sm:$0xff]
        %v3451 = vld [vmem:[#allocation15 + $0xe90] sm:$0xff]
        %v3452 = vld [vmem:[#allocation15 + $0xe98] sm:$0xff]
        %v3453 = vld [vmem:[#allocation15 + $0xea0] sm:$0xff]
        %v3454 = vld [vmem:[#allocation15 + $0xea8] sm:$0xff]
        %v3455 = vld [vmem:[#allocation15 + $0xeb0] sm:$0xff]
        %v3456 = vld [vmem:[#allocation15 + $0xeb8] sm:$0xff]
        %v3457 = vld [vmem:[#allocation15 + $0xec0] sm:$0xff]
        %v3458 = vld [vmem:[#allocation15 + $0xec8] sm:$0xff]
        %v3459 = vld [vmem:[#allocation15 + $0xed0] sm:$0xff]
        %v3460 = vld [vmem:[#allocation15 + $0xed8] sm:$0xff]
        %v3461 = vld [vmem:[#allocation15 + $0xee0] sm:$0xff]
        %v3462 = vld [vmem:[#allocation15 + $0xee8] sm:$0xff]
        %v3463 = vld [vmem:[#allocation15 + $0xef0] sm:$0xff]
        %v3464 = vld [vmem:[#allocation15 + $0xef8] sm:$0xff]
        %v3465 = vld [vmem:[#allocation15 + $0xf00] sm:$0xff]
        %v3466 = vld [vmem:[#allocation15 + $0xf08] sm:$0xff]
        %v3467 = vld [vmem:[#allocation15 + $0xf10] sm:$0xff]
        %v3468 = vld [vmem:[#allocation15 + $0xf18] sm:$0xff]
        %v3469 = vld [vmem:[#allocation15 + $0xf20] sm:$0xff]
        %v3470 = vld [vmem:[#allocation15 + $0xf28] sm:$0xff]
        %v3471 = vld [vmem:[#allocation15 + $0xf30] sm:$0xff]
        %v3472 = vld [vmem:[#allocation15 + $0xf38] sm:$0xff]
        %v3473 = vld [vmem:[#allocation15 + $0xf40] sm:$0xff]
        %v3474 = vld [vmem:[#allocation15 + $0xf48] sm:$0xff]
        %v3475 = vld [vmem:[#allocation15 + $0xf50] sm:$0xff]
        %v3476 = vld [vmem:[#allocation15 + $0xf58] sm:$0xff]
        %v3477 = vld [vmem:[#allocation15 + $0xf60] sm:$0xff]
        %v3478 = vld [vmem:[#allocation15 + $0xf68] sm:$0xff]
        %v3479 = vld [vmem:[#allocation15 + $0xf70] sm:$0xff]
        %v3480 = vld [vmem:[#allocation15 + $0xf78] sm:$0xff]
        %v3481 = vld [vmem:[#allocation15 + $0xf80] sm:$0xff]
        %v3482 = vld [vmem:[#allocation15 + $0xf88] sm:$0xff]
        %v3483 = vld [vmem:[#allocation15 + $0xf90] sm:$0xff]
        %v3484 = vld [vmem:[#allocation15 + $0xf98] sm:$0xff]
        %v3485 = vld [vmem:[#allocation15 + $0xfa0] sm:$0xff]
        %v3486 = vld [vmem:[#allocation15 + $0xfa8] sm:$0xff]
        %v3487 = vld [vmem:[#allocation15 + $0xfb0] sm:$0xff]
        %v3488 = vld [vmem:[#allocation15 + $0xfb8] sm:$0xff]
        %v3489 = vld [vmem:[#allocation15 + $0xfc0] sm:$0xf]
        %v3490 = vld [vmem:[#allocation15 + $0xfc8] sm:$0xf]
        %v3491 = vld [vmem:[#allocation15 + $0xfd0] sm:$0xf]
        %v3492 = vld [vmem:[#allocation15 + $0xfd8] sm:$0xf]
        %v3493 = vld [vmem:[#allocation15 + $0xfe0] sm:$0xf]
        %v3494 = vld [vmem:[#allocation15 + $0xfe8] sm:$0xf]
        %v3495 = vld [vmem:[#allocation16] sm:$0x3f]
        %v3497 = vperm.slane %v3495, 0
        %v3498 = vperm.slane %v3495, 1
        %v3499 = vperm.slane %v3495, 2
        %v3500 = vperm.slane %v3495, 3
        %v3501 = vperm.slane %v3495, 4
        %v3502 = vperm.slane %v3495, 5
        %v3510 = vsel %vm2236, %v2984, 0
        %v3513 = vsel %vm2240, %v3489, 0
        %v3516 = vsel %vm2240, %v3490, 0
        %v3519 = vsel %vm2240, %v3491, 0
        %v3522 = vsel %vm2240, %v3492, 0
        %v3525 = vsel %vm2240, %v3493, 0
        %v3528 = vsel %vm2240, %v3494, 0
        %3530 = vmatpush.msra.mxu0 %v3075
        %3531 = vmatpush.msra.mxu0 %v3069
        %3532 = vmatpush.msra.mxu0 %v3063
        %3533 = vmatpush.msra.mxu0 %v3057
        %3534 = vmatpush.msra.mxu0 %v3051
        %3535 = vmatpush.msra.mxu0 %v3045
        %3536 = vmatpush.msra.mxu0 %v3039
        %3537 = vmatpush.msra.mxu0 %v3033
        %3538 = vmatpush.msra.mxu0 %v3027
        %3539 = vmatpush.msra.mxu0 %v3021
        %3540 = vmatpush.msra.mxu0 %v3015
        %3541 = vmatpush.msra.mxu0 %v3009
        %3542 = vmatpush.msra.mxu0 %v3003
        %3543 = vmatpush.msra.mxu0 %v2997
        %3544 = vmatpush.msra.mxu0 %v2991
        %3545 = vmatpush.msra.mxu0 %v2985
        %3546 = vmatmul.f32.gmra.mxu0 %v2979
        %v3547 = vpop.f32.mrf.mxu0
        %v3548 = vadd.f32 %v3497, %v3547
        %3549 = vdwg.mxu0
        %3550 = vmatpush.msra.mxu0 %v3171
        %3551 = vmatpush.msra.mxu0 %v3165
        %3552 = vmatpush.msra.mxu0 %v3159
        %3553 = vmatpush.msra.mxu0 %v3153
        %3554 = vmatpush.msra.mxu0 %v3147
        %3555 = vmatpush.msra.mxu0 %v3141
        %3556 = vmatpush.msra.mxu0 %v3135
        %3557 = vmatpush.msra.mxu0 %v3129
        %3558 = vmatpush.msra.mxu0 %v3123
        %3559 = vmatpush.msra.mxu0 %v3117
        %3560 = vmatpush.msra.mxu0 %v3111
        %3561 = vmatpush.msra.mxu0 %v3105
        %3562 = vmatpush.msra.mxu0 %v3099
        %3563 = vmatpush.msra.mxu0 %v3093
        %3564 = vmatpush.msra.mxu0 %v3087
        %3565 = vmatpush.msra.mxu0 %v3081
        %3566 = vmatmul.f32.gmra.mxu0 %v2980
        %v3567 = vpop.f32.mrf.mxu0
        %v3568 = vadd.f32 %v3548, %v3567
        %3569 = vdwg.mxu0
        %3570 = vmatpush.msra.mxu0 %v3267
        %3571 = vmatpush.msra.mxu0 %v3261
        %3572 = vmatpush.msra.mxu0 %v3255
        %3573 = vmatpush.msra.mxu0 %v3249
        %3574 = vmatpush.msra.mxu0 %v3243
        %3575 = vmatpush.msra.mxu0 %v3237
        %3576 = vmatpush.msra.mxu0 %v3231
        %3577 = vmatpush.msra.mxu0 %v3225
        %3578 = vmatpush.msra.mxu0 %v3219
        %3579 = vmatpush.msra.mxu0 %v3213
        %3580 = vmatpush.msra.mxu0 %v3207
        %3581 = vmatpush.msra.mxu0 %v3201
        %3582 = vmatpush.msra.mxu0 %v3195
        %3583 = vmatpush.msra.mxu0 %v3189
        %3584 = vmatpush.msra.mxu0 %v3183
        %3585 = vmatpush.msra.mxu0 %v3177
        %3586 = vmatmul.f32.gmra.mxu0 %v2981
        %v3587 = vpop.f32.mrf.mxu0
        %v3588 = vadd.f32 %v3568, %v3587
        %3589 = vdwg.mxu0
        %3590 = vmatpush.msra.mxu0 %v3363
        %3591 = vmatpush.msra.mxu0 %v3357
        %3592 = vmatpush.msra.mxu0 %v3351
        %3593 = vmatpush.msra.mxu0 %v3345
        %3594 = vmatpush.msra.mxu0 %v3339
        %3595 = vmatpush.msra.mxu0 %v3333
        %3596 = vmatpush.msra.mxu0 %v3327
        %3597 = vmatpush.msra.mxu0 %v3321
        %3598 = vmatpush.msra.mxu0 %v3315
        %3599 = vmatpush.msra.mxu0 %v3309
        %3600 = vmatpush.msra.mxu0 %v3303
        %3601 = vmatpush.msra.mxu0 %v3297
        %3602 = vmatpush.msra.mxu0 %v3291
        %3603 = vmatpush.msra.mxu0 %v3285
        %3604 = vmatpush.msra.mxu0 %v3279
        %3605 = vmatpush.msra.mxu0 %v3273
        %3606 = vmatmul.f32.gmra.mxu0 %v2982
        %v3607 = vpop.f32.mrf.mxu0
        %v3608 = vadd.f32 %v3588, %v3607
        %3609 = vdwg.mxu0
        %3610 = vmatpush.msra.mxu0 %v3459
        %3611 = vmatpush.msra.mxu0 %v3453
        %3612 = vmatpush.msra.mxu0 %v3447
        %3613 = vmatpush.msra.mxu0 %v3441
        %3614 = vmatpush.msra.mxu0 %v3435
        %3615 = vmatpush.msra.mxu0 %v3429
        %3616 = vmatpush.msra.mxu0 %v3423
        %3617 = vmatpush.msra.mxu0 %v3417
        %3618 = vmatpush.msra.mxu0 %v3411
        %3619 = vmatpush.msra.mxu0 %v3405
        %3620 = vmatpush.msra.mxu0 %v3399
        %3621 = vmatpush.msra.mxu0 %v3393
        %3622 = vmatpush.msra.mxu0 %v3387
        %3623 = vmatpush.msra.mxu0 %v3381
        %3624 = vmatpush.msra.mxu0 %v3375
        %3625 = vmatpush.msra.mxu0 %v3369
        %3626 = vmatmul.f32.gmra.mxu0 %v2983
        %v3627 = vpop.f32.mrf.mxu0
        %v3628 = vadd.f32 %v3608, %v3627
        %3629 = vdwg.mxu0
        %3630 = vmatpush.msra.mxu0 0.0
        %3631 = vmatpush.msra.mxu0 0.0
        %3632 = vmatpush.msra.mxu0 0.0
        %3633 = vmatpush.msra.mxu0 0.0
        %3634 = vmatpush.msra.mxu0 0.0
        %3635 = vmatpush.msra.mxu0 0.0
        %3636 = vmatpush.msra.mxu0 0.0
        %3637 = vmatpush.msra.mxu0 0.0
        %3638 = vmatpush.msra.mxu0 0.0
        %3639 = vmatpush.msra.mxu0 0.0
        %3640 = vmatpush.msra.mxu0 0.0
        %3641 = vmatpush.msra.mxu0 %v3513
        %3642 = vmatpush.msra.mxu0 %v3483
        %3643 = vmatpush.msra.mxu0 %v3477
        %3644 = vmatpush.msra.mxu0 %v3471
        %3645 = vmatpush.msra.mxu0 %v3465
        %3646 = vmatmul.f32.gmra.mxu0 %v3510
        %v3647 = vpop.f32.mrf.mxu0
        %v3648 = vadd.f32 %v3628, %v3647
        %3649 = vdwg.mxu0
        %3650 = vmatpush.msra.mxu0 %v3076
        %3651 = vmatpush.msra.mxu0 %v3070
        %3652 = vmatpush.msra.mxu0 %v3064
        %3653 = vmatpush.msra.mxu0 %v3058
        %3654 = vmatpush.msra.mxu0 %v3052
        %3655 = vmatpush.msra.mxu0 %v3046
        %3656 = vmatpush.msra.mxu0 %v3040
        %3657 = vmatpush.msra.mxu0 %v3034
        %3658 = vmatpush.msra.mxu0 %v3028
        %3659 = vmatpush.msra.mxu0 %v3022
        %3660 = vmatpush.msra.mxu0 %v3016
        %3661 = vmatpush.msra.mxu0 %v3010
        %3662 = vmatpush.msra.mxu0 %v3004
        %3663 = vmatpush.msra.mxu0 %v2998
        %3664 = vmatpush.msra.mxu0 %v2992
        %3665 = vmatpush.msra.mxu0 %v2986
        %3666 = vmatmul.f32.gmra.mxu0 %v2979
        %v3667 = vpop.f32.mrf.mxu0
        %v3668 = vadd.f32 %v3498, %v3667
        %3669 = vdwg.mxu0
        %3670 = vmatpush.msra.mxu0 %v3172
        %3671 = vmatpush.msra.mxu0 %v3166
        %3672 = vmatpush.msra.mxu0 %v3160
        %3673 = vmatpush.msra.mxu0 %v3154
        %3674 = vmatpush.msra.mxu0 %v3148
        %3675 = vmatpush.msra.mxu0 %v3142
        %3676 = vmatpush.msra.mxu0 %v3136
        %3677 = vmatpush.msra.mxu0 %v3130
        %3678 = vmatpush.msra.mxu0 %v3124
        %3679 = vmatpush.msra.mxu0 %v3118
        %3680 = vmatpush.msra.mxu0 %v3112
        %3681 = vmatpush.msra.mxu0 %v3106
        %3682 = vmatpush.msra.mxu0 %v3100
        %3683 = vmatpush.msra.mxu0 %v3094
        %3684 = vmatpush.msra.mxu0 %v3088
        %3685 = vmatpush.msra.mxu0 %v3082
        %3686 = vmatmul.f32.gmra.mxu0 %v2980
        %v3687 = vpop.f32.mrf.mxu0
        %v3688 = vadd.f32 %v3668, %v3687
        %3689 = vdwg.mxu0
        %3690 = vmatpush.msra.mxu0 %v3268
        %3691 = vmatpush.msra.mxu0 %v3262
        %3692 = vmatpush.msra.mxu0 %v3256
        %3693 = vmatpush.msra.mxu0 %v3250
        %3694 = vmatpush.msra.mxu0 %v3244
        %3695 = vmatpush.msra.mxu0 %v3238
        %3696 = vmatpush.msra.mxu0 %v3232
        %3697 = vmatpush.msra.mxu0 %v3226
        %3698 = vmatpush.msra.mxu0 %v3220
        %3699 = vmatpush.msra.mxu0 %v3214
        %3700 = vmatpush.msra.mxu0 %v3208
        %3701 = vmatpush.msra.mxu0 %v3202
        %3702 = vmatpush.msra.mxu0 %v3196
        %3703 = vmatpush.msra.mxu0 %v3190
        %3704 = vmatpush.msra.mxu0 %v3184
        %3705 = vmatpush.msra.mxu0 %v3178
        %3706 = vmatmul.f32.gmra.mxu0 %v2981
        %v3707 = vpop.f32.mrf.mxu0
        %v3708 = vadd.f32 %v3688, %v3707
        %3709 = vdwg.mxu0
        %3710 = vmatpush.msra.mxu0 %v3364
        %3711 = vmatpush.msra.mxu0 %v3358
        %3712 = vmatpush.msra.mxu0 %v3352
        %3713 = vmatpush.msra.mxu0 %v3346
        %3714 = vmatpush.msra.mxu0 %v3340
        %3715 = vmatpush.msra.mxu0 %v3334
        %3716 = vmatpush.msra.mxu0 %v3328
        %3717 = vmatpush.msra.mxu0 %v3322
        %3718 = vmatpush.msra.mxu0 %v3316
        %3719 = vmatpush.msra.mxu0 %v3310
        %3720 = vmatpush.msra.mxu0 %v3304
        %3721 = vmatpush.msra.mxu0 %v3298
        %3722 = vmatpush.msra.mxu0 %v3292
        %3723 = vmatpush.msra.mxu0 %v3286
        %3724 = vmatpush.msra.mxu0 %v3280
        %3725 = vmatpush.msra.mxu0 %v3274
        %3726 = vmatmul.f32.gmra.mxu0 %v2982
        %v3727 = vpop.f32.mrf.mxu0
        %v3728 = vadd.f32 %v3708, %v3727
        %3729 = vdwg.mxu0
        %3730 = vmatpush.msra.mxu0 %v3460
        %3731 = vmatpush.msra.mxu0 %v3454
        %3732 = vmatpush.msra.mxu0 %v3448
        %3733 = vmatpush.msra.mxu0 %v3442
        %3734 = vmatpush.msra.mxu0 %v3436
        %3735 = vmatpush.msra.mxu0 %v3430
        %3736 = vmatpush.msra.mxu0 %v3424
        %3737 = vmatpush.msra.mxu0 %v3418
        %3738 = vmatpush.msra.mxu0 %v3412
        %3739 = vmatpush.msra.mxu0 %v3406
        %3740 = vmatpush.msra.mxu0 %v3400
        %3741 = vmatpush.msra.mxu0 %v3394
        %3742 = vmatpush.msra.mxu0 %v3388
        %3743 = vmatpush.msra.mxu0 %v3382
        %3744 = vmatpush.msra.mxu0 %v3376
        %3745 = vmatpush.msra.mxu0 %v3370
        %3746 = vmatmul.f32.gmra.mxu0 %v2983
        %v3747 = vpop.f32.mrf.mxu0
        %v3748 = vadd.f32 %v3728, %v3747
        %3749 = vdwg.mxu0
        %3750 = vmatpush.msra.mxu0 0.0
        %3751 = vmatpush.msra.mxu0 0.0
        %3752 = vmatpush.msra.mxu0 0.0
        %3753 = vmatpush.msra.mxu0 0.0
        %3754 = vmatpush.msra.mxu0 0.0
        %3755 = vmatpush.msra.mxu0 0.0
        %3756 = vmatpush.msra.mxu0 0.0
        %3757 = vmatpush.msra.mxu0 0.0
        %3758 = vmatpush.msra.mxu0 0.0
        %3759 = vmatpush.msra.mxu0 0.0
        %3760 = vmatpush.msra.mxu0 0.0
        %3761 = vmatpush.msra.mxu0 %v3516
        %3762 = vmatpush.msra.mxu0 %v3484
        %3763 = vmatpush.msra.mxu0 %v3478
        %3764 = vmatpush.msra.mxu0 %v3472
        %3765 = vmatpush.msra.mxu0 %v3466
        %3766 = vmatmul.f32.gmra.mxu0 %v3510
        %v3767 = vpop.f32.mrf.mxu0
        %v3768 = vadd.f32 %v3748, %v3767
        %3769 = vdwg.mxu0
        %3770 = vmatpush.msra.mxu0 %v3077
        %3771 = vmatpush.msra.mxu0 %v3071
        %3772 = vmatpush.msra.mxu0 %v3065
        %3773 = vmatpush.msra.mxu0 %v3059
        %3774 = vmatpush.msra.mxu0 %v3053
        %3775 = vmatpush.msra.mxu0 %v3047
        %3776 = vmatpush.msra.mxu0 %v3041
        %3777 = vmatpush.msra.mxu0 %v3035
        %3778 = vmatpush.msra.mxu0 %v3029
        %3779 = vmatpush.msra.mxu0 %v3023
        %3780 = vmatpush.msra.mxu0 %v3017
        %3781 = vmatpush.msra.mxu0 %v3011
        %3782 = vmatpush.msra.mxu0 %v3005
        %3783 = vmatpush.msra.mxu0 %v2999
        %3784 = vmatpush.msra.mxu0 %v2993
        %3785 = vmatpush.msra.mxu0 %v2987
        %3786 = vmatmul.f32.gmra.mxu0 %v2979
        %v3787 = vpop.f32.mrf.mxu0
        %v3788 = vadd.f32 %v3499, %v3787
        %3789 = vdwg.mxu0
        %3790 = vmatpush.msra.mxu0 %v3173
        %3791 = vmatpush.msra.mxu0 %v3167
        %3792 = vmatpush.msra.mxu0 %v3161
        %3793 = vmatpush.msra.mxu0 %v3155
        %3794 = vmatpush.msra.mxu0 %v3149
        %3795 = vmatpush.msra.mxu0 %v3143
        %3796 = vmatpush.msra.mxu0 %v3137
        %3797 = vmatpush.msra.mxu0 %v3131
        %3798 = vmatpush.msra.mxu0 %v3125
        %3799 = vmatpush.msra.mxu0 %v3119
        %3800 = vmatpush.msra.mxu0 %v3113
        %3801 = vmatpush.msra.mxu0 %v3107
        %3802 = vmatpush.msra.mxu0 %v3101
        %3803 = vmatpush.msra.mxu0 %v3095
        %3804 = vmatpush.msra.mxu0 %v3089
        %3805 = vmatpush.msra.mxu0 %v3083
        %3806 = vmatmul.f32.gmra.mxu0 %v2980
        %v3807 = vpop.f32.mrf.mxu0
        %v3808 = vadd.f32 %v3788, %v3807
        %3809 = vdwg.mxu0
        %3810 = vmatpush.msra.mxu0 %v3269
        %3811 = vmatpush.msra.mxu0 %v3263
        %3812 = vmatpush.msra.mxu0 %v3257
        %3813 = vmatpush.msra.mxu0 %v3251
        %3814 = vmatpush.msra.mxu0 %v3245
        %3815 = vmatpush.msra.mxu0 %v3239
        %3816 = vmatpush.msra.mxu0 %v3233
        %3817 = vmatpush.msra.mxu0 %v3227
        %3818 = vmatpush.msra.mxu0 %v3221
        %3819 = vmatpush.msra.mxu0 %v3215
        %3820 = vmatpush.msra.mxu0 %v3209
        %3821 = vmatpush.msra.mxu0 %v3203
        %3822 = vmatpush.msra.mxu0 %v3197
        %3823 = vmatpush.msra.mxu0 %v3191
        %3824 = vmatpush.msra.mxu0 %v3185
        %3825 = vmatpush.msra.mxu0 %v3179
        %3826 = vmatmul.f32.gmra.mxu0 %v2981
        %v3827 = vpop.f32.mrf.mxu0
        %v3828 = vadd.f32 %v3808, %v3827
        %3829 = vdwg.mxu0
        %3830 = vmatpush.msra.mxu0 %v3365
        %3831 = vmatpush.msra.mxu0 %v3359
        %3832 = vmatpush.msra.mxu0 %v3353
        %3833 = vmatpush.msra.mxu0 %v3347
        %3834 = vmatpush.msra.mxu0 %v3341
        %3835 = vmatpush.msra.mxu0 %v3335
        %3836 = vmatpush.msra.mxu0 %v3329
        %3837 = vmatpush.msra.mxu0 %v3323
        %3838 = vmatpush.msra.mxu0 %v3317
        %3839 = vmatpush.msra.mxu0 %v3311
        %3840 = vmatpush.msra.mxu0 %v3305
        %3841 = vmatpush.msra.mxu0 %v3299
        %3842 = vmatpush.msra.mxu0 %v3293
        %3843 = vmatpush.msra.mxu0 %v3287
        %3844 = vmatpush.msra.mxu0 %v3281
        %3845 = vmatpush.msra.mxu0 %v3275
        %3846 = vmatmul.f32.gmra.mxu0 %v2982
        %v3847 = vpop.f32.mrf.mxu0
        %v3848 = vadd.f32 %v3828, %v3847
        %3849 = vdwg.mxu0
        %3850 = vmatpush.msra.mxu0 %v3461
        %3851 = vmatpush.msra.mxu0 %v3455
        %3852 = vmatpush.msra.mxu0 %v3449
        %3853 = vmatpush.msra.mxu0 %v3443
        %3854 = vmatpush.msra.mxu0 %v3437
        %3855 = vmatpush.msra.mxu0 %v3431
        %3856 = vmatpush.msra.mxu0 %v3425
        %3857 = vmatpush.msra.mxu0 %v3419
        %3858 = vmatpush.msra.mxu0 %v3413
        %3859 = vmatpush.msra.mxu0 %v3407
        %3860 = vmatpush.msra.mxu0 %v3401
        %3861 = vmatpush.msra.mxu0 %v3395
        %3862 = vmatpush.msra.mxu0 %v3389
        %3863 = vmatpush.msra.mxu0 %v3383
        %3864 = vmatpush.msra.mxu0 %v3377
        %3865 = vmatpush.msra.mxu0 %v3371
        %3866 = vmatmul.f32.gmra.mxu0 %v2983
        %v3867 = vpop.f32.mrf.mxu0
        %v3868 = vadd.f32 %v3848, %v3867
        %3869 = vdwg.mxu0
        %3870 = vmatpush.msra.mxu0 0.0
        %3871 = vmatpush.msra.mxu0 0.0
        %3872 = vmatpush.msra.mxu0 0.0
        %3873 = vmatpush.msra.mxu0 0.0
        %3874 = vmatpush.msra.mxu0 0.0
        %3875 = vmatpush.msra.mxu0 0.0
        %3876 = vmatpush.msra.mxu0 0.0
        %3877 = vmatpush.msra.mxu0 0.0
        %3878 = vmatpush.msra.mxu0 0.0
        %3879 = vmatpush.msra.mxu0 0.0
        %3880 = vmatpush.msra.mxu0 0.0
        %3881 = vmatpush.msra.mxu0 %v3519
        %3882 = vmatpush.msra.mxu0 %v3485
        %3883 = vmatpush.msra.mxu0 %v3479
        %3884 = vmatpush.msra.mxu0 %v3473
        %3885 = vmatpush.msra.mxu0 %v3467
        %3886 = vmatmul.f32.gmra.mxu0 %v3510
        %v3887 = vpop.f32.mrf.mxu0
        %v3888 = vadd.f32 %v3868, %v3887
        %3889 = vdwg.mxu0
        %3890 = vmatpush.msra.mxu0 %v3078
        %3891 = vmatpush.msra.mxu0 %v3072
        %3892 = vmatpush.msra.mxu0 %v3066
        %3893 = vmatpush.msra.mxu0 %v3060
        %3894 = vmatpush.msra.mxu0 %v3054
        %3895 = vmatpush.msra.mxu0 %v3048
        %3896 = vmatpush.msra.mxu0 %v3042
        %3897 = vmatpush.msra.mxu0 %v3036
        %3898 = vmatpush.msra.mxu0 %v3030
        %3899 = vmatpush.msra.mxu0 %v3024
        %3900 = vmatpush.msra.mxu0 %v3018
        %3901 = vmatpush.msra.mxu0 %v3012
        %3902 = vmatpush.msra.mxu0 %v3006
        %3903 = vmatpush.msra.mxu0 %v3000
        %3904 = vmatpush.msra.mxu0 %v2994
        %3905 = vmatpush.msra.mxu0 %v2988
        %3906 = vmatmul.f32.gmra.mxu0 %v2979
        %v3907 = vpop.f32.mrf.mxu0
        %v3908 = vadd.f32 %v3500, %v3907
        %3909 = vdwg.mxu0
        %3910 = vmatpush.msra.mxu0 %v3174
        %3911 = vmatpush.msra.mxu0 %v3168
        %3912 = vmatpush.msra.mxu0 %v3162
        %3913 = vmatpush.msra.mxu0 %v3156
        %3914 = vmatpush.msra.mxu0 %v3150
        %3915 = vmatpush.msra.mxu0 %v3144
        %3916 = vmatpush.msra.mxu0 %v3138
        %3917 = vmatpush.msra.mxu0 %v3132
        %3918 = vmatpush.msra.mxu0 %v3126
        %3919 = vmatpush.msra.mxu0 %v3120
        %3920 = vmatpush.msra.mxu0 %v3114
        %3921 = vmatpush.msra.mxu0 %v3108
        %3922 = vmatpush.msra.mxu0 %v3102
        %3923 = vmatpush.msra.mxu0 %v3096
        %3924 = vmatpush.msra.mxu0 %v3090
        %3925 = vmatpush.msra.mxu0 %v3084
        %3926 = vmatmul.f32.gmra.mxu0 %v2980
        %v3927 = vpop.f32.mrf.mxu0
        %v3928 = vadd.f32 %v3908, %v3927
        %3929 = vdwg.mxu0
        %3930 = vmatpush.msra.mxu0 %v3270
        %3931 = vmatpush.msra.mxu0 %v3264
        %3932 = vmatpush.msra.mxu0 %v3258
        %3933 = vmatpush.msra.mxu0 %v3252
        %3934 = vmatpush.msra.mxu0 %v3246
        %3935 = vmatpush.msra.mxu0 %v3240
        %3936 = vmatpush.msra.mxu0 %v3234
        %3937 = vmatpush.msra.mxu0 %v3228
        %3938 = vmatpush.msra.mxu0 %v3222
        %3939 = vmatpush.msra.mxu0 %v3216
        %3940 = vmatpush.msra.mxu0 %v3210
        %3941 = vmatpush.msra.mxu0 %v3204
        %3942 = vmatpush.msra.mxu0 %v3198
        %3943 = vmatpush.msra.mxu0 %v3192
        %3944 = vmatpush.msra.mxu0 %v3186
        %3945 = vmatpush.msra.mxu0 %v3180
        %3946 = vmatmul.f32.gmra.mxu0 %v2981
        %v3947 = vpop.f32.mrf.mxu0
        %v3948 = vadd.f32 %v3928, %v3947
        %3949 = vdwg.mxu0
        %3950 = vmatpush.msra.mxu0 %v3366
        %3951 = vmatpush.msra.mxu0 %v3360
        %3952 = vmatpush.msra.mxu0 %v3354
        %3953 = vmatpush.msra.mxu0 %v3348
        %3954 = vmatpush.msra.mxu0 %v3342
        %3955 = vmatpush.msra.mxu0 %v3336
        %3956 = vmatpush.msra.mxu0 %v3330
        %3957 = vmatpush.msra.mxu0 %v3324
        %3958 = vmatpush.msra.mxu0 %v3318
        %3959 = vmatpush.msra.mxu0 %v3312
        %3960 = vmatpush.msra.mxu0 %v3306
        %3961 = vmatpush.msra.mxu0 %v3300
        %3962 = vmatpush.msra.mxu0 %v3294
        %3963 = vmatpush.msra.mxu0 %v3288
        %3964 = vmatpush.msra.mxu0 %v3282
        %3965 = vmatpush.msra.mxu0 %v3276
        %3966 = vmatmul.f32.gmra.mxu0 %v2982
        %v3967 = vpop.f32.mrf.mxu0
        %v3968 = vadd.f32 %v3948, %v3967
        %3969 = vdwg.mxu0
        %3970 = vmatpush.msra.mxu0 %v3462
        %3971 = vmatpush.msra.mxu0 %v3456
        %3972 = vmatpush.msra.mxu0 %v3450
        %3973 = vmatpush.msra.mxu0 %v3444
        %3974 = vmatpush.msra.mxu0 %v3438
        %3975 = vmatpush.msra.mxu0 %v3432
        %3976 = vmatpush.msra.mxu0 %v3426
        %3977 = vmatpush.msra.mxu0 %v3420
        %3978 = vmatpush.msra.mxu0 %v3414
        %3979 = vmatpush.msra.mxu0 %v3408
        %3980 = vmatpush.msra.mxu0 %v3402
        %3981 = vmatpush.msra.mxu0 %v3396
        %3982 = vmatpush.msra.mxu0 %v3390
        %3983 = vmatpush.msra.mxu0 %v3384
        %3984 = vmatpush.msra.mxu0 %v3378
        %3985 = vmatpush.msra.mxu0 %v3372
        %3986 = vmatmul.f32.gmra.mxu0 %v2983
        %v3987 = vpop.f32.mrf.mxu0
        %v3988 = vadd.f32 %v3968, %v3987
        %3989 = vdwg.mxu0
        %3990 = vmatpush.msra.mxu0 0.0
        %3991 = vmatpush.msra.mxu0 0.0
        %3992 = vmatpush.msra.mxu0 0.0
        %3993 = vmatpush.msra.mxu0 0.0
        %3994 = vmatpush.msra.mxu0 0.0
        %3995 = vmatpush.msra.mxu0 0.0
        %3996 = vmatpush.msra.mxu0 0.0
        %3997 = vmatpush.msra.mxu0 0.0
        %3998 = vmatpush.msra.mxu0 0.0
        %3999 = vmatpush.msra.mxu0 0.0
        %4000 = vmatpush.msra.mxu0 0.0
        %4001 = vmatpush.msra.mxu0 %v3522
        %4002 = vmatpush.msra.mxu0 %v3486
        %4003 = vmatpush.msra.mxu0 %v3480
        %4004 = vmatpush.msra.mxu0 %v3474
        %4005 = vmatpush.msra.mxu0 %v3468
        %4006 = vmatmul.f32.gmra.mxu0 %v3510
        %v4007 = vpop.f32.mrf.mxu0
        %v4008 = vadd.f32 %v3988, %v4007
        %4009 = vdwg.mxu0
        %4010 = vmatpush.msra.mxu0 %v3079
        %4011 = vmatpush.msra.mxu0 %v3073
        %4012 = vmatpush.msra.mxu0 %v3067
        %4013 = vmatpush.msra.mxu0 %v3061
        %4014 = vmatpush.msra.mxu0 %v3055
        %4015 = vmatpush.msra.mxu0 %v3049
        %4016 = vmatpush.msra.mxu0 %v3043
        %4017 = vmatpush.msra.mxu0 %v3037
        %4018 = vmatpush.msra.mxu0 %v3031
        %4019 = vmatpush.msra.mxu0 %v3025
        %4020 = vmatpush.msra.mxu0 %v3019
        %4021 = vmatpush.msra.mxu0 %v3013
        %4022 = vmatpush.msra.mxu0 %v3007
        %4023 = vmatpush.msra.mxu0 %v3001
        %4024 = vmatpush.msra.mxu0 %v2995
        %4025 = vmatpush.msra.mxu0 %v2989
        %4026 = vmatmul.f32.gmra.mxu0 %v2979
        %v4027 = vpop.f32.mrf.mxu0
        %v4028 = vadd.f32 %v3501, %v4027
        %4029 = vdwg.mxu0
        %4030 = vmatpush.msra.mxu0 %v3175
        %4031 = vmatpush.msra.mxu0 %v3169
        %4032 = vmatpush.msra.mxu0 %v3163
        %4033 = vmatpush.msra.mxu0 %v3157
        %4034 = vmatpush.msra.mxu0 %v3151
        %4035 = vmatpush.msra.mxu0 %v3145
        %4036 = vmatpush.msra.mxu0 %v3139
        %4037 = vmatpush.msra.mxu0 %v3133
        %4038 = vmatpush.msra.mxu0 %v3127
        %4039 = vmatpush.msra.mxu0 %v3121
        %4040 = vmatpush.msra.mxu0 %v3115
        %4041 = vmatpush.msra.mxu0 %v3109
        %4042 = vmatpush.msra.mxu0 %v3103
        %4043 = vmatpush.msra.mxu0 %v3097
        %4044 = vmatpush.msra.mxu0 %v3091
        %4045 = vmatpush.msra.mxu0 %v3085
        %4046 = vmatmul.f32.gmra.mxu0 %v2980
        %v4047 = vpop.f32.mrf.mxu0
        %v4048 = vadd.f32 %v4028, %v4047
        %4049 = vdwg.mxu0
        %4050 = vmatpush.msra.mxu0 %v3271
        %4051 = vmatpush.msra.mxu0 %v3265
        %4052 = vmatpush.msra.mxu0 %v3259
        %4053 = vmatpush.msra.mxu0 %v3253
        %4054 = vmatpush.msra.mxu0 %v3247
        %4055 = vmatpush.msra.mxu0 %v3241
        %4056 = vmatpush.msra.mxu0 %v3235
        %4057 = vmatpush.msra.mxu0 %v3229
        %4058 = vmatpush.msra.mxu0 %v3223
        %4059 = vmatpush.msra.mxu0 %v3217
        %4060 = vmatpush.msra.mxu0 %v3211
        %4061 = vmatpush.msra.mxu0 %v3205
        %4062 = vmatpush.msra.mxu0 %v3199
        %4063 = vmatpush.msra.mxu0 %v3193
        %4064 = vmatpush.msra.mxu0 %v3187
        %4065 = vmatpush.msra.mxu0 %v3181
        %4066 = vmatmul.f32.gmra.mxu0 %v2981
        %v4067 = vpop.f32.mrf.mxu0
        %v4068 = vadd.f32 %v4048, %v4067
        %4069 = vdwg.mxu0
        %4070 = vmatpush.msra.mxu0 %v3367
        %4071 = vmatpush.msra.mxu0 %v3361
        %4072 = vmatpush.msra.mxu0 %v3355
        %4073 = vmatpush.msra.mxu0 %v3349
        %4074 = vmatpush.msra.mxu0 %v3343
        %4075 = vmatpush.msra.mxu0 %v3337
        %4076 = vmatpush.msra.mxu0 %v3331
        %4077 = vmatpush.msra.mxu0 %v3325
        %4078 = vmatpush.msra.mxu0 %v3319
        %4079 = vmatpush.msra.mxu0 %v3313
        %4080 = vmatpush.msra.mxu0 %v3307
        %4081 = vmatpush.msra.mxu0 %v3301
        %4082 = vmatpush.msra.mxu0 %v3295
        %4083 = vmatpush.msra.mxu0 %v3289
        %4084 = vmatpush.msra.mxu0 %v3283
        %4085 = vmatpush.msra.mxu0 %v3277
        %4086 = vmatmul.f32.gmra.mxu0 %v2982
        %v4087 = vpop.f32.mrf.mxu0
        %v4088 = vadd.f32 %v4068, %v4087
        %4089 = vdwg.mxu0
        %4090 = vmatpush.msra.mxu0 %v3463
        %4091 = vmatpush.msra.mxu0 %v3457
        %4092 = vmatpush.msra.mxu0 %v3451
        %4093 = vmatpush.msra.mxu0 %v3445
        %4094 = vmatpush.msra.mxu0 %v3439
        %4095 = vmatpush.msra.mxu0 %v3433
        %4096 = vmatpush.msra.mxu0 %v3427
        %4097 = vmatpush.msra.mxu0 %v3421
        %4098 = vmatpush.msra.mxu0 %v3415
        %4099 = vmatpush.msra.mxu0 %v3409
        %4100 = vmatpush.msra.mxu0 %v3403
        %4101 = vmatpush.msra.mxu0 %v3397
        %4102 = vmatpush.msra.mxu0 %v3391
        %4103 = vmatpush.msra.mxu0 %v3385
        %4104 = vmatpush.msra.mxu0 %v3379
        %4105 = vmatpush.msra.mxu0 %v3373
        %4106 = vmatmul.f32.gmra.mxu0 %v2983
        %v4107 = vpop.f32.mrf.mxu0
        %v4108 = vadd.f32 %v4088, %v4107
        %4109 = vdwg.mxu0
        %4110 = vmatpush.msra.mxu0 0.0
        %4111 = vmatpush.msra.mxu0 0.0
        %4112 = vmatpush.msra.mxu0 0.0
        %4113 = vmatpush.msra.mxu0 0.0
        %4114 = vmatpush.msra.mxu0 0.0
        %4115 = vmatpush.msra.mxu0 0.0
        %4116 = vmatpush.msra.mxu0 0.0
        %4117 = vmatpush.msra.mxu0 0.0
        %4118 = vmatpush.msra.mxu0 0.0
        %4119 = vmatpush.msra.mxu0 0.0
        %4120 = vmatpush.msra.mxu0 0.0
        %4121 = vmatpush.msra.mxu0 %v3525
        %4122 = vmatpush.msra.mxu0 %v3487
        %4123 = vmatpush.msra.mxu0 %v3481
        %4124 = vmatpush.msra.mxu0 %v3475
        %4125 = vmatpush.msra.mxu0 %v3469
        %4126 = vmatmul.f32.gmra.mxu0 %v3510
        %v4127 = vpop.f32.mrf.mxu0
        %v4128 = vadd.f32 %v4108, %v4127
        %4129 = vdwg.mxu0
        %4130 = vmatpush.msra.mxu0 %v3080
        %4131 = vmatpush.msra.mxu0 %v3074
        %4132 = vmatpush.msra.mxu0 %v3068
        %4133 = vmatpush.msra.mxu0 %v3062
        %4134 = vmatpush.msra.mxu0 %v3056
        %4135 = vmatpush.msra.mxu0 %v3050
        %4136 = vmatpush.msra.mxu0 %v3044
        %4137 = vmatpush.msra.mxu0 %v3038
        %4138 = vmatpush.msra.mxu0 %v3032
        %4139 = vmatpush.msra.mxu0 %v3026
        %4140 = vmatpush.msra.mxu0 %v3020
        %4141 = vmatpush.msra.mxu0 %v3014
        %4142 = vmatpush.msra.mxu0 %v3008
        %4143 = vmatpush.msra.mxu0 %v3002
        %4144 = vmatpush.msra.mxu0 %v2996
        %4145 = vmatpush.msra.mxu0 %v2990
        %4146 = vmatmul.f32.gmra.mxu0 %v2979
        %v4147 = vpop.f32.mrf.mxu0
        %v4148 = vadd.f32 %v3502, %v4147
        %4149 = vdwg.mxu0
        %4150 = vmatpush.msra.mxu0 %v3176
        %4151 = vmatpush.msra.mxu0 %v3170
        %4152 = vmatpush.msra.mxu0 %v3164
        %4153 = vmatpush.msra.mxu0 %v3158
        %4154 = vmatpush.msra.mxu0 %v3152
        %4155 = vmatpush.msra.mxu0 %v3146
        %4156 = vmatpush.msra.mxu0 %v3140
        %4157 = vmatpush.msra.mxu0 %v3134
        %4158 = vmatpush.msra.mxu0 %v3128
        %4159 = vmatpush.msra.mxu0 %v3122
        %4160 = vmatpush.msra.mxu0 %v3116
        %4161 = vmatpush.msra.mxu0 %v3110
        %4162 = vmatpush.msra.mxu0 %v3104
        %4163 = vmatpush.msra.mxu0 %v3098
        %4164 = vmatpush.msra.mxu0 %v3092
        %4165 = vmatpush.msra.mxu0 %v3086
        %4166 = vmatmul.f32.gmra.mxu0 %v2980
        %v4167 = vpop.f32.mrf.mxu0
        %v4168 = vadd.f32 %v4148, %v4167
        %4169 = vdwg.mxu0
        %4170 = vmatpush.msra.mxu0 %v3272
        %4171 = vmatpush.msra.mxu0 %v3266
        %4172 = vmatpush.msra.mxu0 %v3260
        %4173 = vmatpush.msra.mxu0 %v3254
        %4174 = vmatpush.msra.mxu0 %v3248
        %4175 = vmatpush.msra.mxu0 %v3242
        %4176 = vmatpush.msra.mxu0 %v3236
        %4177 = vmatpush.msra.mxu0 %v3230
        %4178 = vmatpush.msra.mxu0 %v3224
        %4179 = vmatpush.msra.mxu0 %v3218
        %4180 = vmatpush.msra.mxu0 %v3212
        %4181 = vmatpush.msra.mxu0 %v3206
        %4182 = vmatpush.msra.mxu0 %v3200
        %4183 = vmatpush.msra.mxu0 %v3194
        %4184 = vmatpush.msra.mxu0 %v3188
        %4185 = vmatpush.msra.mxu0 %v3182
        %4186 = vmatmul.f32.gmra.mxu0 %v2981
        %v4187 = vpop.f32.mrf.mxu0
        %v4188 = vadd.f32 %v4168, %v4187
        %4189 = vdwg.mxu0
        %4190 = vmatpush.msra.mxu0 %v3368
        %4191 = vmatpush.msra.mxu0 %v3362
        %4192 = vmatpush.msra.mxu0 %v3356
        %4193 = vmatpush.msra.mxu0 %v3350
        %4194 = vmatpush.msra.mxu0 %v3344
        %4195 = vmatpush.msra.mxu0 %v3338
        %4196 = vmatpush.msra.mxu0 %v3332
        %4197 = vmatpush.msra.mxu0 %v3326
        %4198 = vmatpush.msra.mxu0 %v3320
        %4199 = vmatpush.msra.mxu0 %v3314
        %4200 = vmatpush.msra.mxu0 %v3308
        %4201 = vmatpush.msra.mxu0 %v3302
        %4202 = vmatpush.msra.mxu0 %v3296
        %4203 = vmatpush.msra.mxu0 %v3290
        %4204 = vmatpush.msra.mxu0 %v3284
        %4205 = vmatpush.msra.mxu0 %v3278
        %4206 = vmatmul.f32.gmra.mxu0 %v2982
        %v4207 = vpop.f32.mrf.mxu0
        %v4208 = vadd.f32 %v4188, %v4207
        %4209 = vdwg.mxu0
        %4210 = vmatpush.msra.mxu0 %v3464
        %4211 = vmatpush.msra.mxu0 %v3458
        %4212 = vmatpush.msra.mxu0 %v3452
        %4213 = vmatpush.msra.mxu0 %v3446
        %4214 = vmatpush.msra.mxu0 %v3440
        %4215 = vmatpush.msra.mxu0 %v3434
        %4216 = vmatpush.msra.mxu0 %v3428
        %4217 = vmatpush.msra.mxu0 %v3422
        %4218 = vmatpush.msra.mxu0 %v3416
        %4219 = vmatpush.msra.mxu0 %v3410
        %4220 = vmatpush.msra.mxu0 %v3404
        %4221 = vmatpush.msra.mxu0 %v3398
        %4222 = vmatpush.msra.mxu0 %v3392
        %4223 = vmatpush.msra.mxu0 %v3386
        %4224 = vmatpush.msra.mxu0 %v3380
        %4225 = vmatpush.msra.mxu0 %v3374
        %4226 = vmatmul.f32.gmra.mxu0 %v2983
        %v4227 = vpop.f32.mrf.mxu0
        %v4228 = vadd.f32 %v4208, %v4227
        %4229 = vdwg.mxu0
        %4230 = vmatpush.msra.mxu0 0.0
        %4231 = vmatpush.msra.mxu0 0.0
        %4232 = vmatpush.msra.mxu0 0.0
        %4233 = vmatpush.msra.mxu0 0.0
        %4234 = vmatpush.msra.mxu0 0.0
        %4235 = vmatpush.msra.mxu0 0.0
        %4236 = vmatpush.msra.mxu0 0.0
        %4237 = vmatpush.msra.mxu0 0.0
        %4238 = vmatpush.msra.mxu0 0.0
        %4239 = vmatpush.msra.mxu0 0.0
        %4240 = vmatpush.msra.mxu0 0.0
        %4241 = vmatpush.msra.mxu0 %v3528
        %4242 = vmatpush.msra.mxu0 %v3488
        %4243 = vmatpush.msra.mxu0 %v3482
        %4244 = vmatpush.msra.mxu0 %v3476
        %4245 = vmatpush.msra.mxu0 %v3470
        %4246 = vmatmul.f32.gmra.mxu0 %v3510
        %v4247 = vpop.f32.mrf.mxu0
        %v4248 = vadd.f32 %v4228, %v4247
        %4249 = vdwg.mxu0
        %v4250 = vxor.u32 %v3648, 2147483648
        %v4251 = vxor.u32 %v3768, 2147483648
        %v4252 = vxor.u32 %v3888, 2147483648
        %v4253 = vxor.u32 %v4008, 2147483648
        %v4254 = vxor.u32 %v4128, 2147483648
        %v4255 = vxor.u32 %v4248, 2147483648
        %v4256 = vmul.f32 %v4250, 1.442695
        %v4257 = vpow.pop %v4256
        %v4258 = vmul.f32 %v4251, 1.442695
        %v4259 = vpow.pop %v4258
        %v4260 = vmul.f32 %v4252, 1.442695
        %v4261 = vpow.pop %v4260
        %v4262 = vmul.f32 %v4253, 1.442695
        %v4263 = vpow.pop %v4262
        %v4264 = vmul.f32 %v4254, 1.442695
        %v4265 = vpow.pop %v4264
        %v4266 = vmul.f32 %v4255, 1.442695
        %v4267 = vpow.pop %v4266
        %v4268 = vadd.f32 %v4257, 1.0
        %v4269 = vadd.f32 %v4259, 1.0
        %v4270 = vadd.f32 %v4261, 1.0
        %v4271 = vadd.f32 %v4263, 1.0
        %v4272 = vadd.f32 %v4265, 1.0
        %v4273 = vadd.f32 %v4267, 1.0
        %v4274 = vrcp.pop %v4268
        %v4275 = vmul.f32 %v4268, %v4274
        %v4276 = vsub.f32 1.0, %v4275
        %v4277 = vmul.f32 %v4274, %v4276
        %v4278 = vadd.f32 %v4274, %v4277
        %vm4279 = vweird.f32 %v4268
        %vm4280 = vweird.f32 %v4274
        %vm4281 = vmor %vm4279, %vm4280
        %v4282 = vsel %vm4281, %v4274, %v4278
        %v4283 = vand.u32 2147483647, %v4268
        %vm4284 = vcmp.eq.f32.partialorder %v4283, 8.507059e+37
        %v4285 = vand.u32 %v4268, 2147483648
        %v4286 = vor.u32 1.1754944e-38, %v4285
        %v4287 = vsel %vm4284, %v4286, %v4282
        %v4288 = vmul.f32 1.0, %v4287
        %v4289 = vrcp.pop %v4269
        %v4290 = vmul.f32 %v4269, %v4289
        %v4291 = vsub.f32 1.0, %v4290
        %v4292 = vmul.f32 %v4289, %v4291
        %v4293 = vadd.f32 %v4289, %v4292
        %vm4294 = vweird.f32 %v4269
        %vm4295 = vweird.f32 %v4289
        %vm4296 = vmor %vm4294, %vm4295
        %v4297 = vsel %vm4296, %v4289, %v4293
        %v4298 = vand.u32 2147483647, %v4269
        %vm4299 = vcmp.eq.f32.partialorder %v4298, 8.507059e+37
        %v4300 = vand.u32 %v4269, 2147483648
        %v4301 = vor.u32 1.1754944e-38, %v4300
        %v4302 = vsel %vm4299, %v4301, %v4297
        %v4303 = vmul.f32 1.0, %v4302
        %v4304 = vrcp.pop %v4270
        %v4305 = vmul.f32 %v4270, %v4304
        %v4306 = vsub.f32 1.0, %v4305
        %v4307 = vmul.f32 %v4304, %v4306
        %v4308 = vadd.f32 %v4304, %v4307
        %vm4309 = vweird.f32 %v4270
        %vm4310 = vweird.f32 %v4304
        %vm4311 = vmor %vm4309, %vm4310
        %v4312 = vsel %vm4311, %v4304, %v4308
        %v4313 = vand.u32 2147483647, %v4270
        %vm4314 = vcmp.eq.f32.partialorder %v4313, 8.507059e+37
        %v4315 = vand.u32 %v4270, 2147483648
        %v4316 = vor.u32 1.1754944e-38, %v4315
        %v4317 = vsel %vm4314, %v4316, %v4312
        %v4318 = vmul.f32 1.0, %v4317
        %v4319 = vrcp.pop %v4271
        %v4320 = vmul.f32 %v4271, %v4319
        %v4321 = vsub.f32 1.0, %v4320
        %v4322 = vmul.f32 %v4319, %v4321
        %v4323 = vadd.f32 %v4319, %v4322
        %vm4324 = vweird.f32 %v4271
        %vm4325 = vweird.f32 %v4319
        %vm4326 = vmor %vm4324, %vm4325
        %v4327 = vsel %vm4326, %v4319, %v4323
        %v4328 = vand.u32 2147483647, %v4271
        %vm4329 = vcmp.eq.f32.partialorder %v4328, 8.507059e+37
        %v4330 = vand.u32 %v4271, 2147483648
        %v4331 = vor.u32 1.1754944e-38, %v4330
        %v4332 = vsel %vm4329, %v4331, %v4327
        %v4333 = vmul.f32 1.0, %v4332
        %v4334 = vrcp.pop %v4272
        %v4335 = vmul.f32 %v4272, %v4334
        %v4336 = vsub.f32 1.0, %v4335
        %v4337 = vmul.f32 %v4334, %v4336
        %v4338 = vadd.f32 %v4334, %v4337
        %vm4339 = vweird.f32 %v4272
        %vm4340 = vweird.f32 %v4334
        %vm4341 = vmor %vm4339, %vm4340
        %v4342 = vsel %vm4341, %v4334, %v4338
        %v4343 = vand.u32 2147483647, %v4272
        %vm4344 = vcmp.eq.f32.partialorder %v4343, 8.507059e+37
        %v4345 = vand.u32 %v4272, 2147483648
        %v4346 = vor.u32 1.1754944e-38, %v4345
        %v4347 = vsel %vm4344, %v4346, %v4342
        %v4348 = vmul.f32 1.0, %v4347
        %v4349 = vrcp.pop %v4273
        %v4350 = vmul.f32 %v4273, %v4349
        %v4351 = vsub.f32 1.0, %v4350
        %v4352 = vmul.f32 %v4349, %v4351
        %v4353 = vadd.f32 %v4349, %v4352
        %vm4354 = vweird.f32 %v4273
        %vm4355 = vweird.f32 %v4349
        %vm4356 = vmor %vm4354, %vm4355
        %v4357 = vsel %vm4356, %v4349, %v4353
        %v4358 = vand.u32 2147483647, %v4273
        %vm4359 = vcmp.eq.f32.partialorder %v4358, 8.507059e+37
        %v4360 = vand.u32 %v4273, 2147483648
        %v4361 = vor.u32 1.1754944e-38, %v4360
        %v4362 = vsel %vm4359, %v4361, %v4357
        %v4363 = vmul.f32 1.0, %v4362
        %4364 = vst [vmem:[%s544] sm:$0xff] %v4288
        %4365 = vst [vmem:[%s544 + $0x8] sm:$0xff] %v4303
        %4366 = vst [vmem:[%s544 + $0x10] sm:$0xff] %v4318
        %4367 = vst [vmem:[%s544 + $0x18] sm:$0xff] %v4333
        %4368 = vst [vmem:[%s544 + $0x20] sm:$0xff] %v4348
        %4369 = vst [vmem:[%s544 + $0x28] sm:$0xff] %v4363
        %p4370 = scmp.lt.s32.totalorder %s30, 1
        %s4371 = scalar_select %p4370, %s30, 1
        %s4372 = smul.addr %s4371, 6
        %s4373 = smul.addr %s4372, 8
        %s4374 = scalar_lea.vmem %s11, %s4373
        // Predicated region
        $region105: #{forward.1} parent=63 // pred_check
          %p4375 = pneg %p284
        $region106: #{forward.1} parent=63 // pred_check_branch
          %4377 = sbr.rel (%p4375) target = $region108
        $region107: #{forward.1} parent=63 // pred_region
          _
        $region108: #{forward.1} parent=63 // pred_fallthru
          _
      $region64: #{forward.1} parent=5 // pred_fallthru
        _
      %p4378 = scmp.le.s32.totalorder 2, %s25
      // Predicated region
      $region109: #{forward.1} parent=5 // pred_check
        %p4379 = pneg %p4378
      $region110: #{forward.1} parent=5 // pred_check_branch
        %4381 = sbr.rel (%p4379) target = $region112
      $region111: #{forward.1} parent=5 // pred_region
        %s4382 = ssub.s32 %s25, 2
        // Predicated region
        $region113: #{forward.1} parent=111 // pred_check
          %p4383 = pneg %p290
        $region114: #{forward.1} parent=111 // pred_check_branch
          %4385 = sbr.rel (%p4383) target = $region116
        $region115: #{forward.1} parent=111 // pred_region
          %p4386 = scmp.lt.s32.totalorder %s31, 1
          %s4387 = scalar_select %p4386, %s31, 1
          %s4388 = smul.addr %s4387, 6
          %s4389 = smul.addr %s4388, 8
          %s4390 = scalar_lea.vmem %s11, %s4389
        $region116: #{forward.1} parent=111 // pred_fallthru
          _
      $region112: #{forward.1} parent=5 // pred_fallthru
        _
    $region6: #{forward.1} parent=1 // loop_footer
      %s29 = sadd.s32 1, %s25
    $region7: #{forward.1} parent=1 // loop_footer_branch
      %24 = sbr.rel target = $region3
    $region8: #{forward.1} parent=1 // loop_exit
      _
    %4391 = vsyncpa [#allocation3], 1
    %s4392 = scalar_lea.sflag [#allocation3], 1
    %4393 = vsyncpa %s4392, 1
    %4394 = vsyncpa [#allocation5], 1
    %4395 = vsyncpa [#allocation8], 1
    %4396 = vsyncpa [#allocation11], 1
    %4397 = vsyncpa [#allocation14], 1
    %4398 = vsyncpa [#allocation17], 1

</llo_original>
